<compile_context>
chip_gen: v6e
topology: v6e:2x2x1
jax: 0.10.0
libtpu: 0.0.40
codegen_flags: <defaults>
</compile_context>

<pallas_src>
import functools

import jax
import jax.numpy as jnp
from jax.experimental import pallas as pl
from jax.experimental.pallas import tpu as pltpu

H1, H2, H3 = 256, 512, 1024
LANE = 128
BF16_SUBLANE = 16
MAX_TM = 256  # batch-tile rows per grid step


def _round_up(x, m):
    return (x + m - 1) // m * m


def _generator_fused_kernel(x_ref, w1_ref, b1_ref, w2_ref, b2_ref,
                            w3_ref, b3_ref, w4_ref, b4_ref, o_ref):
    """Fused 4-layer MLP on one (TM, d_in) batch tile.

    Dots run bf16 x bf16 on the MXU with f32 accumulation; bias-add and
    LeakyReLU are f32, then cast back to bf16 for the next dot.
    """

    def linear(h_bf16, w_ref, b_ref):
        y = jnp.dot(h_bf16, w_ref[...], preferred_element_type=jnp.float32)
        return y + b_ref[...]          # (TM, D_out) + (1, D_out) broadcast, f32

    def leaky_relu(y):                 # F.leaky_relu(y, 0.2)
        return jnp.where(y > 0, y, 0.2 * y)

    h = x_ref[...]                     # (TM, d_in) bf16
    h = leaky_relu(linear(h, w1_ref, b1_ref)).astype(jnp.bfloat16)
    h = leaky_relu(linear(h, w2_ref, b2_ref)).astype(jnp.bfloat16)
    h = leaky_relu(linear(h, w3_ref, b3_ref)).astype(jnp.bfloat16)
    o_ref[...] = jnp.tanh(linear(h, w4_ref, b4_ref)).astype(o_ref.dtype)


def init_generator_params(key, g_input_dim, g_output_dim):
    """Parameters matching the module's layer shapes.

    Weights are (D_in, D_out) bf16; biases are (1, D_out) f32.  The final
    layer's output dim is zero-padded up to a multiple of 128 (lane-dense),
    so tanh(0 @ W_pad + 0) = 0 in the pad columns.
    """
    d_out_pad = _round_up(g_output_dim, LANE)
    dims = [g_input_dim, H1, H2, H3, g_output_dim]
    pad_out = [H1, H2, H3, d_out_pad]
    params = []
    for i in range(4):
        key, kw, kb = jax.random.split(key, 3)
        fan_in = dims[i]
        bound = 1.0 / (fan_in ** 0.5)  # PyTorch nn.Linear default init range
        w = jax.random.uniform(kw, (dims[i], dims[i + 1]), jnp.float32, -bound, bound)
        b = jax.random.uniform(kb, (1, dims[i + 1]), jnp.float32, -bound, bound)
        pad = pad_out[i] - dims[i + 1]
        if pad:
            w = jnp.pad(w, ((0, 0), (0, pad)))
            b = jnp.pad(b, ((0, 0), (0, pad)))
        params.append((w.astype(jnp.bfloat16), b))
    return params


@functools.partial(jax.jit, static_argnums=(2,))
def generator_forward(params, x, g_output_dim):
    (w1, b1), (w2, b2), (w3, b3), (w4, b4) = params
    B, d_in = x.shape
    d_out_pad = w4.shape[1]

    # Batch tiling: TM rows per grid step.  Small batches get one tile rounded
    # to the bf16 sublane multiple; large batches use TM=256 (full MXU M dim).
    TM = MAX_TM if B >= MAX_TM else _round_up(B, BF16_SUBLANE)
    Bp = _round_up(B, TM)
    n_tiles = Bp // TM

    x = x.astype(jnp.bfloat16)         # one wrapper-side cast; halves x bytes
    if Bp != B:
        x = jnp.pad(x, ((0, Bp - B), (0, 0)))

    weight_bytes = sum(int(w.size) * w.dtype.itemsize for (w, _) in params)
    bias_bytes = sum(int(b.size) * b.dtype.itemsize for (_, b) in params)

    flops = 2 * Bp * (d_in * H1 + H1 * H2 + H2 * H3 + H3 * d_out_pad)
    bytes_accessed = (
        Bp * d_in * 2                  # input (bf16)
        + weight_bytes + bias_bytes    # weights streamed once (resident)
        + Bp * d_out_pad * 4           # output (f32)
    )

    # Tight-but-safe VMEM budget: worst-case double-buffered weights/biases,
    # double-buffered x/out tiles, f32 inter-layer activations, + headroom.
    tile_bytes = 2 * TM * (d_in * 2 + d_out_pad * 4)
    act_bytes = TM * (H1 + H2 + H3 + d_out_pad) * 4
    vmem_limit = 2 * (weight_bytes + bias_bytes) + tile_bytes + act_bytes + (4 << 20)

    tile_map = lambda i: (i, 0)        # x / out: advance along batch
    resident = lambda i: (0, 0)        # weights / biases: same block every step

    out = pl.pallas_call(
        _generator_fused_kernel,
        out_shape=jax.ShapeDtypeStruct((Bp, d_out_pad), jnp.float32),
        grid=(n_tiles,),
        in_specs=[
            pl.BlockSpec((TM, d_in), tile_map),
            pl.BlockSpec(w1.shape, resident), pl.BlockSpec(b1.shape, resident),
            pl.BlockSpec(w2.shape, resident), pl.BlockSpec(b2.shape, resident),
            pl.BlockSpec(w3.shape, resident), pl.BlockSpec(b3.shape, resident),
            pl.BlockSpec(w4.shape, resident), pl.BlockSpec(b4.shape, resident),
        ],
        out_specs=pl.BlockSpec((TM, d_out_pad), tile_map),
        compiler_params=pltpu.CompilerParams(
            dimension_semantics=("parallel",),   # megacore-shardable batch grid
            vmem_limit_bytes=int(vmem_limit),
        ),
        cost_estimate=pl.CostEstimate(
            flops=flops,
            transcendentals=Bp * d_out_pad,      # tanh on the last layer
            bytes_accessed=bytes_accessed,
        ),
    )(x, w1, b1, w2, b2, w3, b3, w4, b4)

    # Crop batch + lane padding.  NOTE: the 896->784 lane crop costs one small
    # XLA copy; a consumer that tolerates the lane-padded (B, 896) slab should
    # take out[:B] instead and crop/mask downstream.
    return out[:B, :g_output_dim]


def _reference_forward(params, x, g_output_dim):
    """Pure-JAX reference mirroring the kernel's bf16-in / f32-accum casting."""
    h = x.astype(jnp.bfloat16)
    for i, (w, b) in enumerate(params):
        y = jnp.dot(h, w, preferred_element_type=jnp.float32) + b
        if i < 3:
            h = jnp.where(y > 0, y, 0.2 * y).astype(jnp.bfloat16)
        else:
            h = jnp.tanh(y)
    return h[:, :g_output_dim]


if __name__ == "__main__":
    key = jax.random.PRNGKey(0)
    k_params, k_x = jax.random.split(key)

    B = 8               # batch
    G_INPUT_DIM = 64    # latent dim
    G_OUTPUT_DIM = 784  # e.g. 28*28 image

    params = init_generator_params(k_params, G_INPUT_DIM, G_OUTPUT_DIM)
    x = jax.random.normal(k_x, (B, G_INPUT_DIM), jnp.float32)

    out = generator_forward(params, x, G_OUTPUT_DIM)
    jax.block_until_ready(out)

    ref_out = _reference_forward(params, x, G_OUTPUT_DIM)

    assert out.shape == (B, G_OUTPUT_DIM)
    assert out.dtype == jnp.float32
    # tanh output must lie in [-1, 1]
    assert bool(jnp.all(jnp.abs(out) <= 1.0))
    # kernel matches the pure-JAX reference (bf16 MXU-path tolerance)
    assert bool(jnp.allclose(out, ref_out, atol=5e-2, rtol=5e-2))
    print("KERNEL_OK")
</pallas_src>

<mosaic_0001>
module attributes {stable_mosaic.version = 11 : i64} {
  func.func @_generator_fused_kernel(%arg0: i32, %arg1: memref<16x64xbf16, #tpu.memory_space<vmem>>, %arg2: memref<64x256xbf16, #tpu.memory_space<vmem>>, %arg3: memref<1x256xf32, #tpu.memory_space<vmem>>, %arg4: memref<256x512xbf16, #tpu.memory_space<vmem>>, %arg5: memref<1x512xf32, #tpu.memory_space<vmem>>, %arg6: memref<512x1024xbf16, #tpu.memory_space<vmem>>, %arg7: memref<1x1024xf32, #tpu.memory_space<vmem>>, %arg8: memref<1024x896xbf16, #tpu.memory_space<vmem>>, %arg9: memref<1x896xf32, #tpu.memory_space<vmem>>, %arg10: memref<16x896xf32, #tpu.memory_space<vmem>>) attributes {dimension_semantics = [#tpu.dimension_semantics<parallel>], iteration_bounds = array<i64: 1>, scalar_prefetch = 0 : i64, scratch_operands = 0 : i64, tpu.core_type = #tpu.core_type<tc>, window_params = [{transform_indices = @transform_0, window_bounds = array<i64: 16, 64>}, {pipeline_mode = #tpu.pipeline_mode<synchronous>, transform_indices = @transform_1, window_bounds = array<i64: 64, 256>}, {pipeline_mode = #tpu.pipeline_mode<synchronous>, transform_indices = @transform_2, window_bounds = array<i64: 1, 256>}, {pipeline_mode = #tpu.pipeline_mode<synchronous>, transform_indices = @transform_3, window_bounds = array<i64: 256, 512>}, {pipeline_mode = #tpu.pipeline_mode<synchronous>, transform_indices = @transform_4, window_bounds = array<i64: 1, 512>}, {pipeline_mode = #tpu.pipeline_mode<synchronous>, transform_indices = @transform_5, window_bounds = array<i64: 512, 1024>}, {pipeline_mode = #tpu.pipeline_mode<synchronous>, transform_indices = @transform_6, window_bounds = array<i64: 1, 1024>}, {pipeline_mode = #tpu.pipeline_mode<synchronous>, transform_indices = @transform_7, window_bounds = array<i64: 1024, 896>}, {pipeline_mode = #tpu.pipeline_mode<synchronous>, transform_indices = @transform_8, window_bounds = array<i64: 1, 896>}, {transform_indices = @transform_9, window_bounds = array<i64: 16, 896>}]} {
    %c0 = arith.constant 0 : index
    %c0_0 = arith.constant 0 : index
    %0 = vector.load %arg1[%c0, %c0_0] : memref<16x64xbf16, #tpu.memory_space<vmem>>, vector<16x64xbf16>
    %c0_1 = arith.constant 0 : index
    %c0_2 = arith.constant 0 : index
    %1 = vector.load %arg2[%c0_1, %c0_2] : memref<64x256xbf16, #tpu.memory_space<vmem>>, vector<64x256xbf16>
    %cst = arith.constant dense<0.000000e+00> : vector<16x256xf32>
    %2 = tpu.matmul %0, %1, %cst {dimension_numbers = #tpu.dot_dimension_numbers<[1], [0], [0], [1], [0, 0, 1, 1], [], []>} : vector<16x64xbf16>, vector<64x256xbf16>, vector<16x256xf32> -> vector<16x256xf32>
    %c0_3 = arith.constant 0 : index
    %c0_4 = arith.constant 0 : index
    %3 = vector.load %arg3[%c0_3, %c0_4] : memref<1x256xf32, #tpu.memory_space<vmem>>, vector<1x256xf32>
    %4 = vector.broadcast %3 : vector<1x256xf32> to vector<16x256xf32>
    %5 = arith.addf %2, %4 : vector<16x256xf32>
    %cst_5 = arith.constant 0.000000e+00 : f32
    %6 = vector.broadcast %cst_5 : f32 to vector<16x256xf32>
    %7 = arith.cmpf ogt, %5, %6 : vector<16x256xf32>
    %cst_6 = arith.constant 2.000000e-01 : f32
    %8 = vector.broadcast %cst_6 : f32 to vector<16x256xf32>
    %9 = arith.mulf %8, %5 : vector<16x256xf32>
    %10 = arith.select %7, %5, %9 : vector<16x256xi1>, vector<16x256xf32>
    %11 = arith.truncf %10 : vector<16x256xf32> to vector<16x256xbf16>
    %c0_7 = arith.constant 0 : index
    %c0_8 = arith.constant 0 : index
    %12 = vector.load %arg4[%c0_7, %c0_8] : memref<256x512xbf16, #tpu.memory_space<vmem>>, vector<256x512xbf16>
    %cst_9 = arith.constant dense<0.000000e+00> : vector<16x512xf32>
    %13 = tpu.matmul %11, %12, %cst_9 {dimension_numbers = #tpu.dot_dimension_numbers<[1], [0], [0], [1], [0, 0, 1, 1], [], []>} : vector<16x256xbf16>, vector<256x512xbf16>, vector<16x512xf32> -> vector<16x512xf32>
    %c0_10 = arith.constant 0 : index
    %c0_11 = arith.constant 0 : index
    %14 = vector.load %arg5[%c0_10, %c0_11] : memref<1x512xf32, #tpu.memory_space<vmem>>, vector<1x512xf32>
    %15 = vector.broadcast %14 : vector<1x512xf32> to vector<16x512xf32>
    %16 = arith.addf %13, %15 : vector<16x512xf32>
    %cst_12 = arith.constant 0.000000e+00 : f32
    %17 = vector.broadcast %cst_12 : f32 to vector<16x512xf32>
    %18 = arith.cmpf ogt, %16, %17 : vector<16x512xf32>
    %cst_13 = arith.constant 2.000000e-01 : f32
    %19 = vector.broadcast %cst_13 : f32 to vector<16x512xf32>
    %20 = arith.mulf %19, %16 : vector<16x512xf32>
    %21 = arith.select %18, %16, %20 : vector<16x512xi1>, vector<16x512xf32>
    %22 = arith.truncf %21 : vector<16x512xf32> to vector<16x512xbf16>
    %c0_14 = arith.constant 0 : index
    %c0_15 = arith.constant 0 : index
    %23 = vector.load %arg6[%c0_14, %c0_15] : memref<512x1024xbf16, #tpu.memory_space<vmem>>, vector<512x1024xbf16>
    %cst_16 = arith.constant dense<0.000000e+00> : vector<16x1024xf32>
    %24 = tpu.matmul %22, %23, %cst_16 {dimension_numbers = #tpu.dot_dimension_numbers<[1], [0], [0], [1], [0, 0, 1, 1], [], []>} : vector<16x512xbf16>, vector<512x1024xbf16>, vector<16x1024xf32> -> vector<16x1024xf32>
    %c0_17 = arith.constant 0 : index
    %c0_18 = arith.constant 0 : index
    %25 = vector.load %arg7[%c0_17, %c0_18] : memref<1x1024xf32, #tpu.memory_space<vmem>>, vector<1x1024xf32>
    %26 = vector.broadcast %25 : vector<1x1024xf32> to vector<16x1024xf32>
    %27 = arith.addf %24, %26 : vector<16x1024xf32>
    %cst_19 = arith.constant 0.000000e+00 : f32
    %28 = vector.broadcast %cst_19 : f32 to vector<16x1024xf32>
    %29 = arith.cmpf ogt, %27, %28 : vector<16x1024xf32>
    %cst_20 = arith.constant 2.000000e-01 : f32
    %30 = vector.broadcast %cst_20 : f32 to vector<16x1024xf32>
    %31 = arith.mulf %30, %27 : vector<16x1024xf32>
    %32 = arith.select %29, %27, %31 : vector<16x1024xi1>, vector<16x1024xf32>
    %33 = arith.truncf %32 : vector<16x1024xf32> to vector<16x1024xbf16>
    %c0_21 = arith.constant 0 : index
    %c0_22 = arith.constant 0 : index
    %34 = vector.load %arg8[%c0_21, %c0_22] : memref<1024x896xbf16, #tpu.memory_space<vmem>>, vector<1024x896xbf16>
    %cst_23 = arith.constant dense<0.000000e+00> : vector<16x896xf32>
    %35 = tpu.matmul %33, %34, %cst_23 {dimension_numbers = #tpu.dot_dimension_numbers<[1], [0], [0], [1], [0, 0, 1, 1], [], []>} : vector<16x1024xbf16>, vector<1024x896xbf16>, vector<16x896xf32> -> vector<16x896xf32>
    %c0_24 = arith.constant 0 : index
    %c0_25 = arith.constant 0 : index
    %36 = vector.load %arg9[%c0_24, %c0_25] : memref<1x896xf32, #tpu.memory_space<vmem>>, vector<1x896xf32>
    %37 = vector.broadcast %36 : vector<1x896xf32> to vector<16x896xf32>
    %38 = arith.addf %35, %37 : vector<16x896xf32>
    %39 = math.tanh %38 : vector<16x896xf32>
    %c0_26 = arith.constant 0 : index
    %c0_27 = arith.constant 0 : index
    %40 = vector.load %arg10[%c0_26, %c0_27] : memref<16x896xf32, #tpu.memory_space<vmem>>, vector<16x896xf32>
    tpu.vector_store %arg10[%c0_26, %c0_27], %39 {strides = array<i32>} : memref<16x896xf32, #tpu.memory_space<vmem>>, vector<16x896xf32>,
    return
  }
  func.func @transform_0(%arg0: i32) -> (i32, i32) {
    %c0_i32 = arith.constant 0 : i32
    %c0_i32_0 = arith.constant 0 : i32
    return %arg0, %c0_i32 : i32, i32
  }
  func.func @transform_1(%arg0: i32) -> (i32, i32) {
    %c0_i32 = arith.constant 0 : i32
    %c0_i32_0 = arith.constant 0 : i32
    %c0_i32_1 = arith.constant 0 : i32
    return %c0_i32, %c0_i32_0 : i32, i32
  }
  func.func @transform_2(%arg0: i32) -> (i32, i32) {
    %c0_i32 = arith.constant 0 : i32
    %c0_i32_0 = arith.constant 0 : i32
    %c0_i32_1 = arith.constant 0 : i32
    return %c0_i32, %c0_i32_0 : i32, i32
  }
  func.func @transform_3(%arg0: i32) -> (i32, i32) {
    %c0_i32 = arith.constant 0 : i32
    %c0_i32_0 = arith.constant 0 : i32
    %c0_i32_1 = arith.constant 0 : i32
    return %c0_i32, %c0_i32_0 : i32, i32
  }
  func.func @transform_4(%arg0: i32) -> (i32, i32) {
    %c0_i32 = arith.constant 0 : i32
    %c0_i32_0 = arith.constant 0 : i32
    %c0_i32_1 = arith.constant 0 : i32
    return %c0_i32, %c0_i32_0 : i32, i32
  }
  func.func @transform_5(%arg0: i32) -> (i32, i32) {
    %c0_i32 = arith.constant 0 : i32
    %c0_i32_0 = arith.constant 0 : i32
    %c0_i32_1 = arith.constant 0 : i32
    return %c0_i32, %c0_i32_0 : i32, i32
  }
  func.func @transform_6(%arg0: i32) -> (i32, i32) {
    %c0_i32 = arith.constant 0 : i32
    %c0_i32_0 = arith.constant 0 : i32
    %c0_i32_1 = arith.constant 0 : i32
    return %c0_i32, %c0_i32_0 : i32, i32
  }
  func.func @transform_7(%arg0: i32) -> (i32, i32) {
    %c0_i32 = arith.constant 0 : i32
    %c0_i32_0 = arith.constant 0 : i32
    %c0_i32_1 = arith.constant 0 : i32
    return %c0_i32, %c0_i32_0 : i32, i32
  }
  func.func @transform_8(%arg0: i32) -> (i32, i32) {
    %c0_i32 = arith.constant 0 : i32
    %c0_i32_0 = arith.constant 0 : i32
    %c0_i32_1 = arith.constant 0 : i32
    return %c0_i32, %c0_i32_0 : i32, i32
  }
  func.func @transform_9(%arg0: i32) -> (i32, i32) {
    %c0_i32 = arith.constant 0 : i32
    %c0_i32_0 = arith.constant 0 : i32
    return %arg0, %c0_i32 : i32, i32
  }
}

</mosaic_0001>

<llo_original>
// kernel: generator_forward.1
$region0: #{generator_forward.1}
  #allocation0 [shape = 'u32[]', space=smem, size = 0x4, offset = 0x4, fixed_abs, tag = 'smem constant byte address 0x4 - core index']
  #allocation1 [shape = 'u32[144,128]{1,0:T(1,128)}', space=vmem, size = 0x12000, scoped, tag = 'internal scratch']
  %s0 = inlined_call_operand.vmem [shape: bf16[16,64], index: 0, kind: input, shape index: {}]
  %s1 = inlined_call_operand.hbm [shape: bf16[64,256], index: 1, kind: input, shape index: {}]
  %s2 = inlined_call_operand.hbm [shape: f32[1,256], index: 2, kind: input, shape index: {}]
  %s3 = inlined_call_operand.hbm [shape: bf16[256,512], index: 3, kind: input, shape index: {}]
  %s4 = inlined_call_operand.hbm [shape: f32[1,512], index: 4, kind: input, shape index: {}]
  %s5 = inlined_call_operand.hbm [shape: bf16[512,1024], index: 5, kind: input, shape index: {}]
  %s6 = inlined_call_operand.hbm [shape: f32[1,1024], index: 6, kind: input, shape index: {}]
  %s7 = inlined_call_operand.hbm [shape: bf16[1024,896], index: 7, kind: input, shape index: {}]
  %s8 = inlined_call_operand.hbm [shape: f32[1,896], index: 8, kind: input, shape index: {}]
  %s9 = inlined_call_operand.vmem [shape: f32[16,896], index: 9, kind: output, shape index: {}]
  %s10 = sld [smem:[#allocation0]]
  $region78: #{generator_forward.1} parent=0
    _
  %s12 = ssub.s32 1, %s10
  %s13 = scalar_select 0, %s12, %s10
  $region1: #{generator_forward.1} parent=0
    #allocation2 [shape = 'u8[32768]{0}', space=vmem, size = 0x8000, scoped, tag = 'input window, operand 1, single buffered']
    #allocation3 [shape = 's32[1]{0}', space=sflag, size = 0x4, scoped, tag = 'scoped memory for generator_forward.1']
    #allocation4 [shape = 'u8[1024]{0}', space=vmem, size = 0x400, scoped, tag = 'input window, operand 2, single buffered']
    #allocation5 [shape = 's32[1]{0}', space=sflag, size = 0x4, scoped, tag = 'scoped memory for generator_forward.1']
    #allocation6 [shape = 'u8[262144]{0}', space=vmem, size = 0x40000, scoped, tag = 'input window, operand 3, single buffered']
    #allocation7 [shape = 'u8[2048]{0}', space=vmem, size = 0x800, scoped, tag = 'input window, operand 4, single buffered']
    #allocation8 [shape = 's32[1]{0}', space=sflag, size = 0x4, scoped, tag = 'scoped memory for generator_forward.1']
    #allocation9 [shape = 'u8[1048576]{0}', space=vmem, size = 0x100000, scoped, tag = 'input window, operand 5, single buffered']
    #allocation10 [shape = 'u8[4096]{0}', space=vmem, size = 0x1000, scoped, tag = 'input window, operand 6, single buffered']
    #allocation11 [shape = 's32[1]{0}', space=sflag, size = 0x4, scoped, tag = 'scoped memory for generator_forward.1']
    #allocation12 [shape = 'u8[1835008]{0}', space=vmem, size = 0x1c0000, scoped, tag = 'input window, operand 7, single buffered']
    #allocation13 [shape = 'u8[3584]{0}', space=vmem, size = 0x1000, scoped, tag = 'input window, operand 8, single buffered']
    #allocation14 [shape = 's32[1]{0}', space=sflag, size = 0x4, scoped, tag = 'scoped memory for generator_forward.1']
    %14 = vsyncpa [#allocation3], 0
    %15 = vsyncpa [#allocation5], 0
    %16 = vsyncpa [#allocation8], 0
    %17 = vsyncpa [#allocation11], 0
    %18 = vsyncpa [#allocation14], 0
    // Predicated region
    $region2: #{generator_forward.1} parent=1 // pred_check
      _
    $region3: #{generator_forward.1} parent=1 // pred_check_branch
      %20 = sbr.rel (0) target = $region5
    $region4: #{generator_forward.1} parent=1 // pred_region
      _
    $region5: #{generator_forward.1} parent=1 // pred_fallthru
      _
    // Predicated region
    $region6: #{generator_forward.1} parent=1 // pred_check
      _
    $region7: #{generator_forward.1} parent=1 // pred_check_branch
      %22 = sbr.rel (0) target = $region9
    $region8: #{generator_forward.1} parent=1 // pred_region
      %s24 = ssub.s32 1024, 1024
      %25 = vsyncadd [#allocation3], %s24
      %s26 = sshll.u32 [#allocation2], 4
      %s27 = int_to_ptr.vmem [resolvable:$true] %s26
      %32 = dma.hbm_to_vmem [thread:$0]  %s1, 1024, %s27, [#allocation3], 128, 128, 8
    $region9: #{generator_forward.1} parent=1 // pred_fallthru
      _
    // Predicated region
    $region10: #{generator_forward.1} parent=1 // pred_check
      _
    $region11: #{generator_forward.1} parent=1 // pred_check_branch
      %34 = sbr.rel (0) target = $region13
    $region12: #{generator_forward.1} parent=1 // pred_region
      %s36 = ssub.s32 32, 32
      %37 = vsyncadd [#allocation5], %s36
      %s39 = sshll.u32 [#allocation4], 4
      %s40 = int_to_ptr.vmem [resolvable:$true] %s39
      %42 = dma.hbm_to_vmem [thread:$0]  %s2, 32, %s40, [#allocation5]
    $region13: #{generator_forward.1} parent=1 // pred_fallthru
      _
    // Predicated region
    $region14: #{generator_forward.1} parent=1 // pred_check
      _
    $region15: #{generator_forward.1} parent=1 // pred_check_branch
      %44 = sbr.rel (0) target = $region17
    $region16: #{generator_forward.1} parent=1 // pred_region
      %s46 = ssub.s32 8192, 8192
      %47 = vsyncadd [#allocation5], %s46
      %s48 = sshll.u32 [#allocation6], 4
      %s49 = int_to_ptr.vmem [resolvable:$true] %s48
      %54 = dma.hbm_to_vmem [thread:$0]  %s3, 8192, %s49, [#allocation5], 256, 256, 16
    $region17: #{generator_forward.1} parent=1 // pred_fallthru
      _
    // Predicated region
    $region18: #{generator_forward.1} parent=1 // pred_check
      _
    $region19: #{generator_forward.1} parent=1 // pred_check_branch
      %56 = sbr.rel (0) target = $region21
    $region20: #{generator_forward.1} parent=1 // pred_region
      %s58 = ssub.s32 64, 64
      %59 = vsyncadd [#allocation8], %s58
      %s61 = sshll.u32 [#allocation7], 4
      %s62 = int_to_ptr.vmem [resolvable:$true] %s61
      %64 = dma.hbm_to_vmem [thread:$0]  %s4, 64, %s62, [#allocation8]
    $region21: #{generator_forward.1} parent=1 // pred_fallthru
      _
    // Predicated region
    $region22: #{generator_forward.1} parent=1 // pred_check
      _
    $region23: #{generator_forward.1} parent=1 // pred_check_branch
      %66 = sbr.rel (0) target = $region25
    $region24: #{generator_forward.1} parent=1 // pred_region
      %s68 = ssub.s32 32768, 32768
      %69 = vsyncadd [#allocation8], %s68
      %s70 = sshll.u32 [#allocation9], 4
      %s71 = int_to_ptr.vmem [resolvable:$true] %s70
      %76 = dma.hbm_to_vmem [thread:$0]  %s5, 32768, %s71, [#allocation8], 512, 512, 32
    $region25: #{generator_forward.1} parent=1 // pred_fallthru
      _
    // Predicated region
    $region26: #{generator_forward.1} parent=1 // pred_check
      _
    $region27: #{generator_forward.1} parent=1 // pred_check_branch
      %78 = sbr.rel (0) target = $region29
    $region28: #{generator_forward.1} parent=1 // pred_region
      %s80 = ssub.s32 128, 128
      %81 = vsyncadd [#allocation11], %s80
      %s83 = sshll.u32 [#allocation10], 4
      %s84 = int_to_ptr.vmem [resolvable:$true] %s83
      %86 = dma.hbm_to_vmem [thread:$0]  %s6, 128, %s84, [#allocation11]
    $region29: #{generator_forward.1} parent=1 // pred_fallthru
      _
    // Predicated region
    $region30: #{generator_forward.1} parent=1 // pred_check
      _
    $region31: #{generator_forward.1} parent=1 // pred_check_branch
      %88 = sbr.rel (0) target = $region33
    $region32: #{generator_forward.1} parent=1 // pred_region
      %s90 = ssub.s32 57344, 57344
      %91 = vsyncadd [#allocation11], %s90
      %s92 = sshll.u32 [#allocation12], 4
      %s93 = int_to_ptr.vmem [resolvable:$true] %s92
      %98 = dma.hbm_to_vmem [thread:$0]  %s7, 57344, %s93, [#allocation11], 448, 448, 28
    $region33: #{generator_forward.1} parent=1 // pred_fallthru
      _
    // Predicated region
    $region34: #{generator_forward.1} parent=1 // pred_check
      _
    $region35: #{generator_forward.1} parent=1 // pred_check_branch
      %100 = sbr.rel (0) target = $region37
    $region36: #{generator_forward.1} parent=1 // pred_region
      %s102 = ssub.s32 112, 112
      %103 = vsyncadd [#allocation14], %s102
      %s105 = sshll.u32 [#allocation13], 4
      %s106 = int_to_ptr.vmem [resolvable:$true] %s105
      %108 = dma.hbm_to_vmem [thread:$0]  %s8, 112, %s106, [#allocation14]
    $region37: #{generator_forward.1} parent=1 // pred_fallthru
      _
    // Predicated region
    $region38: #{generator_forward.1} parent=1 // pred_check
      _
    $region39: #{generator_forward.1} parent=1 // pred_check_branch
      %110 = sbr.rel (0) target = $region41
    $region40: #{generator_forward.1} parent=1 // pred_region
      %111 = dma.done [#allocation3], 1024
    $region41: #{generator_forward.1} parent=1 // pred_fallthru
      _
    // Predicated region
    $region42: #{generator_forward.1} parent=1 // pred_check
      _
    $region43: #{generator_forward.1} parent=1 // pred_check_branch
      %113 = sbr.rel (0) target = $region45
    $region44: #{generator_forward.1} parent=1 // pred_region
      %114 = dma.done [#allocation5], 32
    $region45: #{generator_forward.1} parent=1 // pred_fallthru
      _
    // Predicated region
    $region46: #{generator_forward.1} parent=1 // pred_check
      _
    $region47: #{generator_forward.1} parent=1 // pred_check_branch
      %116 = sbr.rel (0) target = $region49
    $region48: #{generator_forward.1} parent=1 // pred_region
      %117 = dma.done [#allocation5], 8192
    $region49: #{generator_forward.1} parent=1 // pred_fallthru
      _
    // Predicated region
    $region50: #{generator_forward.1} parent=1 // pred_check
      _
    $region51: #{generator_forward.1} parent=1 // pred_check_branch
      %119 = sbr.rel (0) target = $region53
    $region52: #{generator_forward.1} parent=1 // pred_region
      %120 = dma.done [#allocation8], 64
    $region53: #{generator_forward.1} parent=1 // pred_fallthru
      _
    // Predicated region
    $region54: #{generator_forward.1} parent=1 // pred_check
      _
    $region55: #{generator_forward.1} parent=1 // pred_check_branch
      %122 = sbr.rel (0) target = $region57
    $region56: #{generator_forward.1} parent=1 // pred_region
      %123 = dma.done [#allocation8], 32768
    $region57: #{generator_forward.1} parent=1 // pred_fallthru
      _
    // Predicated region
    $region58: #{generator_forward.1} parent=1 // pred_check
      _
    $region59: #{generator_forward.1} parent=1 // pred_check_branch
      %125 = sbr.rel (0) target = $region61
    $region60: #{generator_forward.1} parent=1 // pred_region
      %126 = dma.done [#allocation11], 128
    $region61: #{generator_forward.1} parent=1 // pred_fallthru
      _
    // Predicated region
    $region62: #{generator_forward.1} parent=1 // pred_check
      _
    $region63: #{generator_forward.1} parent=1 // pred_check_branch
      %128 = sbr.rel (0) target = $region65
    $region64: #{generator_forward.1} parent=1 // pred_region
      %129 = dma.done [#allocation11], 57344
    $region65: #{generator_forward.1} parent=1 // pred_fallthru
      _
    // Predicated region
    $region66: #{generator_forward.1} parent=1 // pred_check
      _
    $region67: #{generator_forward.1} parent=1 // pred_check_branch
      %131 = sbr.rel (0) target = $region69
    $region68: #{generator_forward.1} parent=1 // pred_region
      %132 = dma.done [#allocation14], 112
    $region69: #{generator_forward.1} parent=1 // pred_fallthru
      _
    %v134 = vld [vmem:[%s0] sm:$0xf]
    %v135 = vld [vmem:[%s0 + $0x4] sm:$0xf]
    %v136 = vld [vmem:[#allocation2] sm:$0xff]
    %v137 = vld [vmem:[#allocation2 + $0x8] sm:$0xff]
    %v138 = vld [vmem:[#allocation2 + $0x10] sm:$0xff]
    %v139 = vld [vmem:[#allocation2 + $0x18] sm:$0xff]
    %v140 = vld [vmem:[#allocation2 + $0x20] sm:$0xff]
    %v141 = vld [vmem:[#allocation2 + $0x28] sm:$0xff]
    %v142 = vld [vmem:[#allocation2 + $0x30] sm:$0xff]
    %v143 = vld [vmem:[#allocation2 + $0x38] sm:$0xff]
    %v144 = vld [vmem:[#allocation4] sm:$0x3]
    %v146 = vlaneseq
    %v147 = vshrl.u32 %v146, 7
    %v148 = vsub.s32 0, %v147
    %v149 = vrot.slane %v144, %v148
    %v150 = vlaneseq
    %v151 = vshrl.u32 %v150, 7
    %v152 = vsub.s32 1, %v151
    %v153 = vrot.slane %v144, %v152
    %v158 = vunpack.c.l.b16 %v134
    %v159 = vunpack.c.l.b16 %v135
    %v160 = vpack.c.b16 %v159, %v158
    %v169 = vunpack.c.l.b16 %v136
    %v170 = vunpack.c.h.b16 %v136
    %v171 = vunpack.c.l.b16 %v137
    %v172 = vunpack.c.h.b16 %v137
    %v173 = vunpack.c.l.b16 %v138
    %v174 = vunpack.c.h.b16 %v138
    %v175 = vunpack.c.l.b16 %v139
    %v176 = vunpack.c.h.b16 %v139
    %v177 = vunpack.c.l.b16 %v140
    %v178 = vunpack.c.h.b16 %v140
    %v179 = vunpack.c.l.b16 %v141
    %v180 = vunpack.c.h.b16 %v141
    %v181 = vunpack.c.l.b16 %v142
    %v182 = vunpack.c.h.b16 %v142
    %v183 = vunpack.c.l.b16 %v143
    %v184 = vunpack.c.h.b16 %v143
    %v185 = vpack.c.b16 %v171, %v169
    %v186 = vpack.c.b16 %v172, %v170
    %v187 = vpack.c.b16 %v175, %v173
    %v188 = vpack.c.b16 %v176, %v174
    %v189 = vpack.c.b16 %v179, %v177
    %v190 = vpack.c.b16 %v180, %v178
    %v191 = vpack.c.b16 %v183, %v181
    %v192 = vpack.c.b16 %v184, %v182
    %vm201 = vcmask 523264
    %v203 = vsel %vm201, %v160, 0
    %205 = vmatprep.subr.bf16.mxu0 0
    %206 = vmatpush1.bf16.msra.mxu0 0
    %207 = vmatprep.subr.bf16.mxu0 0
    %208 = vmatpush1.bf16.msra.mxu0 0
    %209 = vmatprep.subr.bf16.mxu0 0
    %210 = vmatpush1.bf16.msra.mxu0 0
    %211 = vmatprep.subr.bf16.mxu0 0
    %212 = vmatpush1.bf16.msra.mxu0 0
    %213 = vmatprep.subr.bf16.mxu0 %v192
    %214 = vmatpush1.bf16.msra.mxu0 %v191
    %215 = vmatprep.subr.bf16.mxu0 %v190
    %216 = vmatpush1.bf16.msra.mxu0 %v189
    %217 = vmatprep.subr.bf16.mxu0 %v188
    %218 = vmatpush1.bf16.msra.mxu0 %v187
    %219 = vmatprep.subr.bf16.mxu0 %v186
    %220 = vmatpush1.bf16.msra.mxu0 %v185
    %221 = vmatprep.subr.bf16.mxu0 0
    %222 = vmatpush2.bf16.msra.mxu0 0
    %223 = vmatprep.subr.bf16.mxu0 0
    %224 = vmatpush2.bf16.msra.mxu0 0
    %225 = vmatprep.subr.bf16.mxu0 0
    %226 = vmatpush2.bf16.msra.mxu0 0
    %227 = vmatprep.subr.bf16.mxu0 0
    %228 = vmatpush2.bf16.msra.mxu0 0
    %229 = vmatprep.subr.bf16.mxu0 0
    %230 = vmatpush2.bf16.msra.mxu0 0
    %231 = vmatprep.subr.bf16.mxu0 0
    %232 = vmatpush2.bf16.msra.mxu0 0
    %233 = vmatprep.subr.bf16.mxu0 0
    %234 = vmatpush2.bf16.msra.mxu0 0
    %235 = vmatprep.subr.bf16.mxu0 0
    %236 = vmatpush2.bf16.msra.mxu0 0
    %237 = vmatprep.mubr.bf16.mxu0 0
    %238 = vmatmul.mubr.bf16.gmra.mxu0 %v203
    %v239 = vpop.f32.mrf.mxu0
    %v240 = vadd.f32 %v149, %v239
    %v241 = vpop.f32.mrf.mxu0
    %v242 = vadd.f32 %v153, %v241
    %v243 = vpop.f32.mrf.mxu0
    %v244 = vadd.f32 %v149, %v243
    %v245 = vpop.f32.mrf.mxu0
    %v246 = vadd.f32 %v153, %v245
    %247 = vdwg.mxu0
    %vm248 = vcmp.gt.f32.partialorder %v240, 0.0
    %vm249 = vcmp.gt.f32.partialorder %v242, 0.0
    %vm250 = vcmp.gt.f32.partialorder %v244, 0.0
    %vm251 = vcmp.gt.f32.partialorder %v246, 0.0
    %v252 = vmul.f32 %v240, 0.2
    %v253 = vmul.f32 %v242, 0.2
    %v254 = vmul.f32 %v244, 0.2
    %v255 = vmul.f32 %v246, 0.2
    %v256 = vsel %vm248, %v240, %v252
    %v257 = vsel %vm249, %v242, %v253
    %v258 = vsel %vm250, %v244, %v254
    %v259 = vsel %vm251, %v246, %v255
    %v260 = vpack.c.bf16 %v258, %v256
    %v261 = vpack.c.bf16 %v259, %v257
    %v262 = vld [vmem:[#allocation6] sm:$0xff]
    %v263 = vld [vmem:[#allocation6 + $0x8] sm:$0xff]
    %v264 = vld [vmem:[#allocation6 + $0x10] sm:$0xff]
    %v265 = vld [vmem:[#allocation6 + $0x18] sm:$0xff]
    %v266 = vld [vmem:[#allocation6 + $0x20] sm:$0xff]
    %v267 = vld [vmem:[#allocation6 + $0x28] sm:$0xff]
    %v268 = vld [vmem:[#allocation6 + $0x30] sm:$0xff]
    %v269 = vld [vmem:[#allocation6 + $0x38] sm:$0xff]
    %v270 = vld [vmem:[#allocation6 + $0x40] sm:$0xff]
    %v271 = vld [vmem:[#allocation6 + $0x48] sm:$0xff]
    %v272 = vld [vmem:[#allocation6 + $0x50] sm:$0xff]
    %v273 = vld [vmem:[#allocation6 + $0x58] sm:$0xff]
    %v274 = vld [vmem:[#allocation6 + $0x60] sm:$0xff]
    %v275 = vld [vmem:[#allocation6 + $0x68] sm:$0xff]
    %v276 = vld [vmem:[#allocation6 + $0x70] sm:$0xff]
    %v277 = vld [vmem:[#allocation6 + $0x78] sm:$0xff]
    %v278 = vld [vmem:[#allocation6 + $0x80] sm:$0xff]
    %v279 = vld [vmem:[#allocation6 + $0x88] sm:$0xff]
    %v280 = vld [vmem:[#allocation6 + $0x90] sm:$0xff]
    %v281 = vld [vmem:[#allocation6 + $0x98] sm:$0xff]
    %v282 = vld [vmem:[#allocation6 + $0xa0] sm:$0xff]
    %v283 = vld [vmem:[#allocation6 + $0xa8] sm:$0xff]
    %v284 = vld [vmem:[#allocation6 + $0xb0] sm:$0xff]
    %v285 = vld [vmem:[#allocation6 + $0xb8] sm:$0xff]
    %v286 = vld [vmem:[#allocation6 + $0xc0] sm:$0xff]
    %v287 = vld [vmem:[#allocation6 + $0xc8] sm:$0xff]
    %v288 = vld [vmem:[#allocation6 + $0xd0] sm:$0xff]
    %v289 = vld [vmem:[#allocation6 + $0xd8] sm:$0xff]
    %v290 = vld [vmem:[#allocation6 + $0xe0] sm:$0xff]
    %v291 = vld [vmem:[#allocation6 + $0xe8] sm:$0xff]
    %v292 = vld [vmem:[#allocation6 + $0xf0] sm:$0xff]
    %v293 = vld [vmem:[#allocation6 + $0xf8] sm:$0xff]
    %v294 = vld [vmem:[#allocation6 + $0x100] sm:$0xff]
    %v295 = vld [vmem:[#allocation6 + $0x108] sm:$0xff]
    %v296 = vld [vmem:[#allocation6 + $0x110] sm:$0xff]
    %v297 = vld [vmem:[#allocation6 + $0x118] sm:$0xff]
    %v298 = vld [vmem:[#allocation6 + $0x120] sm:$0xff]
    %v299 = vld [vmem:[#allocation6 + $0x128] sm:$0xff]
    %v300 = vld [vmem:[#allocation6 + $0x130] sm:$0xff]
    %v301 = vld [vmem:[#allocation6 + $0x138] sm:$0xff]
    %v302 = vld [vmem:[#allocation6 + $0x140] sm:$0xff]
    %v303 = vld [vmem:[#allocation6 + $0x148] sm:$0xff]
    %v304 = vld [vmem:[#allocation6 + $0x150] sm:$0xff]
    %v305 = vld [vmem:[#allocation6 + $0x158] sm:$0xff]
    %v306 = vld [vmem:[#allocation6 + $0x160] sm:$0xff]
    %v307 = vld [vmem:[#allocation6 + $0x168] sm:$0xff]
    %v308 = vld [vmem:[#allocation6 + $0x170] sm:$0xff]
    %v309 = vld [vmem:[#allocation6 + $0x178] sm:$0xff]
    %v310 = vld [vmem:[#allocation6 + $0x180] sm:$0xff]
    %v311 = vld [vmem:[#allocation6 + $0x188] sm:$0xff]
    %v312 = vld [vmem:[#allocation6 + $0x190] sm:$0xff]
    %v313 = vld [vmem:[#allocation6 + $0x198] sm:$0xff]
    %v314 = vld [vmem:[#allocation6 + $0x1a0] sm:$0xff]
    %v315 = vld [vmem:[#allocation6 + $0x1a8] sm:$0xff]
    %v316 = vld [vmem:[#allocation6 + $0x1b0] sm:$0xff]
    %v317 = vld [vmem:[#allocation6 + $0x1b8] sm:$0xff]
    %v318 = vld [vmem:[#allocation6 + $0x1c0] sm:$0xff]
    %v319 = vld [vmem:[#allocation6 + $0x1c8] sm:$0xff]
    %v320 = vld [vmem:[#allocation6 + $0x1d0] sm:$0xff]
    %v321 = vld [vmem:[#allocation6 + $0x1d8] sm:$0xff]
    %v322 = vld [vmem:[#allocation6 + $0x1e0] sm:$0xff]
    %v323 = vld [vmem:[#allocation6 + $0x1e8] sm:$0xff]
    %v324 = vld [vmem:[#allocation6 + $0x1f0] sm:$0xff]
    %v325 = vld [vmem:[#allocation6 + $0x1f8] sm:$0xff]
    %v326 = vld [vmem:[#allocation7] sm:$0xf]
    %v328 = vlaneseq
    %v329 = vshrl.u32 %v328, 7
    %v330 = vsub.s32 0, %v329
    %v331 = vrot.slane %v326, %v330
    %v332 = vlaneseq
    %v333 = vshrl.u32 %v332, 7
    %v334 = vsub.s32 1, %v333
    %v335 = vrot.slane %v326, %v334
    %v336 = vlaneseq
    %v337 = vshrl.u32 %v336, 7
    %v338 = vsub.s32 2, %v337
    %v339 = vrot.slane %v326, %v338
    %v340 = vlaneseq
    %v341 = vshrl.u32 %v340, 7
    %v342 = vsub.s32 3, %v341
    %v343 = vrot.slane %v326, %v342
    %v412 = vunpack.c.l.b16 %v262
    %v413 = vunpack.c.h.b16 %v262
    %v414 = vunpack.c.l.b16 %v263
    %v415 = vunpack.c.h.b16 %v263
    %v416 = vunpack.c.l.b16 %v264
    %v417 = vunpack.c.h.b16 %v264
    %v418 = vunpack.c.l.b16 %v265
    %v419 = vunpack.c.h.b16 %v265
    %v420 = vunpack.c.l.b16 %v266
    %v421 = vunpack.c.h.b16 %v266
    %v422 = vunpack.c.l.b16 %v267
    %v423 = vunpack.c.h.b16 %v267
    %v424 = vunpack.c.l.b16 %v268
    %v425 = vunpack.c.h.b16 %v268
    %v426 = vunpack.c.l.b16 %v269
    %v427 = vunpack.c.h.b16 %v269
    %v428 = vunpack.c.l.b16 %v270
    %v429 = vunpack.c.h.b16 %v270
    %v430 = vunpack.c.l.b16 %v271
    %v431 = vunpack.c.h.b16 %v271
    %v432 = vunpack.c.l.b16 %v272
    %v433 = vunpack.c.h.b16 %v272
    %v434 = vunpack.c.l.b16 %v273
    %v435 = vunpack.c.h.b16 %v273
    %v436 = vunpack.c.l.b16 %v274
    %v437 = vunpack.c.h.b16 %v274
    %v438 = vunpack.c.l.b16 %v275
    %v439 = vunpack.c.h.b16 %v275
    %v440 = vunpack.c.l.b16 %v276
    %v441 = vunpack.c.h.b16 %v276
    %v442 = vunpack.c.l.b16 %v277
    %v443 = vunpack.c.h.b16 %v277
    %v444 = vunpack.c.l.b16 %v278
    %v445 = vunpack.c.h.b16 %v278
    %v446 = vunpack.c.l.b16 %v279
    %v447 = vunpack.c.h.b16 %v279
    %v448 = vunpack.c.l.b16 %v280
    %v449 = vunpack.c.h.b16 %v280
    %v450 = vunpack.c.l.b16 %v281
    %v451 = vunpack.c.h.b16 %v281
    %v452 = vunpack.c.l.b16 %v282
    %v453 = vunpack.c.h.b16 %v282
    %v454 = vunpack.c.l.b16 %v283
    %v455 = vunpack.c.h.b16 %v283
    %v456 = vunpack.c.l.b16 %v284
    %v457 = vunpack.c.h.b16 %v284
    %v458 = vunpack.c.l.b16 %v285
    %v459 = vunpack.c.h.b16 %v285
    %v460 = vunpack.c.l.b16 %v286
    %v461 = vunpack.c.h.b16 %v286
    %v462 = vunpack.c.l.b16 %v287
    %v463 = vunpack.c.h.b16 %v287
    %v464 = vunpack.c.l.b16 %v288
    %v465 = vunpack.c.h.b16 %v288
    %v466 = vunpack.c.l.b16 %v289
    %v467 = vunpack.c.h.b16 %v289
    %v468 = vunpack.c.l.b16 %v290
    %v469 = vunpack.c.h.b16 %v290
    %v470 = vunpack.c.l.b16 %v291
    %v471 = vunpack.c.h.b16 %v291
    %v472 = vunpack.c.l.b16 %v292
    %v473 = vunpack.c.h.b16 %v292
    %v474 = vunpack.c.l.b16 %v293
    %v475 = vunpack.c.h.b16 %v293
    %v476 = vunpack.c.l.b16 %v294
    %v477 = vunpack.c.h.b16 %v294
    %v478 = vunpack.c.l.b16 %v295
    %v479 = vunpack.c.h.b16 %v295
    %v480 = vunpack.c.l.b16 %v296
    %v481 = vunpack.c.h.b16 %v296
    %v482 = vunpack.c.l.b16 %v297
    %v483 = vunpack.c.h.b16 %v297
    %v484 = vunpack.c.l.b16 %v298
    %v485 = vunpack.c.h.b16 %v298
    %v486 = vunpack.c.l.b16 %v299
    %v487 = vunpack.c.h.b16 %v299
    %v488 = vunpack.c.l.b16 %v300
    %v489 = vunpack.c.h.b16 %v300
    %v490 = vunpack.c.l.b16 %v301
    %v491 = vunpack.c.h.b16 %v301
    %v492 = vunpack.c.l.b16 %v302
    %v493 = vunpack.c.h.b16 %v302
    %v494 = vunpack.c.l.b16 %v303
    %v495 = vunpack.c.h.b16 %v303
    %v496 = vunpack.c.l.b16 %v304
    %v497 = vunpack.c.h.b16 %v304
    %v498 = vunpack.c.l.b16 %v305
    %v499 = vunpack.c.h.b16 %v305
    %v500 = vunpack.c.l.b16 %v306
    %v501 = vunpack.c.h.b16 %v306
    %v502 = vunpack.c.l.b16 %v307
    %v503 = vunpack.c.h.b16 %v307
    %v504 = vunpack.c.l.b16 %v308
    %v505 = vunpack.c.h.b16 %v308
    %v506 = vunpack.c.l.b16 %v309
    %v507 = vunpack.c.h.b16 %v309
    %v508 = vunpack.c.l.b16 %v310
    %v509 = vunpack.c.h.b16 %v310
    %v510 = vunpack.c.l.b16 %v311
    %v511 = vunpack.c.h.b16 %v311
    %v512 = vunpack.c.l.b16 %v312
    %v513 = vunpack.c.h.b16 %v312
    %v514 = vunpack.c.l.b16 %v313
    %v515 = vunpack.c.h.b16 %v313
    %v516 = vunpack.c.l.b16 %v314
    %v517 = vunpack.c.h.b16 %v314
    %v518 = vunpack.c.l.b16 %v315
    %v519 = vunpack.c.h.b16 %v315
    %v520 = vunpack.c.l.b16 %v316
    %v521 = vunpack.c.h.b16 %v316
    %v522 = vunpack.c.l.b16 %v317
    %v523 = vunpack.c.h.b16 %v317
    %v524 = vunpack.c.l.b16 %v318
    %v525 = vunpack.c.h.b16 %v318
    %v526 = vunpack.c.l.b16 %v319
    %v527 = vunpack.c.h.b16 %v319
    %v528 = vunpack.c.l.b16 %v320
    %v529 = vunpack.c.h.b16 %v320
    %v530 = vunpack.c.l.b16 %v321
    %v531 = vunpack.c.h.b16 %v321
    %v532 = vunpack.c.l.b16 %v322
    %v533 = vunpack.c.h.b16 %v322
    %v534 = vunpack.c.l.b16 %v323
    %v535 = vunpack.c.h.b16 %v323
    %v536 = vunpack.c.l.b16 %v324
    %v537 = vunpack.c.h.b16 %v324
    %v538 = vunpack.c.l.b16 %v325
    %v539 = vunpack.c.h.b16 %v325
    %v540 = vpack.c.b16 %v416, %v412
    %v541 = vpack.c.b16 %v417, %v413
    %v542 = vpack.c.b16 %v418, %v414
    %v543 = vpack.c.b16 %v419, %v415
    %v544 = vpack.c.b16 %v424, %v420
    %v545 = vpack.c.b16 %v425, %v421
    %v546 = vpack.c.b16 %v426, %v422
    %v547 = vpack.c.b16 %v427, %v423
    %v548 = vpack.c.b16 %v432, %v428
    %v549 = vpack.c.b16 %v433, %v429
    %v550 = vpack.c.b16 %v434, %v430
    %v551 = vpack.c.b16 %v435, %v431
    %v552 = vpack.c.b16 %v440, %v436
    %v553 = vpack.c.b16 %v441, %v437
    %v554 = vpack.c.b16 %v442, %v438
    %v555 = vpack.c.b16 %v443, %v439
    %v556 = vpack.c.b16 %v448, %v444
    %v557 = vpack.c.b16 %v449, %v445
    %v558 = vpack.c.b16 %v450, %v446
    %v559 = vpack.c.b16 %v451, %v447
    %v560 = vpack.c.b16 %v456, %v452
    %v561 = vpack.c.b16 %v457, %v453
    %v562 = vpack.c.b16 %v458, %v454
    %v563 = vpack.c.b16 %v459, %v455
    %v564 = vpack.c.b16 %v464, %v460
    %v565 = vpack.c.b16 %v465, %v461
    %v566 = vpack.c.b16 %v466, %v462
    %v567 = vpack.c.b16 %v467, %v463
    %v568 = vpack.c.b16 %v472, %v468
    %v569 = vpack.c.b16 %v473, %v469
    %v570 = vpack.c.b16 %v474, %v470
    %v571 = vpack.c.b16 %v475, %v471
    %v572 = vpack.c.b16 %v480, %v476
    %v573 = vpack.c.b16 %v481, %v477
    %v574 = vpack.c.b16 %v482, %v478
    %v575 = vpack.c.b16 %v483, %v479
    %v576 = vpack.c.b16 %v488, %v484
    %v577 = vpack.c.b16 %v489, %v485
    %v578 = vpack.c.b16 %v490, %v486
    %v579 = vpack.c.b16 %v491, %v487
    %v580 = vpack.c.b16 %v496, %v492
    %v581 = vpack.c.b16 %v497, %v493
    %v582 = vpack.c.b16 %v498, %v494
    %v583 = vpack.c.b16 %v499, %v495
    %v584 = vpack.c.b16 %v504, %v500
    %v585 = vpack.c.b16 %v505, %v501
    %v586 = vpack.c.b16 %v506, %v502
    %v587 = vpack.c.b16 %v507, %v503
    %v588 = vpack.c.b16 %v512, %v508
    %v589 = vpack.c.b16 %v513, %v509
    %v590 = vpack.c.b16 %v514, %v510
    %v591 = vpack.c.b16 %v515, %v511
    %v592 = vpack.c.b16 %v520, %v516
    %v593 = vpack.c.b16 %v521, %v517
    %v594 = vpack.c.b16 %v522, %v518
    %v595 = vpack.c.b16 %v523, %v519
    %v596 = vpack.c.b16 %v528, %v524
    %v597 = vpack.c.b16 %v529, %v525
    %v598 = vpack.c.b16 %v530, %v526
    %v599 = vpack.c.b16 %v531, %v527
    %v600 = vpack.c.b16 %v536, %v532
    %v601 = vpack.c.b16 %v537, %v533
    %v602 = vpack.c.b16 %v538, %v534
    %v603 = vpack.c.b16 %v539, %v535
    %668 = vmatprep.subr.bf16.mxu0 %v569
    %669 = vmatpush1.bf16.msra.mxu0 %v568
    %670 = vmatprep.subr.bf16.mxu0 %v565
    %671 = vmatpush1.bf16.msra.mxu0 %v564
    %672 = vmatprep.subr.bf16.mxu0 %v561
    %673 = vmatpush1.bf16.msra.mxu0 %v560
    %674 = vmatprep.subr.bf16.mxu0 %v557
    %675 = vmatpush1.bf16.msra.mxu0 %v556
    %676 = vmatprep.subr.bf16.mxu0 %v553
    %677 = vmatpush1.bf16.msra.mxu0 %v552
    %678 = vmatprep.subr.bf16.mxu0 %v549
    %679 = vmatpush1.bf16.msra.mxu0 %v548
    %680 = vmatprep.subr.bf16.mxu0 %v545
    %681 = vmatpush1.bf16.msra.mxu0 %v544
    %682 = vmatprep.subr.bf16.mxu0 %v541
    %683 = vmatpush1.bf16.msra.mxu0 %v540
    %684 = vmatprep.subr.bf16.mxu0 %v601
    %685 = vmatpush2.bf16.msra.mxu0 %v600
    %686 = vmatprep.subr.bf16.mxu0 %v597
    %687 = vmatpush2.bf16.msra.mxu0 %v596
    %688 = vmatprep.subr.bf16.mxu0 %v593
    %689 = vmatpush2.bf16.msra.mxu0 %v592
    %690 = vmatprep.subr.bf16.mxu0 %v589
    %691 = vmatpush2.bf16.msra.mxu0 %v588
    %692 = vmatprep.subr.bf16.mxu0 %v585
    %693 = vmatpush2.bf16.msra.mxu0 %v584
    %694 = vmatprep.subr.bf16.mxu0 %v581
    %695 = vmatpush2.bf16.msra.mxu0 %v580
    %696 = vmatprep.subr.bf16.mxu0 %v577
    %697 = vmatpush2.bf16.msra.mxu0 %v576
    %698 = vmatprep.subr.bf16.mxu0 %v573
    %699 = vmatpush2.bf16.msra.mxu0 %v572
    %700 = vmatprep.mubr.bf16.mxu0 %v261
    %701 = vmatmul.mubr.bf16.gmra.mxu0 %v260
    %v702 = vpop.f32.mrf.mxu0
    %v703 = vadd.f32 %v331, %v702
    %v704 = vpop.f32.mrf.mxu0
    %v705 = vadd.f32 %v335, %v704
    %v706 = vpop.f32.mrf.mxu0
    %v707 = vadd.f32 %v331, %v706
    %v708 = vpop.f32.mrf.mxu0
    %v709 = vadd.f32 %v335, %v708
    %710 = vdwg.mxu0
    %711 = vmatprep.subr.bf16.mxu0 %v571
    %712 = vmatpush1.bf16.msra.mxu0 %v570
    %713 = vmatprep.subr.bf16.mxu0 %v567
    %714 = vmatpush1.bf16.msra.mxu0 %v566
    %715 = vmatprep.subr.bf16.mxu0 %v563
    %716 = vmatpush1.bf16.msra.mxu0 %v562
    %717 = vmatprep.subr.bf16.mxu0 %v559
    %718 = vmatpush1.bf16.msra.mxu0 %v558
    %719 = vmatprep.subr.bf16.mxu0 %v555
    %720 = vmatpush1.bf16.msra.mxu0 %v554
    %721 = vmatprep.subr.bf16.mxu0 %v551
    %722 = vmatpush1.bf16.msra.mxu0 %v550
    %723 = vmatprep.subr.bf16.mxu0 %v547
    %724 = vmatpush1.bf16.msra.mxu0 %v546
    %725 = vmatprep.subr.bf16.mxu0 %v543
    %726 = vmatpush1.bf16.msra.mxu0 %v542
    %727 = vmatprep.subr.bf16.mxu0 %v603
    %728 = vmatpush2.bf16.msra.mxu0 %v602
    %729 = vmatprep.subr.bf16.mxu0 %v599
    %730 = vmatpush2.bf16.msra.mxu0 %v598
    %731 = vmatprep.subr.bf16.mxu0 %v595
    %732 = vmatpush2.bf16.msra.mxu0 %v594
    %733 = vmatprep.subr.bf16.mxu0 %v591
    %734 = vmatpush2.bf16.msra.mxu0 %v590
    %735 = vmatprep.subr.bf16.mxu0 %v587
    %736 = vmatpush2.bf16.msra.mxu0 %v586
    %737 = vmatprep.subr.bf16.mxu0 %v583
    %738 = vmatpush2.bf16.msra.mxu0 %v582
    %739 = vmatprep.subr.bf16.mxu0 %v579
    %740 = vmatpush2.bf16.msra.mxu0 %v578
    %741 = vmatprep.subr.bf16.mxu0 %v575
    %742 = vmatpush2.bf16.msra.mxu0 %v574
    %743 = vmatprep.mubr.bf16.mxu0 %v261
    %744 = vmatmul.mubr.bf16.gmra.mxu0 %v260
    %v745 = vpop.f32.mrf.mxu0
    %v746 = vadd.f32 %v339, %v745
    %v747 = vpop.f32.mrf.mxu0
    %v748 = vadd.f32 %v343, %v747
    %v749 = vpop.f32.mrf.mxu0
    %v750 = vadd.f32 %v339, %v749
    %v751 = vpop.f32.mrf.mxu0
    %v752 = vadd.f32 %v343, %v751
    %753 = vdwg.mxu0
    %vm754 = vcmp.gt.f32.partialorder %v703, 0.0
    %vm755 = vcmp.gt.f32.partialorder %v705, 0.0
    %vm756 = vcmp.gt.f32.partialorder %v746, 0.0
    %vm757 = vcmp.gt.f32.partialorder %v748, 0.0
    %vm758 = vcmp.gt.f32.partialorder %v707, 0.0
    %vm759 = vcmp.gt.f32.partialorder %v709, 0.0
    %vm760 = vcmp.gt.f32.partialorder %v750, 0.0
    %vm761 = vcmp.gt.f32.partialorder %v752, 0.0
    %v762 = vmul.f32 %v703, 0.2
    %v763 = vmul.f32 %v705, 0.2
    %v764 = vmul.f32 %v746, 0.2
    %v765 = vmul.f32 %v748, 0.2
    %v766 = vmul.f32 %v707, 0.2
    %v767 = vmul.f32 %v709, 0.2
    %v768 = vmul.f32 %v750, 0.2
    %v769 = vmul.f32 %v752, 0.2
    %v770 = vsel %vm754, %v703, %v762
    %v771 = vsel %vm755, %v705, %v763
    %v772 = vsel %vm756, %v746, %v764
    %v773 = vsel %vm757, %v748, %v765
    %v774 = vsel %vm758, %v707, %v766
    %v775 = vsel %vm759, %v709, %v767
    %v776 = vsel %vm760, %v750, %v768
    %v777 = vsel %vm761, %v752, %v769
    %v778 = vpack.c.bf16 %v774, %v770
    %v779 = vpack.c.bf16 %v775, %v771
    %v780 = vpack.c.bf16 %v776, %v772
    %v781 = vpack.c.bf16 %v777, %v773
    %v782 = vld [vmem:[#allocation9] sm:$0xff]
    %v783 = vld [vmem:[#allocation9 + $0x8] sm:$0xff]
    %v784 = vld [vmem:[#allocation9 + $0x10] sm:$0xff]
    %v785 = vld [vmem:[#allocation9 + $0x18] sm:$0xff]
    %v786 = vld [vmem:[#allocation9 + $0x20] sm:$0xff]
    %v787 = vld [vmem:[#allocation9 + $0x28] sm:$0xff]
    %v788 = vld [vmem:[#allocation9 + $0x30] sm:$0xff]
    %v789 = vld [vmem:[#allocation9 + $0x38] sm:$0xff]
    %v790 = vld [vmem:[#allocation9 + $0x40] sm:$0xff]
    %v791 = vld [vmem:[#allocation9 + $0x48] sm:$0xff]
    %v792 = vld [vmem:[#allocation9 + $0x50] sm:$0xff]
    %v793 = vld [vmem:[#allocation9 + $0x58] sm:$0xff]
    %v794 = vld [vmem:[#allocation9 + $0x60] sm:$0xff]
    %v795 = vld [vmem:[#allocation9 + $0x68] sm:$0xff]
    %v796 = vld [vmem:[#allocation9 + $0x70] sm:$0xff]
    %v797 = vld [vmem:[#allocation9 + $0x78] sm:$0xff]
    %v798 = vld [vmem:[#allocation9 + $0x80] sm:$0xff]
    %v799 = vld [vmem:[#allocation9 + $0x88] sm:$0xff]
    %v800 = vld [vmem:[#allocation9 + $0x90] sm:$0xff]
    %v801 = vld [vmem:[#allocation9 + $0x98] sm:$0xff]
    %v802 = vld [vmem:[#allocation9 + $0xa0] sm:$0xff]
    %v803 = vld [vmem:[#allocation9 + $0xa8] sm:$0xff]
    %v804 = vld [vmem:[#allocation9 + $0xb0] sm:$0xff]
    %v805 = vld [vmem:[#allocation9 + $0xb8] sm:$0xff]
    %v806 = vld [vmem:[#allocation9 + $0xc0] sm:$0xff]
    %v807 = vld [vmem:[#allocation9 + $0xc8] sm:$0xff]
    %v808 = vld [vmem:[#allocation9 + $0xd0] sm:$0xff]
    %v809 = vld [vmem:[#allocation9 + $0xd8] sm:$0xff]
    %v810 = vld [vmem:[#allocation9 + $0xe0] sm:$0xff]
    %v811 = vld [vmem:[#allocation9 + $0xe8] sm:$0xff]
    %v812 = vld [vmem:[#allocation9 + $0xf0] sm:$0xff]
    %v813 = vld [vmem:[#allocation9 + $0xf8] sm:$0xff]
    %v814 = vld [vmem:[#allocation9 + $0x100] sm:$0xff]
    %v815 = vld [vmem:[#allocation9 + $0x108] sm:$0xff]
    %v816 = vld [vmem:[#allocation9 + $0x110] sm:$0xff]
    %v817 = vld [vmem:[#allocation9 + $0x118] sm:$0xff]
    %v818 = vld [vmem:[#allocation9 + $0x120] sm:$0xff]
    %v819 = vld [vmem:[#allocation9 + $0x128] sm:$0xff]
    %v820 = vld [vmem:[#allocation9 + $0x130] sm:$0xff]
    %v821 = vld [vmem:[#allocation9 + $0x138] sm:$0xff]
    %v822 = vld [vmem:[#allocation9 + $0x140] sm:$0xff]
    %v823 = vld [vmem:[#allocation9 + $0x148] sm:$0xff]
    %v824 = vld [vmem:[#allocation9 + $0x150] sm:$0xff]
    %v825 = vld [vmem:[#allocation9 + $0x158] sm:$0xff]
    %v826 = vld [vmem:[#allocation9 + $0x160] sm:$0xff]
    %v827 = vld [vmem:[#allocation9 + $0x168] sm:$0xff]
    %v828 = vld [vmem:[#allocation9 + $0x170] sm:$0xff]
    %v829 = vld [vmem:[#allocation9 + $0x178] sm:$0xff]
    %v830 = vld [vmem:[#allocation9 + $0x180] sm:$0xff]
    %v831 = vld [vmem:[#allocation9 + $0x188] sm:$0xff]
    %v832 = vld [vmem:[#allocation9 + $0x190] sm:$0xff]
    %v833 = vld [vmem:[#allocation9 + $0x198] sm:$0xff]
    %v834 = vld [vmem:[#allocation9 + $0x1a0] sm:$0xff]
    %v835 = vld [vmem:[#allocation9 + $0x1a8] sm:$0xff]
    %v836 = vld [vmem:[#allocation9 + $0x1b0] sm:$0xff]
    %v837 = vld [vmem:[#allocation9 + $0x1b8] sm:$0xff]
    %v838 = vld [vmem:[#allocation9 + $0x1c0] sm:$0xff]
    %v839 = vld [vmem:[#allocation9 + $0x1c8] sm:$0xff]
    %v840 = vld [vmem:[#allocation9 + $0x1d0] sm:$0xff]
    %v841 = vld [vmem:[#allocation9 + $0x1d8] sm:$0xff]
    %v842 = vld [vmem:[#allocation9 + $0x1e0] sm:$0xff]
    %v843 = vld [vmem:[#allocation9 + $0x1e8] sm:$0xff]
    %v844 = vld [vmem:[#allocation9 + $0x1f0] sm:$0xff]
    %v845 = vld [vmem:[#allocation9 + $0x1f8] sm:$0xff]
    %v846 = vld [vmem:[#allocation9 + $0x200] sm:$0xff]
    %v847 = vld [vmem:[#allocation9 + $0x208] sm:$0xff]
    %v848 = vld [vmem:[#allocation9 + $0x210] sm:$0xff]
    %v849 = vld [vmem:[#allocation9 + $0x218] sm:$0xff]
    %v850 = vld [vmem:[#allocation9 + $0x220] sm:$0xff]
    %v851 = vld [vmem:[#allocation9 + $0x228] sm:$0xff]
    %v852 = vld [vmem:[#allocation9 + $0x230] sm:$0xff]
    %v853 = vld [vmem:[#allocation9 + $0x238] sm:$0xff]
    %v854 = vld [vmem:[#allocation9 + $0x240] sm:$0xff]
    %v855 = vld [vmem:[#allocation9 + $0x248] sm:$0xff]
    %v856 = vld [vmem:[#allocation9 + $0x250] sm:$0xff]
    %v857 = vld [vmem:[#allocation9 + $0x258] sm:$0xff]
    %v858 = vld [vmem:[#allocation9 + $0x260] sm:$0xff]
    %v859 = vld [vmem:[#allocation9 + $0x268] sm:$0xff]
    %v860 = vld [vmem:[#allocation9 + $0x270] sm:$0xff]
    %v861 = vld [vmem:[#allocation9 + $0x278] sm:$0xff]
    %v862 = vld [vmem:[#allocation9 + $0x280] sm:$0xff]
    %v863 = vld [vmem:[#allocation9 + $0x288] sm:$0xff]
    %v864 = vld [vmem:[#allocation9 + $0x290] sm:$0xff]
    %v865 = vld [vmem:[#allocation9 + $0x298] sm:$0xff]
    %v866 = vld [vmem:[#allocation9 + $0x2a0] sm:$0xff]
    %v867 = vld [vmem:[#allocation9 + $0x2a8] sm:$0xff]
    %v868 = vld [vmem:[#allocation9 + $0x2b0] sm:$0xff]
    %v869 = vld [vmem:[#allocation9 + $0x2b8] sm:$0xff]
    %v870 = vld [vmem:[#allocation9 + $0x2c0] sm:$0xff]
    %v871 = vld [vmem:[#allocation9 + $0x2c8] sm:$0xff]
    %v872 = vld [vmem:[#allocation9 + $0x2d0] sm:$0xff]
    %v873 = vld [vmem:[#allocation9 + $0x2d8] sm:$0xff]
    %v874 = vld [vmem:[#allocation9 + $0x2e0] sm:$0xff]
    %v875 = vld [vmem:[#allocation9 + $0x2e8] sm:$0xff]
    %v876 = vld [vmem:[#allocation9 + $0x2f0] sm:$0xff]
    %v877 = vld [vmem:[#allocation9 + $0x2f8] sm:$0xff]
    %v878 = vld [vmem:[#allocation9 + $0x300] sm:$0xff]
    %v879 = vld [vmem:[#allocation9 + $0x308] sm:$0xff]
    %v880 = vld [vmem:[#allocation9 + $0x310] sm:$0xff]
    %v881 = vld [vmem:[#allocation9 + $0x318] sm:$0xff]
    %v882 = vld [vmem:[#allocation9 + $0x320] sm:$0xff]
    %v883 = vld [vmem:[#allocation9 + $0x328] sm:$0xff]
    %v884 = vld [vmem:[#allocation9 + $0x330] sm:$0xff]
    %v885 = vld [vmem:[#allocation9 + $0x338] sm:$0xff]
    %v886 = vld [vmem:[#allocation9 + $0x340] sm:$0xff]
    %v887 = vld [vmem:[#allocation9 + $0x348] sm:$0xff]
    %v888 = vld [vmem:[#allocation9 + $0x350] sm:$0xff]
    %v889 = vld [vmem:[#allocation9 + $0x358] sm:$0xff]
    %v890 = vld [vmem:[#allocation9 + $0x360] sm:$0xff]
    %v891 = vld [vmem:[#allocation9 + $0x368] sm:$0xff]
    %v892 = vld [vmem:[#allocation9 + $0x370] sm:$0xff]
    %v893 = vld [vmem:[#allocation9 + $0x378] sm:$0xff]
    %v894 = vld [vmem:[#allocation9 + $0x380] sm:$0xff]
    %v895 = vld [vmem:[#allocation9 + $0x388] sm:$0xff]
    %v896 = vld [vmem:[#allocation9 + $0x390] sm:$0xff]
    %v897 = vld [vmem:[#allocation9 + $0x398] sm:$0xff]
    %v898 = vld [vmem:[#allocation9 + $0x3a0] sm:$0xff]
    %v899 = vld [vmem:[#allocation9 + $0x3a8] sm:$0xff]
    %v900 = vld [vmem:[#allocation9 + $0x3b0] sm:$0xff]
    %v901 = vld [vmem:[#allocation9 + $0x3b8] sm:$0xff]
    %v902 = vld [vmem:[#allocation9 + $0x3c0] sm:$0xff]
    %v903 = vld [vmem:[#allocation9 + $0x3c8] sm:$0xff]
    %v904 = vld [vmem:[#allocation9 + $0x3d0] sm:$0xff]
    %v905 = vld [vmem:[#allocation9 + $0x3d8] sm:$0xff]
    %v906 = vld [vmem:[#allocation9 + $0x3e0] sm:$0xff]
    %v907 = vld [vmem:[#allocation9 + $0x3e8] sm:$0xff]
    %v908 = vld [vmem:[#allocation9 + $0x3f0] sm:$0xff]
    %v909 = vld [vmem:[#allocation9 + $0x3f8] sm:$0xff]
    %v910 = vld [vmem:[#allocation9 + $0x400] sm:$0xff]
    %v911 = vld [vmem:[#allocation9 + $0x408] sm:$0xff]
    %v912 = vld [vmem:[#allocation9 + $0x410] sm:$0xff]
    %v913 = vld [vmem:[#allocation9 + $0x418] sm:$0xff]
    %v914 = vld [vmem:[#allocation9 + $0x420] sm:$0xff]
    %v915 = vld [vmem:[#allocation9 + $0x428] sm:$0xff]
    %v916 = vld [vmem:[#allocation9 + $0x430] sm:$0xff]
    %v917 = vld [vmem:[#allocation9 + $0x438] sm:$0xff]
    %v918 = vld [vmem:[#allocation9 + $0x440] sm:$0xff]
    %v919 = vld [vmem:[#allocation9 + $0x448] sm:$0xff]
    %v920 = vld [vmem:[#allocation9 + $0x450] sm:$0xff]
    %v921 = vld [vmem:[#allocation9 + $0x458] sm:$0xff]
    %v922 = vld [vmem:[#allocation9 + $0x460] sm:$0xff]
    %v923 = vld [vmem:[#allocation9 + $0x468] sm:$0xff]
    %v924 = vld [vmem:[#allocation9 + $0x470] sm:$0xff]
    %v925 = vld [vmem:[#allocation9 + $0x478] sm:$0xff]
    %v926 = vld [vmem:[#allocation9 + $0x480] sm:$0xff]
    %v927 = vld [vmem:[#allocation9 + $0x488] sm:$0xff]
    %v928 = vld [vmem:[#allocation9 + $0x490] sm:$0xff]
    %v929 = vld [vmem:[#allocation9 + $0x498] sm:$0xff]
    %v930 = vld [vmem:[#allocation9 + $0x4a0] sm:$0xff]
    %v931 = vld [vmem:[#allocation9 + $0x4a8] sm:$0xff]
    %v932 = vld [vmem:[#allocation9 + $0x4b0] sm:$0xff]
    %v933 = vld [vmem:[#allocation9 + $0x4b8] sm:$0xff]
    %v934 = vld [vmem:[#allocation9 + $0x4c0] sm:$0xff]
    %v935 = vld [vmem:[#allocation9 + $0x4c8] sm:$0xff]
    %v936 = vld [vmem:[#allocation9 + $0x4d0] sm:$0xff]
    %v937 = vld [vmem:[#allocation9 + $0x4d8] sm:$0xff]
    %v938 = vld [vmem:[#allocation9 + $0x4e0] sm:$0xff]
    %v939 = vld [vmem:[#allocation9 + $0x4e8] sm:$0xff]
    %v940 = vld [vmem:[#allocation9 + $0x4f0] sm:$0xff]
    %v941 = vld [vmem:[#allocation9 + $0x4f8] sm:$0xff]
    %v942 = vld [vmem:[#allocation9 + $0x500] sm:$0xff]
    %v943 = vld [vmem:[#allocation9 + $0x508] sm:$0xff]
    %v944 = vld [vmem:[#allocation9 + $0x510] sm:$0xff]
    %v945 = vld [vmem:[#allocation9 + $0x518] sm:$0xff]
    %v946 = vld [vmem:[#allocation9 + $0x520] sm:$0xff]
    %v947 = vld [vmem:[#allocation9 + $0x528] sm:$0xff]
    %v948 = vld [vmem:[#allocation9 + $0x530] sm:$0xff]
    %v949 = vld [vmem:[#allocation9 + $0x538] sm:$0xff]
    %v950 = vld [vmem:[#allocation9 + $0x540] sm:$0xff]
    %v951 = vld [vmem:[#allocation9 + $0x548] sm:$0xff]
    %v952 = vld [vmem:[#allocation9 + $0x550] sm:$0xff]
    %v953 = vld [vmem:[#allocation9 + $0x558] sm:$0xff]
    %v954 = vld [vmem:[#allocation9 + $0x560] sm:$0xff]
    %v955 = vld [vmem:[#allocation9 + $0x568] sm:$0xff]
    %v956 = vld [vmem:[#allocation9 + $0x570] sm:$0xff]
    %v957 = vld [vmem:[#allocation9 + $0x578] sm:$0xff]
    %v958 = vld [vmem:[#allocation9 + $0x580] sm:$0xff]
    %v959 = vld [vmem:[#allocation9 + $0x588] sm:$0xff]
    %v960 = vld [vmem:[#allocation9 + $0x590] sm:$0xff]
    %v961 = vld [vmem:[#allocation9 + $0x598] sm:$0xff]
    %v962 = vld [vmem:[#allocation9 + $0x5a0] sm:$0xff]
    %v963 = vld [vmem:[#allocation9 + $0x5a8] sm:$0xff]
    %v964 = vld [vmem:[#allocation9 + $0x5b0] sm:$0xff]
    %v965 = vld [vmem:[#allocation9 + $0x5b8] sm:$0xff]
    %v966 = vld [vmem:[#allocation9 + $0x5c0] sm:$0xff]
    %v967 = vld [vmem:[#allocation9 + $0x5c8] sm:$0xff]
    %v968 = vld [vmem:[#allocation9 + $0x5d0] sm:$0xff]
    %v969 = vld [vmem:[#allocation9 + $0x5d8] sm:$0xff]
    %v970 = vld [vmem:[#allocation9 + $0x5e0] sm:$0xff]
    %v971 = vld [vmem:[#allocation9 + $0x5e8] sm:$0xff]
    %v972 = vld [vmem:[#allocation9 + $0x5f0] sm:$0xff]
    %v973 = vld [vmem:[#allocation9 + $0x5f8] sm:$0xff]
    %v974 = vld [vmem:[#allocation9 + $0x600] sm:$0xff]
    %v975 = vld [vmem:[#allocation9 + $0x608] sm:$0xff]
    %v976 = vld [vmem:[#allocation9 + $0x610] sm:$0xff]
    %v977 = vld [vmem:[#allocation9 + $0x618] sm:$0xff]
    %v978 = vld [vmem:[#allocation9 + $0x620] sm:$0xff]
    %v979 = vld [vmem:[#allocation9 + $0x628] sm:$0xff]
    %v980 = vld [vmem:[#allocation9 + $0x630] sm:$0xff]
    %v981 = vld [vmem:[#allocation9 + $0x638] sm:$0xff]
    %v982 = vld [vmem:[#allocation9 + $0x640] sm:$0xff]
    %v983 = vld [vmem:[#allocation9 + $0x648] sm:$0xff]
    %v984 = vld [vmem:[#allocation9 + $0x650] sm:$0xff]
    %v985 = vld [vmem:[#allocation9 + $0x658] sm:$0xff]
    %v986 = vld [vmem:[#allocation9 + $0x660] sm:$0xff]
    %v987 = vld [vmem:[#allocation9 + $0x668] sm:$0xff]
    %v988 = vld [vmem:[#allocation9 + $0x670] sm:$0xff]
    %v989 = vld [vmem:[#allocation9 + $0x678] sm:$0xff]
    %v990 = vld [vmem:[#allocation9 + $0x680] sm:$0xff]
    %v991 = vld [vmem:[#allocation9 + $0x688] sm:$0xff]
    %v992 = vld [vmem:[#allocation9 + $0x690] sm:$0xff]
    %v993 = vld [vmem:[#allocation9 + $0x698] sm:$0xff]
    %v994 = vld [vmem:[#allocation9 + $0x6a0] sm:$0xff]
    %v995 = vld [vmem:[#allocation9 + $0x6a8] sm:$0xff]
    %v996 = vld [vmem:[#allocation9 + $0x6b0] sm:$0xff]
    %v997 = vld [vmem:[#allocation9 + $0x6b8] sm:$0xff]
    %v998 = vld [vmem:[#allocation9 + $0x6c0] sm:$0xff]
    %v999 = vld [vmem:[#allocation9 + $0x6c8] sm:$0xff]
    %v1000 = vld [vmem:[#allocation9 + $0x6d0] sm:$0xff]
    %v1001 = vld [vmem:[#allocation9 + $0x6d8] sm:$0xff]
    %v1002 = vld [vmem:[#allocation9 + $0x6e0] sm:$0xff]
    %v1003 = vld [vmem:[#allocation9 + $0x6e8] sm:$0xff]
    %v1004 = vld [vmem:[#allocation9 + $0x6f0] sm:$0xff]
    %v1005 = vld [vmem:[#allocation9 + $0x6f8] sm:$0xff]
    %v1006 = vld [vmem:[#allocation9 + $0x700] sm:$0xff]
    %v1007 = vld [vmem:[#allocation9 + $0x708] sm:$0xff]
    %v1008 = vld [vmem:[#allocation9 + $0x710] sm:$0xff]
    %v1009 = vld [vmem:[#allocation9 + $0x718] sm:$0xff]
    %v1010 = vld [vmem:[#allocation9 + $0x720] sm:$0xff]
    %v1011 = vld [vmem:[#allocation9 + $0x728] sm:$0xff]
    %v1012 = vld [vmem:[#allocation9 + $0x730] sm:$0xff]
    %v1013 = vld [vmem:[#allocation9 + $0x738] sm:$0xff]
    %v1014 = vld [vmem:[#allocation9 + $0x740] sm:$0xff]
    %v1015 = vld [vmem:[#allocation9 + $0x748] sm:$0xff]
    %v1016 = vld [vmem:[#allocation9 + $0x750] sm:$0xff]
    %v1017 = vld [vmem:[#allocation9 + $0x758] sm:$0xff]
    %v1018 = vld [vmem:[#allocation9 + $0x760] sm:$0xff]
    %v1019 = vld [vmem:[#allocation9 + $0x768] sm:$0xff]
    %v1020 = vld [vmem:[#allocation9 + $0x770] sm:$0xff]
    %v1021 = vld [vmem:[#allocation9 + $0x778] sm:$0xff]
    %v1022 = vld [vmem:[#allocation9 + $0x780] sm:$0xff]
    %v1023 = vld [vmem:[#allocation9 + $0x788] sm:$0xff]
    %v1024 = vld [vmem:[#allocation9 + $0x790] sm:$0xff]
    %v1025 = vld [vmem:[#allocation9 + $0x798] sm:$0xff]
    %v1026 = vld [vmem:[#allocation9 + $0x7a0] sm:$0xff]
    %v1027 = vld [vmem:[#allocation9 + $0x7a8] sm:$0xff]
    %v1028 = vld [vmem:[#allocation9 + $0x7b0] sm:$0xff]
    %v1029 = vld [vmem:[#allocation9 + $0x7b8] sm:$0xff]
    %v1030 = vld [vmem:[#allocation9 + $0x7c0] sm:$0xff]
    %v1031 = vld [vmem:[#allocation9 + $0x7c8] sm:$0xff]
    %v1032 = vld [vmem:[#allocation9 + $0x7d0] sm:$0xff]
    %v1033 = vld [vmem:[#allocation9 + $0x7d8] sm:$0xff]
    %v1034 = vld [vmem:[#allocation9 + $0x7e0] sm:$0xff]
    %v1035 = vld [vmem:[#allocation9 + $0x7e8] sm:$0xff]
    %v1036 = vld [vmem:[#allocation9 + $0x7f0] sm:$0xff]
    %v1037 = vld [vmem:[#allocation9 + $0x7f8] sm:$0xff]
    %v1038 = vld [vmem:[#allocation10] sm:$0xff]
    %v1040 = vlaneseq
    %v1041 = vshrl.u32 %v1040, 7
    %v1042 = vsub.s32 0, %v1041
    %v1043 = vrot.slane %v1038, %v1042
    %v1044 = vlaneseq
    %v1045 = vshrl.u32 %v1044, 7
    %v1046 = vsub.s32 1, %v1045
    %v1047 = vrot.slane %v1038, %v1046
    %v1048 = vlaneseq
    %v1049 = vshrl.u32 %v1048, 7
    %v1050 = vsub.s32 2, %v1049
    %v1051 = vrot.slane %v1038, %v1050
    %v1052 = vlaneseq
    %v1053 = vshrl.u32 %v1052, 7
    %v1054 = vsub.s32 3, %v1053
    %v1055 = vrot.slane %v1038, %v1054
    %v1056 = vlaneseq
    %v1057 = vshrl.u32 %v1056, 7
    %v1058 = vsub.s32 4, %v1057
    %v1059 = vrot.slane %v1038, %v1058
    %v1060 = vlaneseq
    %v1061 = vshrl.u32 %v1060, 7
    %v1062 = vsub.s32 5, %v1061
    %v1063 = vrot.slane %v1038, %v1062
    %v1064 = vlaneseq
    %v1065 = vshrl.u32 %v1064, 7
    %v1066 = vsub.s32 6, %v1065
    %v1067 = vrot.slane %v1038, %v1066
    %v1068 = vlaneseq
    %v1069 = vshrl.u32 %v1068, 7
    %v1070 = vsub.s32 7, %v1069
    %v1071 = vrot.slane %v1038, %v1070
    %v1336 = vunpack.c.l.b16 %v782
    %v1337 = vunpack.c.h.b16 %v782
    %v1338 = vunpack.c.l.b16 %v783
    %v1339 = vunpack.c.h.b16 %v783
    %v1340 = vunpack.c.l.b16 %v784
    %v1341 = vunpack.c.h.b16 %v784
    %v1342 = vunpack.c.l.b16 %v785
    %v1343 = vunpack.c.h.b16 %v785
    %v1344 = vunpack.c.l.b16 %v786
    %v1345 = vunpack.c.h.b16 %v786
    %v1346 = vunpack.c.l.b16 %v787
    %v1347 = vunpack.c.h.b16 %v787
    %v1348 = vunpack.c.l.b16 %v788
    %v1349 = vunpack.c.h.b16 %v788
    %v1350 = vunpack.c.l.b16 %v789
    %v1351 = vunpack.c.h.b16 %v789
    %v1352 = vunpack.c.l.b16 %v790
    %v1353 = vunpack.c.h.b16 %v790
    %v1354 = vunpack.c.l.b16 %v791
    %v1355 = vunpack.c.h.b16 %v791
    %v1356 = vunpack.c.l.b16 %v792
    %v1357 = vunpack.c.h.b16 %v792
    %v1358 = vunpack.c.l.b16 %v793
    %v1359 = vunpack.c.h.b16 %v793
    %v1360 = vunpack.c.l.b16 %v794
    %v1361 = vunpack.c.h.b16 %v794
    %v1362 = vunpack.c.l.b16 %v795
    %v1363 = vunpack.c.h.b16 %v795
    %v1364 = vunpack.c.l.b16 %v796
    %v1365 = vunpack.c.h.b16 %v796
    %v1366 = vunpack.c.l.b16 %v797
    %v1367 = vunpack.c.h.b16 %v797
    %v1368 = vunpack.c.l.b16 %v798
    %v1369 = vunpack.c.h.b16 %v798
    %v1370 = vunpack.c.l.b16 %v799
    %v1371 = vunpack.c.h.b16 %v799
    %v1372 = vunpack.c.l.b16 %v800
    %v1373 = vunpack.c.h.b16 %v800
    %v1374 = vunpack.c.l.b16 %v801
    %v1375 = vunpack.c.h.b16 %v801
    %v1376 = vunpack.c.l.b16 %v802
    %v1377 = vunpack.c.h.b16 %v802
    %v1378 = vunpack.c.l.b16 %v803
    %v1379 = vunpack.c.h.b16 %v803
    %v1380 = vunpack.c.l.b16 %v804
    %v1381 = vunpack.c.h.b16 %v804
    %v1382 = vunpack.c.l.b16 %v805
    %v1383 = vunpack.c.h.b16 %v805
    %v1384 = vunpack.c.l.b16 %v806
    %v1385 = vunpack.c.h.b16 %v806
    %v1386 = vunpack.c.l.b16 %v807
    %v1387 = vunpack.c.h.b16 %v807
    %v1388 = vunpack.c.l.b16 %v808
    %v1389 = vunpack.c.h.b16 %v808
    %v1390 = vunpack.c.l.b16 %v809
    %v1391 = vunpack.c.h.b16 %v809
    %v1392 = vunpack.c.l.b16 %v810
    %v1393 = vunpack.c.h.b16 %v810
    %v1394 = vunpack.c.l.b16 %v811
    %v1395 = vunpack.c.h.b16 %v811
    %v1396 = vunpack.c.l.b16 %v812
    %v1397 = vunpack.c.h.b16 %v812
    %v1398 = vunpack.c.l.b16 %v813
    %v1399 = vunpack.c.h.b16 %v813
    %v1400 = vunpack.c.l.b16 %v814
    %v1401 = vunpack.c.h.b16 %v814
    %v1402 = vunpack.c.l.b16 %v815
    %v1403 = vunpack.c.h.b16 %v815
    %v1404 = vunpack.c.l.b16 %v816
    %v1405 = vunpack.c.h.b16 %v816
    %v1406 = vunpack.c.l.b16 %v817
    %v1407 = vunpack.c.h.b16 %v817
    %v1408 = vunpack.c.l.b16 %v818
    %v1409 = vunpack.c.h.b16 %v818
    %v1410 = vunpack.c.l.b16 %v819
    %v1411 = vunpack.c.h.b16 %v819
    %v1412 = vunpack.c.l.b16 %v820
    %v1413 = vunpack.c.h.b16 %v820
    %v1414 = vunpack.c.l.b16 %v821
    %v1415 = vunpack.c.h.b16 %v821
    %v1416 = vunpack.c.l.b16 %v822
    %v1417 = vunpack.c.h.b16 %v822
    %v1418 = vunpack.c.l.b16 %v823
    %v1419 = vunpack.c.h.b16 %v823
    %v1420 = vunpack.c.l.b16 %v824
    %v1421 = vunpack.c.h.b16 %v824
    %v1422 = vunpack.c.l.b16 %v825
    %v1423 = vunpack.c.h.b16 %v825
    %v1424 = vunpack.c.l.b16 %v826
    %v1425 = vunpack.c.h.b16 %v826
    %v1426 = vunpack.c.l.b16 %v827
    %v1427 = vunpack.c.h.b16 %v827
    %v1428 = vunpack.c.l.b16 %v828
    %v1429 = vunpack.c.h.b16 %v828
    %v1430 = vunpack.c.l.b16 %v829
    %v1431 = vunpack.c.h.b16 %v829
    %v1432 = vunpack.c.l.b16 %v830
    %v1433 = vunpack.c.h.b16 %v830
    %v1434 = vunpack.c.l.b16 %v831
    %v1435 = vunpack.c.h.b16 %v831
    %v1436 = vunpack.c.l.b16 %v832
    %v1437 = vunpack.c.h.b16 %v832
    %v1438 = vunpack.c.l.b16 %v833
    %v1439 = vunpack.c.h.b16 %v833
    %v1440 = vunpack.c.l.b16 %v834
    %v1441 = vunpack.c.h.b16 %v834
    %v1442 = vunpack.c.l.b16 %v835
    %v1443 = vunpack.c.h.b16 %v835
    %v1444 = vunpack.c.l.b16 %v836
    %v1445 = vunpack.c.h.b16 %v836
    %v1446 = vunpack.c.l.b16 %v837
    %v1447 = vunpack.c.h.b16 %v837
    %v1448 = vunpack.c.l.b16 %v838
    %v1449 = vunpack.c.h.b16 %v838
    %v1450 = vunpack.c.l.b16 %v839
    %v1451 = vunpack.c.h.b16 %v839
    %v1452 = vunpack.c.l.b16 %v840
    %v1453 = vunpack.c.h.b16 %v840
    %v1454 = vunpack.c.l.b16 %v841
    %v1455 = vunpack.c.h.b16 %v841
    %v1456 = vunpack.c.l.b16 %v842
    %v1457 = vunpack.c.h.b16 %v842
    %v1458 = vunpack.c.l.b16 %v843
    %v1459 = vunpack.c.h.b16 %v843
    %v1460 = vunpack.c.l.b16 %v844
    %v1461 = vunpack.c.h.b16 %v844
    %v1462 = vunpack.c.l.b16 %v845
    %v1463 = vunpack.c.h.b16 %v845
    %v1464 = vunpack.c.l.b16 %v846
    %v1465 = vunpack.c.h.b16 %v846
    %v1466 = vunpack.c.l.b16 %v847
    %v1467 = vunpack.c.h.b16 %v847
    %v1468 = vunpack.c.l.b16 %v848
    %v1469 = vunpack.c.h.b16 %v848
    %v1470 = vunpack.c.l.b16 %v849
    %v1471 = vunpack.c.h.b16 %v849
    %v1472 = vunpack.c.l.b16 %v850
    %v1473 = vunpack.c.h.b16 %v850
    %v1474 = vunpack.c.l.b16 %v851
    %v1475 = vunpack.c.h.b16 %v851
    %v1476 = vunpack.c.l.b16 %v852
    %v1477 = vunpack.c.h.b16 %v852
    %v1478 = vunpack.c.l.b16 %v853
    %v1479 = vunpack.c.h.b16 %v853
    %v1480 = vunpack.c.l.b16 %v854
    %v1481 = vunpack.c.h.b16 %v854
    %v1482 = vunpack.c.l.b16 %v855
    %v1483 = vunpack.c.h.b16 %v855
    %v1484 = vunpack.c.l.b16 %v856
    %v1485 = vunpack.c.h.b16 %v856
    %v1486 = vunpack.c.l.b16 %v857
    %v1487 = vunpack.c.h.b16 %v857
    %v1488 = vunpack.c.l.b16 %v858
    %v1489 = vunpack.c.h.b16 %v858
    %v1490 = vunpack.c.l.b16 %v859
    %v1491 = vunpack.c.h.b16 %v859
    %v1492 = vunpack.c.l.b16 %v860
    %v1493 = vunpack.c.h.b16 %v860
    %v1494 = vunpack.c.l.b16 %v861
    %v1495 = vunpack.c.h.b16 %v861
    %v1496 = vunpack.c.l.b16 %v862
    %v1497 = vunpack.c.h.b16 %v862
    %v1498 = vunpack.c.l.b16 %v863
    %v1499 = vunpack.c.h.b16 %v863
    %v1500 = vunpack.c.l.b16 %v864
    %v1501 = vunpack.c.h.b16 %v864
    %v1502 = vunpack.c.l.b16 %v865
    %v1503 = vunpack.c.h.b16 %v865
    %v1504 = vunpack.c.l.b16 %v866
    %v1505 = vunpack.c.h.b16 %v866
    %v1506 = vunpack.c.l.b16 %v867
    %v1507 = vunpack.c.h.b16 %v867
    %v1508 = vunpack.c.l.b16 %v868
    %v1509 = vunpack.c.h.b16 %v868
    %v1510 = vunpack.c.l.b16 %v869
    %v1511 = vunpack.c.h.b16 %v869
    %v1512 = vunpack.c.l.b16 %v870
    %v1513 = vunpack.c.h.b16 %v870
    %v1514 = vunpack.c.l.b16 %v871
    %v1515 = vunpack.c.h.b16 %v871
    %v1516 = vunpack.c.l.b16 %v872
    %v1517 = vunpack.c.h.b16 %v872
    %v1518 = vunpack.c.l.b16 %v873
    %v1519 = vunpack.c.h.b16 %v873
    %v1520 = vunpack.c.l.b16 %v874
    %v1521 = vunpack.c.h.b16 %v874
    %v1522 = vunpack.c.l.b16 %v875
    %v1523 = vunpack.c.h.b16 %v875
    %v1524 = vunpack.c.l.b16 %v876
    %v1525 = vunpack.c.h.b16 %v876
    %v1526 = vunpack.c.l.b16 %v877
    %v1527 = vunpack.c.h.b16 %v877
    %v1528 = vunpack.c.l.b16 %v878
    %v1529 = vunpack.c.h.b16 %v878
    %v1530 = vunpack.c.l.b16 %v879
    %v1531 = vunpack.c.h.b16 %v879
    %v1532 = vunpack.c.l.b16 %v880
    %v1533 = vunpack.c.h.b16 %v880
    %v1534 = vunpack.c.l.b16 %v881
    %v1535 = vunpack.c.h.b16 %v881
    %v1536 = vunpack.c.l.b16 %v882
    %v1537 = vunpack.c.h.b16 %v882
    %v1538 = vunpack.c.l.b16 %v883
    %v1539 = vunpack.c.h.b16 %v883
    %v1540 = vunpack.c.l.b16 %v884
    %v1541 = vunpack.c.h.b16 %v884
    %v1542 = vunpack.c.l.b16 %v885
    %v1543 = vunpack.c.h.b16 %v885
    %v1544 = vunpack.c.l.b16 %v886
    %v1545 = vunpack.c.h.b16 %v886
    %v1546 = vunpack.c.l.b16 %v887
    %v1547 = vunpack.c.h.b16 %v887
    %v1548 = vunpack.c.l.b16 %v888
    %v1549 = vunpack.c.h.b16 %v888
    %v1550 = vunpack.c.l.b16 %v889
    %v1551 = vunpack.c.h.b16 %v889
    %v1552 = vunpack.c.l.b16 %v890
    %v1553 = vunpack.c.h.b16 %v890
    %v1554 = vunpack.c.l.b16 %v891
    %v1555 = vunpack.c.h.b16 %v891
    %v1556 = vunpack.c.l.b16 %v892
    %v1557 = vunpack.c.h.b16 %v892
    %v1558 = vunpack.c.l.b16 %v893
    %v1559 = vunpack.c.h.b16 %v893
    %v1560 = vunpack.c.l.b16 %v894
    %v1561 = vunpack.c.h.b16 %v894
    %v1562 = vunpack.c.l.b16 %v895
    %v1563 = vunpack.c.h.b16 %v895
    %v1564 = vunpack.c.l.b16 %v896
    %v1565 = vunpack.c.h.b16 %v896
    %v1566 = vunpack.c.l.b16 %v897
    %v1567 = vunpack.c.h.b16 %v897
    %v1568 = vunpack.c.l.b16 %v898
    %v1569 = vunpack.c.h.b16 %v898
    %v1570 = vunpack.c.l.b16 %v899
    %v1571 = vunpack.c.h.b16 %v899
    %v1572 = vunpack.c.l.b16 %v900
    %v1573 = vunpack.c.h.b16 %v900
    %v1574 = vunpack.c.l.b16 %v901
    %v1575 = vunpack.c.h.b16 %v901
    %v1576 = vunpack.c.l.b16 %v902
    %v1577 = vunpack.c.h.b16 %v902
    %v1578 = vunpack.c.l.b16 %v903
    %v1579 = vunpack.c.h.b16 %v903
    %v1580 = vunpack.c.l.b16 %v904
    %v1581 = vunpack.c.h.b16 %v904
    %v1582 = vunpack.c.l.b16 %v905
    %v1583 = vunpack.c.h.b16 %v905
    %v1584 = vunpack.c.l.b16 %v906
    %v1585 = vunpack.c.h.b16 %v906
    %v1586 = vunpack.c.l.b16 %v907
    %v1587 = vunpack.c.h.b16 %v907
    %v1588 = vunpack.c.l.b16 %v908
    %v1589 = vunpack.c.h.b16 %v908
    %v1590 = vunpack.c.l.b16 %v909
    %v1591 = vunpack.c.h.b16 %v909
    %v1592 = vunpack.c.l.b16 %v910
    %v1593 = vunpack.c.h.b16 %v910
    %v1594 = vunpack.c.l.b16 %v911
    %v1595 = vunpack.c.h.b16 %v911
    %v1596 = vunpack.c.l.b16 %v912
    %v1597 = vunpack.c.h.b16 %v912
    %v1598 = vunpack.c.l.b16 %v913
    %v1599 = vunpack.c.h.b16 %v913
    %v1600 = vunpack.c.l.b16 %v914
    %v1601 = vunpack.c.h.b16 %v914
    %v1602 = vunpack.c.l.b16 %v915
    %v1603 = vunpack.c.h.b16 %v915
    %v1604 = vunpack.c.l.b16 %v916
    %v1605 = vunpack.c.h.b16 %v916
    %v1606 = vunpack.c.l.b16 %v917
    %v1607 = vunpack.c.h.b16 %v917
    %v1608 = vunpack.c.l.b16 %v918
    %v1609 = vunpack.c.h.b16 %v918
    %v1610 = vunpack.c.l.b16 %v919
    %v1611 = vunpack.c.h.b16 %v919
    %v1612 = vunpack.c.l.b16 %v920
    %v1613 = vunpack.c.h.b16 %v920
    %v1614 = vunpack.c.l.b16 %v921
    %v1615 = vunpack.c.h.b16 %v921
    %v1616 = vunpack.c.l.b16 %v922
    %v1617 = vunpack.c.h.b16 %v922
    %v1618 = vunpack.c.l.b16 %v923
    %v1619 = vunpack.c.h.b16 %v923
    %v1620 = vunpack.c.l.b16 %v924
    %v1621 = vunpack.c.h.b16 %v924
    %v1622 = vunpack.c.l.b16 %v925
    %v1623 = vunpack.c.h.b16 %v925
    %v1624 = vunpack.c.l.b16 %v926
    %v1625 = vunpack.c.h.b16 %v926
    %v1626 = vunpack.c.l.b16 %v927
    %v1627 = vunpack.c.h.b16 %v927
    %v1628 = vunpack.c.l.b16 %v928
    %v1629 = vunpack.c.h.b16 %v928
    %v1630 = vunpack.c.l.b16 %v929
    %v1631 = vunpack.c.h.b16 %v929
    %v1632 = vunpack.c.l.b16 %v930
    %v1633 = vunpack.c.h.b16 %v930
    %v1634 = vunpack.c.l.b16 %v931
    %v1635 = vunpack.c.h.b16 %v931
    %v1636 = vunpack.c.l.b16 %v932
    %v1637 = vunpack.c.h.b16 %v932
    %v1638 = vunpack.c.l.b16 %v933
    %v1639 = vunpack.c.h.b16 %v933
    %v1640 = vunpack.c.l.b16 %v934
    %v1641 = vunpack.c.h.b16 %v934
    %v1642 = vunpack.c.l.b16 %v935
    %v1643 = vunpack.c.h.b16 %v935
    %v1644 = vunpack.c.l.b16 %v936
    %v1645 = vunpack.c.h.b16 %v936
    %v1646 = vunpack.c.l.b16 %v937
    %v1647 = vunpack.c.h.b16 %v937
    %v1648 = vunpack.c.l.b16 %v938
    %v1649 = vunpack.c.h.b16 %v938
    %v1650 = vunpack.c.l.b16 %v939
    %v1651 = vunpack.c.h.b16 %v939
    %v1652 = vunpack.c.l.b16 %v940
    %v1653 = vunpack.c.h.b16 %v940
    %v1654 = vunpack.c.l.b16 %v941
    %v1655 = vunpack.c.h.b16 %v941
    %v1656 = vunpack.c.l.b16 %v942
    %v1657 = vunpack.c.h.b16 %v942
    %v1658 = vunpack.c.l.b16 %v943
    %v1659 = vunpack.c.h.b16 %v943
    %v1660 = vunpack.c.l.b16 %v944
    %v1661 = vunpack.c.h.b16 %v944
    %v1662 = vunpack.c.l.b16 %v945
    %v1663 = vunpack.c.h.b16 %v945
    %v1664 = vunpack.c.l.b16 %v946
    %v1665 = vunpack.c.h.b16 %v946
    %v1666 = vunpack.c.l.b16 %v947
    %v1667 = vunpack.c.h.b16 %v947
    %v1668 = vunpack.c.l.b16 %v948
    %v1669 = vunpack.c.h.b16 %v948
    %v1670 = vunpack.c.l.b16 %v949
    %v1671 = vunpack.c.h.b16 %v949
    %v1672 = vunpack.c.l.b16 %v950
    %v1673 = vunpack.c.h.b16 %v950
    %v1674 = vunpack.c.l.b16 %v951
    %v1675 = vunpack.c.h.b16 %v951
    %v1676 = vunpack.c.l.b16 %v952
    %v1677 = vunpack.c.h.b16 %v952
    %v1678 = vunpack.c.l.b16 %v953
    %v1679 = vunpack.c.h.b16 %v953
    %v1680 = vunpack.c.l.b16 %v954
    %v1681 = vunpack.c.h.b16 %v954
    %v1682 = vunpack.c.l.b16 %v955
    %v1683 = vunpack.c.h.b16 %v955
    %v1684 = vunpack.c.l.b16 %v956
    %v1685 = vunpack.c.h.b16 %v956
    %v1686 = vunpack.c.l.b16 %v957
    %v1687 = vunpack.c.h.b16 %v957
    %v1688 = vunpack.c.l.b16 %v958
    %v1689 = vunpack.c.h.b16 %v958
    %v1690 = vunpack.c.l.b16 %v959
    %v1691 = vunpack.c.h.b16 %v959
    %v1692 = vunpack.c.l.b16 %v960
    %v1693 = vunpack.c.h.b16 %v960
    %v1694 = vunpack.c.l.b16 %v961
    %v1695 = vunpack.c.h.b16 %v961
    %v1696 = vunpack.c.l.b16 %v962
    %v1697 = vunpack.c.h.b16 %v962
    %v1698 = vunpack.c.l.b16 %v963
    %v1699 = vunpack.c.h.b16 %v963
    %v1700 = vunpack.c.l.b16 %v964
    %v1701 = vunpack.c.h.b16 %v964
    %v1702 = vunpack.c.l.b16 %v965
    %v1703 = vunpack.c.h.b16 %v965
    %v1704 = vunpack.c.l.b16 %v966
    %v1705 = vunpack.c.h.b16 %v966
    %v1706 = vunpack.c.l.b16 %v967
    %v1707 = vunpack.c.h.b16 %v967
    %v1708 = vunpack.c.l.b16 %v968
    %v1709 = vunpack.c.h.b16 %v968
    %v1710 = vunpack.c.l.b16 %v969
    %v1711 = vunpack.c.h.b16 %v969
    %v1712 = vunpack.c.l.b16 %v970
    %v1713 = vunpack.c.h.b16 %v970
    %v1714 = vunpack.c.l.b16 %v971
    %v1715 = vunpack.c.h.b16 %v971
    %v1716 = vunpack.c.l.b16 %v972
    %v1717 = vunpack.c.h.b16 %v972
    %v1718 = vunpack.c.l.b16 %v973
    %v1719 = vunpack.c.h.b16 %v973
    %v1720 = vunpack.c.l.b16 %v974
    %v1721 = vunpack.c.h.b16 %v974
    %v1722 = vunpack.c.l.b16 %v975
    %v1723 = vunpack.c.h.b16 %v975
    %v1724 = vunpack.c.l.b16 %v976
    %v1725 = vunpack.c.h.b16 %v976
    %v1726 = vunpack.c.l.b16 %v977
    %v1727 = vunpack.c.h.b16 %v977
    %v1728 = vunpack.c.l.b16 %v978
    %v1729 = vunpack.c.h.b16 %v978
    %v1730 = vunpack.c.l.b16 %v979
    %v1731 = vunpack.c.h.b16 %v979
    %v1732 = vunpack.c.l.b16 %v980
    %v1733 = vunpack.c.h.b16 %v980
    %v1734 = vunpack.c.l.b16 %v981
    %v1735 = vunpack.c.h.b16 %v981
    %v1736 = vunpack.c.l.b16 %v982
    %v1737 = vunpack.c.h.b16 %v982
    %v1738 = vunpack.c.l.b16 %v983
    %v1739 = vunpack.c.h.b16 %v983
    %v1740 = vunpack.c.l.b16 %v984
    %v1741 = vunpack.c.h.b16 %v984
    %v1742 = vunpack.c.l.b16 %v985
    %v1743 = vunpack.c.h.b16 %v985
    %v1744 = vunpack.c.l.b16 %v986
    %v1745 = vunpack.c.h.b16 %v986
    %v1746 = vunpack.c.l.b16 %v987
    %v1747 = vunpack.c.h.b16 %v987
    %v1748 = vunpack.c.l.b16 %v988
    %v1749 = vunpack.c.h.b16 %v988
    %v1750 = vunpack.c.l.b16 %v989
    %v1751 = vunpack.c.h.b16 %v989
    %v1752 = vunpack.c.l.b16 %v990
    %v1753 = vunpack.c.h.b16 %v990
    %v1754 = vunpack.c.l.b16 %v991
    %v1755 = vunpack.c.h.b16 %v991
    %v1756 = vunpack.c.l.b16 %v992
    %v1757 = vunpack.c.h.b16 %v992
    %v1758 = vunpack.c.l.b16 %v993
    %v1759 = vunpack.c.h.b16 %v993
    %v1760 = vunpack.c.l.b16 %v994
    %v1761 = vunpack.c.h.b16 %v994
    %v1762 = vunpack.c.l.b16 %v995
    %v1763 = vunpack.c.h.b16 %v995
    %v1764 = vunpack.c.l.b16 %v996
    %v1765 = vunpack.c.h.b16 %v996
    %v1766 = vunpack.c.l.b16 %v997
    %v1767 = vunpack.c.h.b16 %v997
    %v1768 = vunpack.c.l.b16 %v998
    %v1769 = vunpack.c.h.b16 %v998
    %v1770 = vunpack.c.l.b16 %v999
    %v1771 = vunpack.c.h.b16 %v999
    %v1772 = vunpack.c.l.b16 %v1000
    %v1773 = vunpack.c.h.b16 %v1000
    %v1774 = vunpack.c.l.b16 %v1001
    %v1775 = vunpack.c.h.b16 %v1001
    %v1776 = vunpack.c.l.b16 %v1002
    %v1777 = vunpack.c.h.b16 %v1002
    %v1778 = vunpack.c.l.b16 %v1003
    %v1779 = vunpack.c.h.b16 %v1003
    %v1780 = vunpack.c.l.b16 %v1004
    %v1781 = vunpack.c.h.b16 %v1004
    %v1782 = vunpack.c.l.b16 %v1005
    %v1783 = vunpack.c.h.b16 %v1005
    %v1784 = vunpack.c.l.b16 %v1006
    %v1785 = vunpack.c.h.b16 %v1006
    %v1786 = vunpack.c.l.b16 %v1007
    %v1787 = vunpack.c.h.b16 %v1007
    %v1788 = vunpack.c.l.b16 %v1008
    %v1789 = vunpack.c.h.b16 %v1008
    %v1790 = vunpack.c.l.b16 %v1009
    %v1791 = vunpack.c.h.b16 %v1009
    %v1792 = vunpack.c.l.b16 %v1010
    %v1793 = vunpack.c.h.b16 %v1010
    %v1794 = vunpack.c.l.b16 %v1011
    %v1795 = vunpack.c.h.b16 %v1011
    %v1796 = vunpack.c.l.b16 %v1012
    %v1797 = vunpack.c.h.b16 %v1012
    %v1798 = vunpack.c.l.b16 %v1013
    %v1799 = vunpack.c.h.b16 %v1013
    %v1800 = vunpack.c.l.b16 %v1014
    %v1801 = vunpack.c.h.b16 %v1014
    %v1802 = vunpack.c.l.b16 %v1015
    %v1803 = vunpack.c.h.b16 %v1015
    %v1804 = vunpack.c.l.b16 %v1016
    %v1805 = vunpack.c.h.b16 %v1016
    %v1806 = vunpack.c.l.b16 %v1017
    %v1807 = vunpack.c.h.b16 %v1017
    %v1808 = vunpack.c.l.b16 %v1018
    %v1809 = vunpack.c.h.b16 %v1018
    %v1810 = vunpack.c.l.b16 %v1019
    %v1811 = vunpack.c.h.b16 %v1019
    %v1812 = vunpack.c.l.b16 %v1020
    %v1813 = vunpack.c.h.b16 %v1020
    %v1814 = vunpack.c.l.b16 %v1021
    %v1815 = vunpack.c.h.b16 %v1021
    %v1816 = vunpack.c.l.b16 %v1022
    %v1817 = vunpack.c.h.b16 %v1022
    %v1818 = vunpack.c.l.b16 %v1023
    %v1819 = vunpack.c.h.b16 %v1023
    %v1820 = vunpack.c.l.b16 %v1024
    %v1821 = vunpack.c.h.b16 %v1024
    %v1822 = vunpack.c.l.b16 %v1025
    %v1823 = vunpack.c.h.b16 %v1025
    %v1824 = vunpack.c.l.b16 %v1026
    %v1825 = vunpack.c.h.b16 %v1026
    %v1826 = vunpack.c.l.b16 %v1027
    %v1827 = vunpack.c.h.b16 %v1027
    %v1828 = vunpack.c.l.b16 %v1028
    %v1829 = vunpack.c.h.b16 %v1028
    %v1830 = vunpack.c.l.b16 %v1029
    %v1831 = vunpack.c.h.b16 %v1029
    %v1832 = vunpack.c.l.b16 %v1030
    %v1833 = vunpack.c.h.b16 %v1030
    %v1834 = vunpack.c.l.b16 %v1031
    %v1835 = vunpack.c.h.b16 %v1031
    %v1836 = vunpack.c.l.b16 %v1032
    %v1837 = vunpack.c.h.b16 %v1032
    %v1838 = vunpack.c.l.b16 %v1033
    %v1839 = vunpack.c.h.b16 %v1033
    %v1840 = vunpack.c.l.b16 %v1034
    %v1841 = vunpack.c.h.b16 %v1034
    %v1842 = vunpack.c.l.b16 %v1035
    %v1843 = vunpack.c.h.b16 %v1035
    %v1844 = vunpack.c.l.b16 %v1036
    %v1845 = vunpack.c.h.b16 %v1036
    %v1846 = vunpack.c.l.b16 %v1037
    %v1847 = vunpack.c.h.b16 %v1037
    %v1848 = vpack.c.b16 %v1344, %v1336
    %v1849 = vpack.c.b16 %v1345, %v1337
    %v1850 = vpack.c.b16 %v1346, %v1338
    %v1851 = vpack.c.b16 %v1347, %v1339
    %v1852 = vpack.c.b16 %v1348, %v1340
    %v1853 = vpack.c.b16 %v1349, %v1341
    %v1854 = vpack.c.b16 %v1350, %v1342
    %v1855 = vpack.c.b16 %v1351, %v1343
    %v1856 = vpack.c.b16 %v1360, %v1352
    %v1857 = vpack.c.b16 %v1361, %v1353
    %v1858 = vpack.c.b16 %v1362, %v1354
    %v1859 = vpack.c.b16 %v1363, %v1355
    %v1860 = vpack.c.b16 %v1364, %v1356
    %v1861 = vpack.c.b16 %v1365, %v1357
    %v1862 = vpack.c.b16 %v1366, %v1358
    %v1863 = vpack.c.b16 %v1367, %v1359
    %v1864 = vpack.c.b16 %v1376, %v1368
    %v1865 = vpack.c.b16 %v1377, %v1369
    %v1866 = vpack.c.b16 %v1378, %v1370
    %v1867 = vpack.c.b16 %v1379, %v1371
    %v1868 = vpack.c.b16 %v1380, %v1372
    %v1869 = vpack.c.b16 %v1381, %v1373
    %v1870 = vpack.c.b16 %v1382, %v1374
    %v1871 = vpack.c.b16 %v1383, %v1375
    %v1872 = vpack.c.b16 %v1392, %v1384
    %v1873 = vpack.c.b16 %v1393, %v1385
    %v1874 = vpack.c.b16 %v1394, %v1386
    %v1875 = vpack.c.b16 %v1395, %v1387
    %v1876 = vpack.c.b16 %v1396, %v1388
    %v1877 = vpack.c.b16 %v1397, %v1389
    %v1878 = vpack.c.b16 %v1398, %v1390
    %v1879 = vpack.c.b16 %v1399, %v1391
    %v1880 = vpack.c.b16 %v1408, %v1400
    %v1881 = vpack.c.b16 %v1409, %v1401
    %v1882 = vpack.c.b16 %v1410, %v1402
    %v1883 = vpack.c.b16 %v1411, %v1403
    %v1884 = vpack.c.b16 %v1412, %v1404
    %v1885 = vpack.c.b16 %v1413, %v1405
    %v1886 = vpack.c.b16 %v1414, %v1406
    %v1887 = vpack.c.b16 %v1415, %v1407
    %v1888 = vpack.c.b16 %v1424, %v1416
    %v1889 = vpack.c.b16 %v1425, %v1417
    %v1890 = vpack.c.b16 %v1426, %v1418
    %v1891 = vpack.c.b16 %v1427, %v1419
    %v1892 = vpack.c.b16 %v1428, %v1420
    %v1893 = vpack.c.b16 %v1429, %v1421
    %v1894 = vpack.c.b16 %v1430, %v1422
    %v1895 = vpack.c.b16 %v1431, %v1423
    %v1896 = vpack.c.b16 %v1440, %v1432
    %v1897 = vpack.c.b16 %v1441, %v1433
    %v1898 = vpack.c.b16 %v1442, %v1434
    %v1899 = vpack.c.b16 %v1443, %v1435
    %v1900 = vpack.c.b16 %v1444, %v1436
    %v1901 = vpack.c.b16 %v1445, %v1437
    %v1902 = vpack.c.b16 %v1446, %v1438
    %v1903 = vpack.c.b16 %v1447, %v1439
    %v1904 = vpack.c.b16 %v1456, %v1448
    %v1905 = vpack.c.b16 %v1457, %v1449
    %v1906 = vpack.c.b16 %v1458, %v1450
    %v1907 = vpack.c.b16 %v1459, %v1451
    %v1908 = vpack.c.b16 %v1460, %v1452
    %v1909 = vpack.c.b16 %v1461, %v1453
    %v1910 = vpack.c.b16 %v1462, %v1454
    %v1911 = vpack.c.b16 %v1463, %v1455
    %v1912 = vpack.c.b16 %v1472, %v1464
    %v1913 = vpack.c.b16 %v1473, %v1465
    %v1914 = vpack.c.b16 %v1474, %v1466
    %v1915 = vpack.c.b16 %v1475, %v1467
    %v1916 = vpack.c.b16 %v1476, %v1468
    %v1917 = vpack.c.b16 %v1477, %v1469
    %v1918 = vpack.c.b16 %v1478, %v1470
    %v1919 = vpack.c.b16 %v1479, %v1471
    %v1920 = vpack.c.b16 %v1488, %v1480
    %v1921 = vpack.c.b16 %v1489, %v1481
    %v1922 = vpack.c.b16 %v1490, %v1482
    %v1923 = vpack.c.b16 %v1491, %v1483
    %v1924 = vpack.c.b16 %v1492, %v1484
    %v1925 = vpack.c.b16 %v1493, %v1485
    %v1926 = vpack.c.b16 %v1494, %v1486
    %v1927 = vpack.c.b16 %v1495, %v1487
    %v1928 = vpack.c.b16 %v1504, %v1496
    %v1929 = vpack.c.b16 %v1505, %v1497
    %v1930 = vpack.c.b16 %v1506, %v1498
    %v1931 = vpack.c.b16 %v1507, %v1499
    %v1932 = vpack.c.b16 %v1508, %v1500
    %v1933 = vpack.c.b16 %v1509, %v1501
    %v1934 = vpack.c.b16 %v1510, %v1502
    %v1935 = vpack.c.b16 %v1511, %v1503
    %v1936 = vpack.c.b16 %v1520, %v1512
    %v1937 = vpack.c.b16 %v1521, %v1513
    %v1938 = vpack.c.b16 %v1522, %v1514
    %v1939 = vpack.c.b16 %v1523, %v1515
    %v1940 = vpack.c.b16 %v1524, %v1516
    %v1941 = vpack.c.b16 %v1525, %v1517
    %v1942 = vpack.c.b16 %v1526, %v1518
    %v1943 = vpack.c.b16 %v1527, %v1519
    %v1944 = vpack.c.b16 %v1536, %v1528
    %v1945 = vpack.c.b16 %v1537, %v1529
    %v1946 = vpack.c.b16 %v1538, %v1530
    %v1947 = vpack.c.b16 %v1539, %v1531
    %v1948 = vpack.c.b16 %v1540, %v1532
    %v1949 = vpack.c.b16 %v1541, %v1533
    %v1950 = vpack.c.b16 %v1542, %v1534
    %v1951 = vpack.c.b16 %v1543, %v1535
    %v1952 = vpack.c.b16 %v1552, %v1544
    %v1953 = vpack.c.b16 %v1553, %v1545
    %v1954 = vpack.c.b16 %v1554, %v1546
    %v1955 = vpack.c.b16 %v1555, %v1547
    %v1956 = vpack.c.b16 %v1556, %v1548
    %v1957 = vpack.c.b16 %v1557, %v1549
    %v1958 = vpack.c.b16 %v1558, %v1550
    %v1959 = vpack.c.b16 %v1559, %v1551
    %v1960 = vpack.c.b16 %v1568, %v1560
    %v1961 = vpack.c.b16 %v1569, %v1561
    %v1962 = vpack.c.b16 %v1570, %v1562
    %v1963 = vpack.c.b16 %v1571, %v1563
    %v1964 = vpack.c.b16 %v1572, %v1564
    %v1965 = vpack.c.b16 %v1573, %v1565
    %v1966 = vpack.c.b16 %v1574, %v1566
    %v1967 = vpack.c.b16 %v1575, %v1567
    %v1968 = vpack.c.b16 %v1584, %v1576
    %v1969 = vpack.c.b16 %v1585, %v1577
    %v1970 = vpack.c.b16 %v1586, %v1578
    %v1971 = vpack.c.b16 %v1587, %v1579
    %v1972 = vpack.c.b16 %v1588, %v1580
    %v1973 = vpack.c.b16 %v1589, %v1581
    %v1974 = vpack.c.b16 %v1590, %v1582
    %v1975 = vpack.c.b16 %v1591, %v1583
    %v1976 = vpack.c.b16 %v1600, %v1592
    %v1977 = vpack.c.b16 %v1601, %v1593
    %v1978 = vpack.c.b16 %v1602, %v1594
    %v1979 = vpack.c.b16 %v1603, %v1595
    %v1980 = vpack.c.b16 %v1604, %v1596
    %v1981 = vpack.c.b16 %v1605, %v1597
    %v1982 = vpack.c.b16 %v1606, %v1598
    %v1983 = vpack.c.b16 %v1607, %v1599
    %v1984 = vpack.c.b16 %v1616, %v1608
    %v1985 = vpack.c.b16 %v1617, %v1609
    %v1986 = vpack.c.b16 %v1618, %v1610
    %v1987 = vpack.c.b16 %v1619, %v1611
    %v1988 = vpack.c.b16 %v1620, %v1612
    %v1989 = vpack.c.b16 %v1621, %v1613
    %v1990 = vpack.c.b16 %v1622, %v1614
    %v1991 = vpack.c.b16 %v1623, %v1615
    %v1992 = vpack.c.b16 %v1632, %v1624
    %v1993 = vpack.c.b16 %v1633, %v1625
    %v1994 = vpack.c.b16 %v1634, %v1626
    %v1995 = vpack.c.b16 %v1635, %v1627
    %v1996 = vpack.c.b16 %v1636, %v1628
    %v1997 = vpack.c.b16 %v1637, %v1629
    %v1998 = vpack.c.b16 %v1638, %v1630
    %v1999 = vpack.c.b16 %v1639, %v1631
    %v2000 = vpack.c.b16 %v1648, %v1640
    %v2001 = vpack.c.b16 %v1649, %v1641
    %v2002 = vpack.c.b16 %v1650, %v1642
    %v2003 = vpack.c.b16 %v1651, %v1643
    %v2004 = vpack.c.b16 %v1652, %v1644
    %v2005 = vpack.c.b16 %v1653, %v1645
    %v2006 = vpack.c.b16 %v1654, %v1646
    %v2007 = vpack.c.b16 %v1655, %v1647
    %v2008 = vpack.c.b16 %v1664, %v1656
    %v2009 = vpack.c.b16 %v1665, %v1657
    %v2010 = vpack.c.b16 %v1666, %v1658
    %v2011 = vpack.c.b16 %v1667, %v1659
    %v2012 = vpack.c.b16 %v1668, %v1660
    %v2013 = vpack.c.b16 %v1669, %v1661
    %v2014 = vpack.c.b16 %v1670, %v1662
    %v2015 = vpack.c.b16 %v1671, %v1663
    %v2016 = vpack.c.b16 %v1680, %v1672
    %v2017 = vpack.c.b16 %v1681, %v1673
    %v2018 = vpack.c.b16 %v1682, %v1674
    %v2019 = vpack.c.b16 %v1683, %v1675
    %v2020 = vpack.c.b16 %v1684, %v1676
    %v2021 = vpack.c.b16 %v1685, %v1677
    %v2022 = vpack.c.b16 %v1686, %v1678
    %v2023 = vpack.c.b16 %v1687, %v1679
    %v2024 = vpack.c.b16 %v1696, %v1688
    %v2025 = vpack.c.b16 %v1697, %v1689
    %v2026 = vpack.c.b16 %v1698, %v1690
    %v2027 = vpack.c.b16 %v1699, %v1691
    %v2028 = vpack.c.b16 %v1700, %v1692
    %v2029 = vpack.c.b16 %v1701, %v1693
    %v2030 = vpack.c.b16 %v1702, %v1694
    %v2031 = vpack.c.b16 %v1703, %v1695
    %v2032 = vpack.c.b16 %v1712, %v1704
    %v2033 = vpack.c.b16 %v1713, %v1705
    %v2034 = vpack.c.b16 %v1714, %v1706
    %v2035 = vpack.c.b16 %v1715, %v1707
    %v2036 = vpack.c.b16 %v1716, %v1708
    %v2037 = vpack.c.b16 %v1717, %v1709
    %v2038 = vpack.c.b16 %v1718, %v1710
    %v2039 = vpack.c.b16 %v1719, %v1711
    %v2040 = vpack.c.b16 %v1728, %v1720
    %v2041 = vpack.c.b16 %v1729, %v1721
    %v2042 = vpack.c.b16 %v1730, %v1722
    %v2043 = vpack.c.b16 %v1731, %v1723
    %v2044 = vpack.c.b16 %v1732, %v1724
    %v2045 = vpack.c.b16 %v1733, %v1725
    %v2046 = vpack.c.b16 %v1734, %v1726
    %v2047 = vpack.c.b16 %v1735, %v1727
    %v2048 = vpack.c.b16 %v1744, %v1736
    %v2049 = vpack.c.b16 %v1745, %v1737
    %v2050 = vpack.c.b16 %v1746, %v1738
    %v2051 = vpack.c.b16 %v1747, %v1739
    %v2052 = vpack.c.b16 %v1748, %v1740
    %v2053 = vpack.c.b16 %v1749, %v1741
    %v2054 = vpack.c.b16 %v1750, %v1742
    %v2055 = vpack.c.b16 %v1751, %v1743
    %v2056 = vpack.c.b16 %v1760, %v1752
    %v2057 = vpack.c.b16 %v1761, %v1753
    %v2058 = vpack.c.b16 %v1762, %v1754
    %v2059 = vpack.c.b16 %v1763, %v1755
    %v2060 = vpack.c.b16 %v1764, %v1756
    %v2061 = vpack.c.b16 %v1765, %v1757
    %v2062 = vpack.c.b16 %v1766, %v1758
    %v2063 = vpack.c.b16 %v1767, %v1759
    %v2064 = vpack.c.b16 %v1776, %v1768
    %v2065 = vpack.c.b16 %v1777, %v1769
    %v2066 = vpack.c.b16 %v1778, %v1770
    %v2067 = vpack.c.b16 %v1779, %v1771
    %v2068 = vpack.c.b16 %v1780, %v1772
    %v2069 = vpack.c.b16 %v1781, %v1773
    %v2070 = vpack.c.b16 %v1782, %v1774
    %v2071 = vpack.c.b16 %v1783, %v1775
    %v2072 = vpack.c.b16 %v1792, %v1784
    %v2073 = vpack.c.b16 %v1793, %v1785
    %v2074 = vpack.c.b16 %v1794, %v1786
    %v2075 = vpack.c.b16 %v1795, %v1787
    %v2076 = vpack.c.b16 %v1796, %v1788
    %v2077 = vpack.c.b16 %v1797, %v1789
    %v2078 = vpack.c.b16 %v1798, %v1790
    %v2079 = vpack.c.b16 %v1799, %v1791
    %v2080 = vpack.c.b16 %v1808, %v1800
    %v2081 = vpack.c.b16 %v1809, %v1801
    %v2082 = vpack.c.b16 %v1810, %v1802
    %v2083 = vpack.c.b16 %v1811, %v1803
    %v2084 = vpack.c.b16 %v1812, %v1804
    %v2085 = vpack.c.b16 %v1813, %v1805
    %v2086 = vpack.c.b16 %v1814, %v1806
    %v2087 = vpack.c.b16 %v1815, %v1807
    %v2088 = vpack.c.b16 %v1824, %v1816
    %v2089 = vpack.c.b16 %v1825, %v1817
    %v2090 = vpack.c.b16 %v1826, %v1818
    %v2091 = vpack.c.b16 %v1827, %v1819
    %v2092 = vpack.c.b16 %v1828, %v1820
    %v2093 = vpack.c.b16 %v1829, %v1821
    %v2094 = vpack.c.b16 %v1830, %v1822
    %v2095 = vpack.c.b16 %v1831, %v1823
    %v2096 = vpack.c.b16 %v1840, %v1832
    %v2097 = vpack.c.b16 %v1841, %v1833
    %v2098 = vpack.c.b16 %v1842, %v1834
    %v2099 = vpack.c.b16 %v1843, %v1835
    %v2100 = vpack.c.b16 %v1844, %v1836
    %v2101 = vpack.c.b16 %v1845, %v1837
    %v2102 = vpack.c.b16 %v1846, %v1838
    %v2103 = vpack.c.b16 %v1847, %v1839
    %2360 = vmatprep.subr.bf16.mxu0 %v1905
    %2361 = vmatpush1.bf16.msra.mxu0 %v1904
    %2362 = vmatprep.subr.bf16.mxu0 %v1897
    %2363 = vmatpush1.bf16.msra.mxu0 %v1896
    %2364 = vmatprep.subr.bf16.mxu0 %v1889
    %2365 = vmatpush1.bf16.msra.mxu0 %v1888
    %2366 = vmatprep.subr.bf16.mxu0 %v1881
    %2367 = vmatpush1.bf16.msra.mxu0 %v1880
    %2368 = vmatprep.subr.bf16.mxu0 %v1873
    %2369 = vmatpush1.bf16.msra.mxu0 %v1872
    %2370 = vmatprep.subr.bf16.mxu0 %v1865
    %2371 = vmatpush1.bf16.msra.mxu0 %v1864
    %2372 = vmatprep.subr.bf16.mxu0 %v1857
    %2373 = vmatpush1.bf16.msra.mxu0 %v1856
    %2374 = vmatprep.subr.bf16.mxu0 %v1849
    %2375 = vmatpush1.bf16.msra.mxu0 %v1848
    %2376 = vmatprep.subr.bf16.mxu0 %v1969
    %2377 = vmatpush2.bf16.msra.mxu0 %v1968
    %2378 = vmatprep.subr.bf16.mxu0 %v1961
    %2379 = vmatpush2.bf16.msra.mxu0 %v1960
    %2380 = vmatprep.subr.bf16.mxu0 %v1953
    %2381 = vmatpush2.bf16.msra.mxu0 %v1952
    %2382 = vmatprep.subr.bf16.mxu0 %v1945
    %2383 = vmatpush2.bf16.msra.mxu0 %v1944
    %2384 = vmatprep.subr.bf16.mxu0 %v1937
    %2385 = vmatpush2.bf16.msra.mxu0 %v1936
    %2386 = vmatprep.subr.bf16.mxu0 %v1929
    %2387 = vmatpush2.bf16.msra.mxu0 %v1928
    %2388 = vmatprep.subr.bf16.mxu0 %v1921
    %2389 = vmatpush2.bf16.msra.mxu0 %v1920
    %2390 = vmatprep.subr.bf16.mxu0 %v1913
    %2391 = vmatpush2.bf16.msra.mxu0 %v1912
    %2392 = vmatprep.mubr.bf16.mxu0 %v779
    %2393 = vmatmul.mubr.bf16.gmra.mxu0 %v778
    %v2394 = vpop.f32.mrf.mxu0
    %v2395 = vadd.f32 %v1043, %v2394
    %v2396 = vpop.f32.mrf.mxu0
    %v2397 = vadd.f32 %v1047, %v2396
    %v2398 = vpop.f32.mrf.mxu0
    %v2399 = vadd.f32 %v1043, %v2398
    %v2400 = vpop.f32.mrf.mxu0
    %v2401 = vadd.f32 %v1047, %v2400
    %2402 = vdwg.mxu0
    %2403 = vmatprep.subr.bf16.mxu0 %v2033
    %2404 = vmatpush1.bf16.msra.mxu0 %v2032
    %2405 = vmatprep.subr.bf16.mxu0 %v2025
    %2406 = vmatpush1.bf16.msra.mxu0 %v2024
    %2407 = vmatprep.subr.bf16.mxu0 %v2017
    %2408 = vmatpush1.bf16.msra.mxu0 %v2016
    %2409 = vmatprep.subr.bf16.mxu0 %v2009
    %2410 = vmatpush1.bf16.msra.mxu0 %v2008
    %2411 = vmatprep.subr.bf16.mxu0 %v2001
    %2412 = vmatpush1.bf16.msra.mxu0 %v2000
    %2413 = vmatprep.subr.bf16.mxu0 %v1993
    %2414 = vmatpush1.bf16.msra.mxu0 %v1992
    %2415 = vmatprep.subr.bf16.mxu0 %v1985
    %2416 = vmatpush1.bf16.msra.mxu0 %v1984
    %2417 = vmatprep.subr.bf16.mxu0 %v1977
    %2418 = vmatpush1.bf16.msra.mxu0 %v1976
    %2419 = vmatprep.subr.bf16.mxu0 %v2097
    %2420 = vmatpush2.bf16.msra.mxu0 %v2096
    %2421 = vmatprep.subr.bf16.mxu0 %v2089
    %2422 = vmatpush2.bf16.msra.mxu0 %v2088
    %2423 = vmatprep.subr.bf16.mxu0 %v2081
    %2424 = vmatpush2.bf16.msra.mxu0 %v2080
    %2425 = vmatprep.subr.bf16.mxu0 %v2073
    %2426 = vmatpush2.bf16.msra.mxu0 %v2072
    %2427 = vmatprep.subr.bf16.mxu0 %v2065
    %2428 = vmatpush2.bf16.msra.mxu0 %v2064
    %2429 = vmatprep.subr.bf16.mxu0 %v2057
    %2430 = vmatpush2.bf16.msra.mxu0 %v2056
    %2431 = vmatprep.subr.bf16.mxu0 %v2049
    %2432 = vmatpush2.bf16.msra.mxu0 %v2048
    %2433 = vmatprep.subr.bf16.mxu0 %v2041
    %2434 = vmatpush2.bf16.msra.mxu0 %v2040
    %2435 = vmatprep.mubr.bf16.mxu0 %v781
    %2436 = vmatmul.mubr.bf16.gmra.mxu0 %v780
    %v2437 = vpop.f32.mrf.mxu0
    %v2438 = vadd.f32 %v2395, %v2437
    %v2439 = vpop.f32.mrf.mxu0
    %v2440 = vadd.f32 %v2397, %v2439
    %v2441 = vpop.f32.mrf.mxu0
    %v2442 = vadd.f32 %v2399, %v2441
    %v2443 = vpop.f32.mrf.mxu0
    %v2444 = vadd.f32 %v2401, %v2443
    %2445 = vdwg.mxu0
    %2446 = vmatprep.subr.bf16.mxu0 %v1907
    %2447 = vmatpush1.bf16.msra.mxu0 %v1906
    %2448 = vmatprep.subr.bf16.mxu0 %v1899
    %2449 = vmatpush1.bf16.msra.mxu0 %v1898
    %2450 = vmatprep.subr.bf16.mxu0 %v1891
    %2451 = vmatpush1.bf16.msra.mxu0 %v1890
    %2452 = vmatprep.subr.bf16.mxu0 %v1883
    %2453 = vmatpush1.bf16.msra.mxu0 %v1882
    %2454 = vmatprep.subr.bf16.mxu0 %v1875
    %2455 = vmatpush1.bf16.msra.mxu0 %v1874
    %2456 = vmatprep.subr.bf16.mxu0 %v1867
    %2457 = vmatpush1.bf16.msra.mxu0 %v1866
    %2458 = vmatprep.subr.bf16.mxu0 %v1859
    %2459 = vmatpush1.bf16.msra.mxu0 %v1858
    %2460 = vmatprep.subr.bf16.mxu0 %v1851
    %2461 = vmatpush1.bf16.msra.mxu0 %v1850
    %2462 = vmatprep.subr.bf16.mxu0 %v1971
    %2463 = vmatpush2.bf16.msra.mxu0 %v1970
    %2464 = vmatprep.subr.bf16.mxu0 %v1963
    %2465 = vmatpush2.bf16.msra.mxu0 %v1962
    %2466 = vmatprep.subr.bf16.mxu0 %v1955
    %2467 = vmatpush2.bf16.msra.mxu0 %v1954
    %2468 = vmatprep.subr.bf16.mxu0 %v1947
    %2469 = vmatpush2.bf16.msra.mxu0 %v1946
    %2470 = vmatprep.subr.bf16.mxu0 %v1939
    %2471 = vmatpush2.bf16.msra.mxu0 %v1938
    %2472 = vmatprep.subr.bf16.mxu0 %v1931
    %2473 = vmatpush2.bf16.msra.mxu0 %v1930
    %2474 = vmatprep.subr.bf16.mxu0 %v1923
    %2475 = vmatpush2.bf16.msra.mxu0 %v1922
    %2476 = vmatprep.subr.bf16.mxu0 %v1915
    %2477 = vmatpush2.bf16.msra.mxu0 %v1914
    %2478 = vmatprep.mubr.bf16.mxu0 %v779
    %2479 = vmatmul.mubr.bf16.gmra.mxu0 %v778
    %v2480 = vpop.f32.mrf.mxu0
    %v2481 = vadd.f32 %v1051, %v2480
    %v2482 = vpop.f32.mrf.mxu0
    %v2483 = vadd.f32 %v1055, %v2482
    %v2484 = vpop.f32.mrf.mxu0
    %v2485 = vadd.f32 %v1051, %v2484
    %v2486 = vpop.f32.mrf.mxu0
    %v2487 = vadd.f32 %v1055, %v2486
    %2488 = vdwg.mxu0
    %2489 = vmatprep.subr.bf16.mxu0 %v2035
    %2490 = vmatpush1.bf16.msra.mxu0 %v2034
    %2491 = vmatprep.subr.bf16.mxu0 %v2027
    %2492 = vmatpush1.bf16.msra.mxu0 %v2026
    %2493 = vmatprep.subr.bf16.mxu0 %v2019
    %2494 = vmatpush1.bf16.msra.mxu0 %v2018
    %2495 = vmatprep.subr.bf16.mxu0 %v2011
    %2496 = vmatpush1.bf16.msra.mxu0 %v2010
    %2497 = vmatprep.subr.bf16.mxu0 %v2003
    %2498 = vmatpush1.bf16.msra.mxu0 %v2002
    %2499 = vmatprep.subr.bf16.mxu0 %v1995
    %2500 = vmatpush1.bf16.msra.mxu0 %v1994
    %2501 = vmatprep.subr.bf16.mxu0 %v1987
    %2502 = vmatpush1.bf16.msra.mxu0 %v1986
    %2503 = vmatprep.subr.bf16.mxu0 %v1979
    %2504 = vmatpush1.bf16.msra.mxu0 %v1978
    %2505 = vmatprep.subr.bf16.mxu0 %v2099
    %2506 = vmatpush2.bf16.msra.mxu0 %v2098
    %2507 = vmatprep.subr.bf16.mxu0 %v2091
    %2508 = vmatpush2.bf16.msra.mxu0 %v2090
    %2509 = vmatprep.subr.bf16.mxu0 %v2083
    %2510 = vmatpush2.bf16.msra.mxu0 %v2082
    %2511 = vmatprep.subr.bf16.mxu0 %v2075
    %2512 = vmatpush2.bf16.msra.mxu0 %v2074
    %2513 = vmatprep.subr.bf16.mxu0 %v2067
    %2514 = vmatpush2.bf16.msra.mxu0 %v2066
    %2515 = vmatprep.subr.bf16.mxu0 %v2059
    %2516 = vmatpush2.bf16.msra.mxu0 %v2058
    %2517 = vmatprep.subr.bf16.mxu0 %v2051
    %2518 = vmatpush2.bf16.msra.mxu0 %v2050
    %2519 = vmatprep.subr.bf16.mxu0 %v2043
    %2520 = vmatpush2.bf16.msra.mxu0 %v2042
    %2521 = vmatprep.mubr.bf16.mxu0 %v781
    %2522 = vmatmul.mubr.bf16.gmra.mxu0 %v780
    %v2523 = vpop.f32.mrf.mxu0
    %v2524 = vadd.f32 %v2481, %v2523
    %v2525 = vpop.f32.mrf.mxu0
    %v2526 = vadd.f32 %v2483, %v2525
    %v2527 = vpop.f32.mrf.mxu0
    %v2528 = vadd.f32 %v2485, %v2527
    %v2529 = vpop.f32.mrf.mxu0
    %v2530 = vadd.f32 %v2487, %v2529
    %2531 = vdwg.mxu0
    %2532 = vmatprep.subr.bf16.mxu0 %v1909
    %2533 = vmatpush1.bf16.msra.mxu0 %v1908
    %2534 = vmatprep.subr.bf16.mxu0 %v1901
    %2535 = vmatpush1.bf16.msra.mxu0 %v1900
    %2536 = vmatprep.subr.bf16.mxu0 %v1893
    %2537 = vmatpush1.bf16.msra.mxu0 %v1892
    %2538 = vmatprep.subr.bf16.mxu0 %v1885
    %2539 = vmatpush1.bf16.msra.mxu0 %v1884
    %2540 = vmatprep.subr.bf16.mxu0 %v1877
    %2541 = vmatpush1.bf16.msra.mxu0 %v1876
    %2542 = vmatprep.subr.bf16.mxu0 %v1869
    %2543 = vmatpush1.bf16.msra.mxu0 %v1868
    %2544 = vmatprep.subr.bf16.mxu0 %v1861
    %2545 = vmatpush1.bf16.msra.mxu0 %v1860
    %2546 = vmatprep.subr.bf16.mxu0 %v1853
    %2547 = vmatpush1.bf16.msra.mxu0 %v1852
    %2548 = vmatprep.subr.bf16.mxu0 %v1973
    %2549 = vmatpush2.bf16.msra.mxu0 %v1972
    %2550 = vmatprep.subr.bf16.mxu0 %v1965
    %2551 = vmatpush2.bf16.msra.mxu0 %v1964
    %2552 = vmatprep.subr.bf16.mxu0 %v1957
    %2553 = vmatpush2.bf16.msra.mxu0 %v1956
    %2554 = vmatprep.subr.bf16.mxu0 %v1949
    %2555 = vmatpush2.bf16.msra.mxu0 %v1948
    %2556 = vmatprep.subr.bf16.mxu0 %v1941
    %2557 = vmatpush2.bf16.msra.mxu0 %v1940
    %2558 = vmatprep.subr.bf16.mxu0 %v1933
    %2559 = vmatpush2.bf16.msra.mxu0 %v1932
    %2560 = vmatprep.subr.bf16.mxu0 %v1925
    %2561 = vmatpush2.bf16.msra.mxu0 %v1924
    %2562 = vmatprep.subr.bf16.mxu0 %v1917
    %2563 = vmatpush2.bf16.msra.mxu0 %v1916
    %2564 = vmatprep.mubr.bf16.mxu0 %v779
    %2565 = vmatmul.mubr.bf16.gmra.mxu0 %v778
    %v2566 = vpop.f32.mrf.mxu0
    %v2567 = vadd.f32 %v1059, %v2566
    %v2568 = vpop.f32.mrf.mxu0
    %v2569 = vadd.f32 %v1063, %v2568
    %v2570 = vpop.f32.mrf.mxu0
    %v2571 = vadd.f32 %v1059, %v2570
    %v2572 = vpop.f32.mrf.mxu0
    %v2573 = vadd.f32 %v1063, %v2572
    %2574 = vdwg.mxu0
    %2575 = vmatprep.subr.bf16.mxu0 %v2037
    %2576 = vmatpush1.bf16.msra.mxu0 %v2036
    %2577 = vmatprep.subr.bf16.mxu0 %v2029
    %2578 = vmatpush1.bf16.msra.mxu0 %v2028
    %2579 = vmatprep.subr.bf16.mxu0 %v2021
    %2580 = vmatpush1.bf16.msra.mxu0 %v2020
    %2581 = vmatprep.subr.bf16.mxu0 %v2013
    %2582 = vmatpush1.bf16.msra.mxu0 %v2012
    %2583 = vmatprep.subr.bf16.mxu0 %v2005
    %2584 = vmatpush1.bf16.msra.mxu0 %v2004
    %2585 = vmatprep.subr.bf16.mxu0 %v1997
    %2586 = vmatpush1.bf16.msra.mxu0 %v1996
    %2587 = vmatprep.subr.bf16.mxu0 %v1989
    %2588 = vmatpush1.bf16.msra.mxu0 %v1988
    %2589 = vmatprep.subr.bf16.mxu0 %v1981
    %2590 = vmatpush1.bf16.msra.mxu0 %v1980
    %2591 = vmatprep.subr.bf16.mxu0 %v2101
    %2592 = vmatpush2.bf16.msra.mxu0 %v2100
    %2593 = vmatprep.subr.bf16.mxu0 %v2093
    %2594 = vmatpush2.bf16.msra.mxu0 %v2092
    %2595 = vmatprep.subr.bf16.mxu0 %v2085
    %2596 = vmatpush2.bf16.msra.mxu0 %v2084
    %2597 = vmatprep.subr.bf16.mxu0 %v2077
    %2598 = vmatpush2.bf16.msra.mxu0 %v2076
    %2599 = vmatprep.subr.bf16.mxu0 %v2069
    %2600 = vmatpush2.bf16.msra.mxu0 %v2068
    %2601 = vmatprep.subr.bf16.mxu0 %v2061
    %2602 = vmatpush2.bf16.msra.mxu0 %v2060
    %2603 = vmatprep.subr.bf16.mxu0 %v2053
    %2604 = vmatpush2.bf16.msra.mxu0 %v2052
    %2605 = vmatprep.subr.bf16.mxu0 %v2045
    %2606 = vmatpush2.bf16.msra.mxu0 %v2044
    %2607 = vmatprep.mubr.bf16.mxu0 %v781
    %2608 = vmatmul.mubr.bf16.gmra.mxu0 %v780
    %v2609 = vpop.f32.mrf.mxu0
    %v2610 = vadd.f32 %v2567, %v2609
    %v2611 = vpop.f32.mrf.mxu0
    %v2612 = vadd.f32 %v2569, %v2611
    %v2613 = vpop.f32.mrf.mxu0
    %v2614 = vadd.f32 %v2571, %v2613
    %v2615 = vpop.f32.mrf.mxu0
    %v2616 = vadd.f32 %v2573, %v2615
    %2617 = vdwg.mxu0
    %2618 = vmatprep.subr.bf16.mxu0 %v1911
    %2619 = vmatpush1.bf16.msra.mxu0 %v1910
    %2620 = vmatprep.subr.bf16.mxu0 %v1903
    %2621 = vmatpush1.bf16.msra.mxu0 %v1902
    %2622 = vmatprep.subr.bf16.mxu0 %v1895
    %2623 = vmatpush1.bf16.msra.mxu0 %v1894
    %2624 = vmatprep.subr.bf16.mxu0 %v1887
    %2625 = vmatpush1.bf16.msra.mxu0 %v1886
    %2626 = vmatprep.subr.bf16.mxu0 %v1879
    %2627 = vmatpush1.bf16.msra.mxu0 %v1878
    %2628 = vmatprep.subr.bf16.mxu0 %v1871
    %2629 = vmatpush1.bf16.msra.mxu0 %v1870
    %2630 = vmatprep.subr.bf16.mxu0 %v1863
    %2631 = vmatpush1.bf16.msra.mxu0 %v1862
    %2632 = vmatprep.subr.bf16.mxu0 %v1855
    %2633 = vmatpush1.bf16.msra.mxu0 %v1854
    %2634 = vmatprep.subr.bf16.mxu0 %v1975
    %2635 = vmatpush2.bf16.msra.mxu0 %v1974
    %2636 = vmatprep.subr.bf16.mxu0 %v1967
    %2637 = vmatpush2.bf16.msra.mxu0 %v1966
    %2638 = vmatprep.subr.bf16.mxu0 %v1959
    %2639 = vmatpush2.bf16.msra.mxu0 %v1958
    %2640 = vmatprep.subr.bf16.mxu0 %v1951
    %2641 = vmatpush2.bf16.msra.mxu0 %v1950
    %2642 = vmatprep.subr.bf16.mxu0 %v1943
    %2643 = vmatpush2.bf16.msra.mxu0 %v1942
    %2644 = vmatprep.subr.bf16.mxu0 %v1935
    %2645 = vmatpush2.bf16.msra.mxu0 %v1934
    %2646 = vmatprep.subr.bf16.mxu0 %v1927
    %2647 = vmatpush2.bf16.msra.mxu0 %v1926
    %2648 = vmatprep.subr.bf16.mxu0 %v1919
    %2649 = vmatpush2.bf16.msra.mxu0 %v1918
    %2650 = vmatprep.mubr.bf16.mxu0 %v779
    %2651 = vmatmul.mubr.bf16.gmra.mxu0 %v778
    %v2652 = vpop.f32.mrf.mxu0
    %v2653 = vadd.f32 %v1067, %v2652
    %v2654 = vpop.f32.mrf.mxu0
    %v2655 = vadd.f32 %v1071, %v2654
    %v2656 = vpop.f32.mrf.mxu0
    %v2657 = vadd.f32 %v1067, %v2656
    %v2658 = vpop.f32.mrf.mxu0
    %v2659 = vadd.f32 %v1071, %v2658
    %2660 = vdwg.mxu0
    %2661 = vmatprep.subr.bf16.mxu0 %v2039
    %2662 = vmatpush1.bf16.msra.mxu0 %v2038
    %2663 = vmatprep.subr.bf16.mxu0 %v2031
    %2664 = vmatpush1.bf16.msra.mxu0 %v2030
    %2665 = vmatprep.subr.bf16.mxu0 %v2023
    %2666 = vmatpush1.bf16.msra.mxu0 %v2022
    %2667 = vmatprep.subr.bf16.mxu0 %v2015
    %2668 = vmatpush1.bf16.msra.mxu0 %v2014
    %2669 = vmatprep.subr.bf16.mxu0 %v2007
    %2670 = vmatpush1.bf16.msra.mxu0 %v2006
    %2671 = vmatprep.subr.bf16.mxu0 %v1999
    %2672 = vmatpush1.bf16.msra.mxu0 %v1998
    %2673 = vmatprep.subr.bf16.mxu0 %v1991
    %2674 = vmatpush1.bf16.msra.mxu0 %v1990
    %2675 = vmatprep.subr.bf16.mxu0 %v1983
    %2676 = vmatpush1.bf16.msra.mxu0 %v1982
    %2677 = vmatprep.subr.bf16.mxu0 %v2103
    %2678 = vmatpush2.bf16.msra.mxu0 %v2102
    %2679 = vmatprep.subr.bf16.mxu0 %v2095
    %2680 = vmatpush2.bf16.msra.mxu0 %v2094
    %2681 = vmatprep.subr.bf16.mxu0 %v2087
    %2682 = vmatpush2.bf16.msra.mxu0 %v2086
    %2683 = vmatprep.subr.bf16.mxu0 %v2079
    %2684 = vmatpush2.bf16.msra.mxu0 %v2078
    %2685 = vmatprep.subr.bf16.mxu0 %v2071
    %2686 = vmatpush2.bf16.msra.mxu0 %v2070
    %2687 = vmatprep.subr.bf16.mxu0 %v2063
    %2688 = vmatpush2.bf16.msra.mxu0 %v2062
    %2689 = vmatprep.subr.bf16.mxu0 %v2055
    %2690 = vmatpush2.bf16.msra.mxu0 %v2054
    %2691 = vmatprep.subr.bf16.mxu0 %v2047
    %2692 = vmatpush2.bf16.msra.mxu0 %v2046
    %2693 = vmatprep.mubr.bf16.mxu0 %v781
    %2694 = vmatmul.mubr.bf16.gmra.mxu0 %v780
    %v2695 = vpop.f32.mrf.mxu0
    %v2696 = vadd.f32 %v2653, %v2695
    %v2697 = vpop.f32.mrf.mxu0
    %v2698 = vadd.f32 %v2655, %v2697
    %v2699 = vpop.f32.mrf.mxu0
    %v2700 = vadd.f32 %v2657, %v2699
    %v2701 = vpop.f32.mrf.mxu0
    %v2702 = vadd.f32 %v2659, %v2701
    %2703 = vdwg.mxu0
    %vm2704 = vcmp.gt.f32.partialorder %v2438, 0.0
    %vm2705 = vcmp.gt.f32.partialorder %v2440, 0.0
    %vm2706 = vcmp.gt.f32.partialorder %v2524, 0.0
    %vm2707 = vcmp.gt.f32.partialorder %v2526, 0.0
    %vm2708 = vcmp.gt.f32.partialorder %v2610, 0.0
    %vm2709 = vcmp.gt.f32.partialorder %v2612, 0.0
    %vm2710 = vcmp.gt.f32.partialorder %v2696, 0.0
    %vm2711 = vcmp.gt.f32.partialorder %v2698, 0.0
    %vm2712 = vcmp.gt.f32.partialorder %v2442, 0.0
    %vm2713 = vcmp.gt.f32.partialorder %v2444, 0.0
    %vm2714 = vcmp.gt.f32.partialorder %v2528, 0.0
    %vm2715 = vcmp.gt.f32.partialorder %v2530, 0.0
    %vm2716 = vcmp.gt.f32.partialorder %v2614, 0.0
    %vm2717 = vcmp.gt.f32.partialorder %v2616, 0.0
    %vm2718 = vcmp.gt.f32.partialorder %v2700, 0.0
    %vm2719 = vcmp.gt.f32.partialorder %v2702, 0.0
    %v2720 = vmul.f32 %v2438, 0.2
    %v2721 = vmul.f32 %v2440, 0.2
    %v2722 = vmul.f32 %v2524, 0.2
    %v2723 = vmul.f32 %v2526, 0.2
    %v2724 = vmul.f32 %v2610, 0.2
    %v2725 = vmul.f32 %v2612, 0.2
    %v2726 = vmul.f32 %v2696, 0.2
    %v2727 = vmul.f32 %v2698, 0.2
    %v2728 = vmul.f32 %v2442, 0.2
    %v2729 = vmul.f32 %v2444, 0.2
    %v2730 = vmul.f32 %v2528, 0.2
    %v2731 = vmul.f32 %v2530, 0.2
    %v2732 = vmul.f32 %v2614, 0.2
    %v2733 = vmul.f32 %v2616, 0.2
    %v2734 = vmul.f32 %v2700, 0.2
    %v2735 = vmul.f32 %v2702, 0.2
    %v2736 = vsel %vm2704, %v2438, %v2720
    %v2737 = vsel %vm2705, %v2440, %v2721
    %v2738 = vsel %vm2706, %v2524, %v2722
    %v2739 = vsel %vm2707, %v2526, %v2723
    %v2740 = vsel %vm2708, %v2610, %v2724
    %v2741 = vsel %vm2709, %v2612, %v2725
    %v2742 = vsel %vm2710, %v2696, %v2726
    %v2743 = vsel %vm2711, %v2698, %v2727
    %v2744 = vsel %vm2712, %v2442, %v2728
    %v2745 = vsel %vm2713, %v2444, %v2729
    %v2746 = vsel %vm2714, %v2528, %v2730
    %v2747 = vsel %vm2715, %v2530, %v2731
    %v2748 = vsel %vm2716, %v2614, %v2732
    %v2749 = vsel %vm2717, %v2616, %v2733
    %v2750 = vsel %vm2718, %v2700, %v2734
    %v2751 = vsel %vm2719, %v2702, %v2735
    %v2752 = vpack.c.bf16 %v2744, %v2736
    %v2753 = vpack.c.bf16 %v2745, %v2737
    %v2754 = vpack.c.bf16 %v2746, %v2738
    %v2755 = vpack.c.bf16 %v2747, %v2739
    %v2756 = vpack.c.bf16 %v2748, %v2740
    %v2757 = vpack.c.bf16 %v2749, %v2741
    %v2758 = vpack.c.bf16 %v2750, %v2742
    %v2759 = vpack.c.bf16 %v2751, %v2743
    %v2760 = vld [vmem:[#allocation12] sm:$0xff]
    %v2761 = vld [vmem:[#allocation12 + $0x8] sm:$0xff]
    %v2762 = vld [vmem:[#allocation12 + $0x10] sm:$0xff]
    %v2763 = vld [vmem:[#allocation12 + $0x18] sm:$0xf]
    %v2764 = vld [vmem:[#allocation12 + $0x1c] sm:$0xff]
    %v2765 = vld [vmem:[#allocation12 + $0x24] sm:$0xff]
    %v2766 = vld [vmem:[#allocation12 + $0x2c] sm:$0xff]
    %v2767 = vld [vmem:[#allocation12 + $0x34] sm:$0xf]
    %v2768 = vld [vmem:[#allocation12 + $0x38] sm:$0xff]
    %v2769 = vld [vmem:[#allocation12 + $0x40] sm:$0xff]
    %v2770 = vld [vmem:[#allocation12 + $0x48] sm:$0xff]
    %v2771 = vld [vmem:[#allocation12 + $0x50] sm:$0xf]
    %v2772 = vld [vmem:[#allocation12 + $0x54] sm:$0xff]
    %v2773 = vld [vmem:[#allocation12 + $0x5c] sm:$0xff]
    %v2774 = vld [vmem:[#allocation12 + $0x64] sm:$0xff]
    %v2775 = vld [vmem:[#allocation12 + $0x6c] sm:$0xf]
    %v2776 = vld [vmem:[#allocation12 + $0x70] sm:$0xff]
    %v2777 = vld [vmem:[#allocation12 + $0x78] sm:$0xff]
    %v2778 = vld [vmem:[#allocation12 + $0x80] sm:$0xff]
    %v2779 = vld [vmem:[#allocation12 + $0x88] sm:$0xf]
    %v2780 = vld [vmem:[#allocation12 + $0x8c] sm:$0xff]
    %v2781 = vld [vmem:[#allocation12 + $0x94] sm:$0xff]
    %v2782 = vld [vmem:[#allocation12 + $0x9c] sm:$0xff]
    %v2783 = vld [vmem:[#allocation12 + $0xa4] sm:$0xf]
    %v2784 = vld [vmem:[#allocation12 + $0xa8] sm:$0xff]
    %v2785 = vld [vmem:[#allocation12 + $0xb0] sm:$0xff]
    %v2786 = vld [vmem:[#allocation12 + $0xb8] sm:$0xff]
    %v2787 = vld [vmem:[#allocation12 + $0xc0] sm:$0xf]
    %v2788 = vld [vmem:[#allocation12 + $0xc4] sm:$0xff]
    %v2789 = vld [vmem:[#allocation12 + $0xcc] sm:$0xff]
    %v2790 = vld [vmem:[#allocation12 + $0xd4] sm:$0xff]
    %v2791 = vld [vmem:[#allocation12 + $0xdc] sm:$0xf]
    %v2792 = vld [vmem:[#allocation12 + $0xe0] sm:$0xff]
    %v2793 = vld [vmem:[#allocation12 + $0xe8] sm:$0xff]
    %v2794 = vld [vmem:[#allocation12 + $0xf0] sm:$0xff]
    %v2795 = vld [vmem:[#allocation12 + $0xf8] sm:$0xf]
    %v2796 = vld [vmem:[#allocation12 + $0xfc] sm:$0xff]
    %v2797 = vld [vmem:[#allocation12 + $0x104] sm:$0xff]
    %v2798 = vld [vmem:[#allocation12 + $0x10c] sm:$0xff]
    %v2799 = vld [vmem:[#allocation12 + $0x114] sm:$0xf]
    %v2800 = vld [vmem:[#allocation12 + $0x118] sm:$0xff]
    %v2801 = vld [vmem:[#allocation12 + $0x120] sm:$0xff]
    %v2802 = vld [vmem:[#allocation12 + $0x128] sm:$0xff]
    %v2803 = vld [vmem:[#allocation12 + $0x130] sm:$0xf]
    %v2804 = vld [vmem:[#allocation12 + $0x134] sm:$0xff]
    %v2805 = vld [vmem:[#allocation12 + $0x13c] sm:$0xff]
    %v2806 = vld [vmem:[#allocation12 + $0x144] sm:$0xff]
    %v2807 = vld [vmem:[#allocation12 + $0x14c] sm:$0xf]
    %v2808 = vld [vmem:[#allocation12 + $0x150] sm:$0xff]
    %v2809 = vld [vmem:[#allocation12 + $0x158] sm:$0xff]
    %v2810 = vld [vmem:[#allocation12 + $0x160] sm:$0xff]
    %v2811 = vld [vmem:[#allocation12 + $0x168] sm:$0xf]
    %v2812 = vld [vmem:[#allocation12 + $0x16c] sm:$0xff]
    %v2813 = vld [vmem:[#allocation12 + $0x174] sm:$0xff]
    %v2814 = vld [vmem:[#allocation12 + $0x17c] sm:$0xff]
    %v2815 = vld [vmem:[#allocation12 + $0x184] sm:$0xf]
    %v2816 = vld [vmem:[#allocation12 + $0x188] sm:$0xff]
    %v2817 = vld [vmem:[#allocation12 + $0x190] sm:$0xff]
    %v2818 = vld [vmem:[#allocation12 + $0x198] sm:$0xff]
    %v2819 = vld [vmem:[#allocation12 + $0x1a0] sm:$0xf]
    %v2820 = vld [vmem:[#allocation12 + $0x1a4] sm:$0xff]
    %v2821 = vld [vmem:[#allocation12 + $0x1ac] sm:$0xff]
    %v2822 = vld [vmem:[#allocation12 + $0x1b4] sm:$0xff]
    %v2823 = vld [vmem:[#allocation12 + $0x1bc] sm:$0xf]
    %v2824 = vld [vmem:[#allocation12 + $0x1c0] sm:$0xff]
    %v2825 = vld [vmem:[#allocation12 + $0x1c8] sm:$0xff]
    %v2826 = vld [vmem:[#allocation12 + $0x1d0] sm:$0xff]
    %v2827 = vld [vmem:[#allocation12 + $0x1d8] sm:$0xf]
    %v2828 = vld [vmem:[#allocation12 + $0x1dc] sm:$0xff]
    %v2829 = vld [vmem:[#allocation12 + $0x1e4] sm:$0xff]
    %v2830 = vld [vmem:[#allocation12 + $0x1ec] sm:$0xff]
    %v2831 = vld [vmem:[#allocation12 + $0x1f4] sm:$0xf]
    %v2832 = vld [vmem:[#allocation12 + $0x1f8] sm:$0xff]
    %v2833 = vld [vmem:[#allocation12 + $0x200] sm:$0xff]
    %v2834 = vld [vmem:[#allocation12 + $0x208] sm:$0xff]
    %v2835 = vld [vmem:[#allocation12 + $0x210] sm:$0xf]
    %v2836 = vld [vmem:[#allocation12 + $0x214] sm:$0xff]
    %v2837 = vld [vmem:[#allocation12 + $0x21c] sm:$0xff]
    %v2838 = vld [vmem:[#allocation12 + $0x224] sm:$0xff]
    %v2839 = vld [vmem:[#allocation12 + $0x22c] sm:$0xf]
    %v2840 = vld [vmem:[#allocation12 + $0x230] sm:$0xff]
    %v2841 = vld [vmem:[#allocation12 + $0x238] sm:$0xff]
    %v2842 = vld [vmem:[#allocation12 + $0x240] sm:$0xff]
    %v2843 = vld [vmem:[#allocation12 + $0x248] sm:$0xf]
    %v2844 = vld [vmem:[#allocation12 + $0x24c] sm:$0xff]
    %v2845 = vld [vmem:[#allocation12 + $0x254] sm:$0xff]
    %v2846 = vld [vmem:[#allocation12 + $0x25c] sm:$0xff]
    %v2847 = vld [vmem:[#allocation12 + $0x264] sm:$0xf]
    %v2848 = vld [vmem:[#allocation12 + $0x268] sm:$0xff]
    %v2849 = vld [vmem:[#allocation12 + $0x270] sm:$0xff]
    %v2850 = vld [vmem:[#allocation12 + $0x278] sm:$0xff]
    %v2851 = vld [vmem:[#allocation12 + $0x280] sm:$0xf]
    %v2852 = vld [vmem:[#allocation12 + $0x284] sm:$0xff]
    %v2853 = vld [vmem:[#allocation12 + $0x28c] sm:$0xff]
    %v2854 = vld [vmem:[#allocation12 + $0x294] sm:$0xff]
    %v2855 = vld [vmem:[#allocation12 + $0x29c] sm:$0xf]
    %v2856 = vld [vmem:[#allocation12 + $0x2a0] sm:$0xff]
    %v2857 = vld [vmem:[#allocation12 + $0x2a8] sm:$0xff]
    %v2858 = vld [vmem:[#allocation12 + $0x2b0] sm:$0xff]
    %v2859 = vld [vmem:[#allocation12 + $0x2b8] sm:$0xf]
    %v2860 = vld [vmem:[#allocation12 + $0x2bc] sm:$0xff]
    %v2861 = vld [vmem:[#allocation12 + $0x2c4] sm:$0xff]
    %v2862 = vld [vmem:[#allocation12 + $0x2cc] sm:$0xff]
    %v2863 = vld [vmem:[#allocation12 + $0x2d4] sm:$0xf]
    %v2864 = vld [vmem:[#allocation12 + $0x2d8] sm:$0xff]
    %v2865 = vld [vmem:[#allocation12 + $0x2e0] sm:$0xff]
    %v2866 = vld [vmem:[#allocation12 + $0x2e8] sm:$0xff]
    %v2867 = vld [vmem:[#allocation12 + $0x2f0] sm:$0xf]
    %v2868 = vld [vmem:[#allocation12 + $0x2f4] sm:$0xff]
    %v2869 = vld [vmem:[#allocation12 + $0x2fc] sm:$0xff]
    %v2870 = vld [vmem:[#allocation12 + $0x304] sm:$0xff]
    %v2871 = vld [vmem:[#allocation12 + $0x30c] sm:$0xf]
    %v2872 = vld [vmem:[#allocation12 + $0x310] sm:$0xff]
    %v2873 = vld [vmem:[#allocation12 + $0x318] sm:$0xff]
    %v2874 = vld [vmem:[#allocation12 + $0x320] sm:$0xff]
    %v2875 = vld [vmem:[#allocation12 + $0x328] sm:$0xf]
    %v2876 = vld [vmem:[#allocation12 + $0x32c] sm:$0xff]
    %v2877 = vld [vmem:[#allocation12 + $0x334] sm:$0xff]
    %v2878 = vld [vmem:[#allocation12 + $0x33c] sm:$0xff]
    %v2879 = vld [vmem:[#allocation12 + $0x344] sm:$0xf]
    %v2880 = vld [vmem:[#allocation12 + $0x348] sm:$0xff]
    %v2881 = vld [vmem:[#allocation12 + $0x350] sm:$0xff]
    %v2882 = vld [vmem:[#allocation12 + $0x358] sm:$0xff]
    %v2883 = vld [vmem:[#allocation12 + $0x360] sm:$0xf]
    %v2884 = vld [vmem:[#allocation12 + $0x364] sm:$0xff]
    %v2885 = vld [vmem:[#allocation12 + $0x36c] sm:$0xff]
    %v2886 = vld [vmem:[#allocation12 + $0x374] sm:$0xff]
    %v2887 = vld [vmem:[#allocation12 + $0x37c] sm:$0xf]
    %v2888 = vld [vmem:[#allocation12 + $0x380] sm:$0xff]
    %v2889 = vld [vmem:[#allocation12 + $0x388] sm:$0xff]
    %v2890 = vld [vmem:[#allocation12 + $0x390] sm:$0xff]
    %v2891 = vld [vmem:[#allocation12 + $0x398] sm:$0xf]
    %v2892 = vld [vmem:[#allocation12 + $0x39c] sm:$0xff]
    %v2893 = vld [vmem:[#allocation12 + $0x3a4] sm:$0xff]
    %v2894 = vld [vmem:[#allocation12 + $0x3ac] sm:$0xff]
    %v2895 = vld [vmem:[#allocation12 + $0x3b4] sm:$0xf]
    %v2896 = vld [vmem:[#allocation12 + $0x3b8] sm:$0xff]
    %v2897 = vld [vmem:[#allocation12 + $0x3c0] sm:$0xff]
    %v2898 = vld [vmem:[#allocation12 + $0x3c8] sm:$0xff]
    %v2899 = vld [vmem:[#allocation12 + $0x3d0] sm:$0xf]
    %v2900 = vld [vmem:[#allocation12 + $0x3d4] sm:$0xff]
    %v2901 = vld [vmem:[#allocation12 + $0x3dc] sm:$0xff]
    %v2902 = vld [vmem:[#allocation12 + $0x3e4] sm:$0xff]
    %v2903 = vld [vmem:[#allocation12 + $0x3ec] sm:$0xf]
    %v2904 = vld [vmem:[#allocation12 + $0x3f0] sm:$0xff]
    %v2905 = vld [vmem:[#allocation12 + $0x3f8] sm:$0xff]
    %v2906 = vld [vmem:[#allocation12 + $0x400] sm:$0xff]
    %v2907 = vld [vmem:[#allocation12 + $0x408] sm:$0xf]
    %v2908 = vld [vmem:[#allocation12 + $0x40c] sm:$0xff]
    %v2909 = vld [vmem:[#allocation12 + $0x414] sm:$0xff]
    %v2910 = vld [vmem:[#allocation12 + $0x41c] sm:$0xff]
    %v2911 = vld [vmem:[#allocation12 + $0x424] sm:$0xf]
    %v2912 = vld [vmem:[#allocation12 + $0x428] sm:$0xff]
    %v2913 = vld [vmem:[#allocation12 + $0x430] sm:$0xff]
    %v2914 = vld [vmem:[#allocation12 + $0x438] sm:$0xff]
    %v2915 = vld [vmem:[#allocation12 + $0x440] sm:$0xf]
    %v2916 = vld [vmem:[#allocation12 + $0x444] sm:$0xff]
    %v2917 = vld [vmem:[#allocation12 + $0x44c] sm:$0xff]
    %v2918 = vld [vmem:[#allocation12 + $0x454] sm:$0xff]
    %v2919 = vld [vmem:[#allocation12 + $0x45c] sm:$0xf]
    %v2920 = vld [vmem:[#allocation12 + $0x460] sm:$0xff]
    %v2921 = vld [vmem:[#allocation12 + $0x468] sm:$0xff]
    %v2922 = vld [vmem:[#allocation12 + $0x470] sm:$0xff]
    %v2923 = vld [vmem:[#allocation12 + $0x478] sm:$0xf]
    %v2924 = vld [vmem:[#allocation12 + $0x47c] sm:$0xff]
    %v2925 = vld [vmem:[#allocation12 + $0x484] sm:$0xff]
    %v2926 = vld [vmem:[#allocation12 + $0x48c] sm:$0xff]
    %v2927 = vld [vmem:[#allocation12 + $0x494] sm:$0xf]
    %v2928 = vld [vmem:[#allocation12 + $0x498] sm:$0xff]
    %v2929 = vld [vmem:[#allocation12 + $0x4a0] sm:$0xff]
    %v2930 = vld [vmem:[#allocation12 + $0x4a8] sm:$0xff]
    %v2931 = vld [vmem:[#allocation12 + $0x4b0] sm:$0xf]
    %v2932 = vld [vmem:[#allocation12 + $0x4b4] sm:$0xff]
    %v2933 = vld [vmem:[#allocation12 + $0x4bc] sm:$0xff]
    %v2934 = vld [vmem:[#allocation12 + $0x4c4] sm:$0xff]
    %v2935 = vld [vmem:[#allocation12 + $0x4cc] sm:$0xf]
    %v2936 = vld [vmem:[#allocation12 + $0x4d0] sm:$0xff]
    %v2937 = vld [vmem:[#allocation12 + $0x4d8] sm:$0xff]
    %v2938 = vld [vmem:[#allocation12 + $0x4e0] sm:$0xff]
    %v2939 = vld [vmem:[#allocation12 + $0x4e8] sm:$0xf]
    %v2940 = vld [vmem:[#allocation12 + $0x4ec] sm:$0xff]
    %v2941 = vld [vmem:[#allocation12 + $0x4f4] sm:$0xff]
    %v2942 = vld [vmem:[#allocation12 + $0x4fc] sm:$0xff]
    %v2943 = vld [vmem:[#allocation12 + $0x504] sm:$0xf]
    %v2944 = vld [vmem:[#allocation12 + $0x508] sm:$0xff]
    %v2945 = vld [vmem:[#allocation12 + $0x510] sm:$0xff]
    %v2946 = vld [vmem:[#allocation12 + $0x518] sm:$0xff]
    %v2947 = vld [vmem:[#allocation12 + $0x520] sm:$0xf]
    %v2948 = vld [vmem:[#allocation12 + $0x524] sm:$0xff]
    %v2949 = vld [vmem:[#allocation12 + $0x52c] sm:$0xff]
    %v2950 = vld [vmem:[#allocation12 + $0x534] sm:$0xff]
    %v2951 = vld [vmem:[#allocation12 + $0x53c] sm:$0xf]
    %v2952 = vld [vmem:[#allocation12 + $0x540] sm:$0xff]
    %v2953 = vld [vmem:[#allocation12 + $0x548] sm:$0xff]
    %v2954 = vld [vmem:[#allocation12 + $0x550] sm:$0xff]
    %v2955 = vld [vmem:[#allocation12 + $0x558] sm:$0xf]
    %v2956 = vld [vmem:[#allocation12 + $0x55c] sm:$0xff]
    %v2957 = vld [vmem:[#allocation12 + $0x564] sm:$0xff]
    %v2958 = vld [vmem:[#allocation12 + $0x56c] sm:$0xff]
    %v2959 = vld [vmem:[#allocation12 + $0x574] sm:$0xf]
    %v2960 = vld [vmem:[#allocation12 + $0x578] sm:$0xff]
    %v2961 = vld [vmem:[#allocation12 + $0x580] sm:$0xff]
    %v2962 = vld [vmem:[#allocation12 + $0x588] sm:$0xff]
    %v2963 = vld [vmem:[#allocation12 + $0x590] sm:$0xf]
    %v2964 = vld [vmem:[#allocation12 + $0x594] sm:$0xff]
    %v2965 = vld [vmem:[#allocation12 + $0x59c] sm:$0xff]
    %v2966 = vld [vmem:[#allocation12 + $0x5a4] sm:$0xff]
    %v2967 = vld [vmem:[#allocation12 + $0x5ac] sm:$0xf]
    %v2968 = vld [vmem:[#allocation12 + $0x5b0] sm:$0xff]
    %v2969 = vld [vmem:[#allocation12 + $0x5b8] sm:$0xff]
    %v2970 = vld [vmem:[#allocation12 + $0x5c0] sm:$0xff]
    %v2971 = vld [vmem:[#allocation12 + $0x5c8] sm:$0xf]
    %v2972 = vld [vmem:[#allocation12 + $0x5cc] sm:$0xff]
    %v2973 = vld [vmem:[#allocation12 + $0x5d4] sm:$0xff]
    %v2974 = vld [vmem:[#allocation12 + $0x5dc] sm:$0xff]
    %v2975 = vld [vmem:[#allocation12 + $0x5e4] sm:$0xf]
    %v2976 = vld [vmem:[#allocation12 + $0x5e8] sm:$0xff]
    %v2977 = vld [vmem:[#allocation12 + $0x5f0] sm:$0xff]
    %v2978 = vld [vmem:[#allocation12 + $0x5f8] sm:$0xff]
    %v2979 = vld [vmem:[#allocation12 + $0x600] sm:$0xf]
    %v2980 = vld [vmem:[#allocation12 + $0x604] sm:$0xff]
    %v2981 = vld [vmem:[#allocation12 + $0x60c] sm:$0xff]
    %v2982 = vld [vmem:[#allocation12 + $0x614] sm:$0xff]
    %v2983 = vld [vmem:[#allocation12 + $0x61c] sm:$0xf]
    %v2984 = vld [vmem:[#allocation12 + $0x620] sm:$0xff]
    %v2985 = vld [vmem:[#allocation12 + $0x628] sm:$0xff]
    %v2986 = vld [vmem:[#allocation12 + $0x630] sm:$0xff]
    %v2987 = vld [vmem:[#allocation12 + $0x638] sm:$0xf]
    %v2988 = vld [vmem:[#allocation12 + $0x63c] sm:$0xff]
    %v2989 = vld [vmem:[#allocation12 + $0x644] sm:$0xff]
    %v2990 = vld [vmem:[#allocation12 + $0x64c] sm:$0xff]
    %v2991 = vld [vmem:[#allocation12 + $0x654] sm:$0xf]
    %v2992 = vld [vmem:[#allocation12 + $0x658] sm:$0xff]
    %v2993 = vld [vmem:[#allocation12 + $0x660] sm:$0xff]
    %v2994 = vld [vmem:[#allocation12 + $0x668] sm:$0xff]
    %v2995 = vld [vmem:[#allocation12 + $0x670] sm:$0xf]
    %v2996 = vld [vmem:[#allocation12 + $0x674] sm:$0xff]
    %v2997 = vld [vmem:[#allocation12 + $0x67c] sm:$0xff]
    %v2998 = vld [vmem:[#allocation12 + $0x684] sm:$0xff]
    %v2999 = vld [vmem:[#allocation12 + $0x68c] sm:$0xf]
    %v3000 = vld [vmem:[#allocation12 + $0x690] sm:$0xff]
    %v3001 = vld [vmem:[#allocation12 + $0x698] sm:$0xff]
    %v3002 = vld [vmem:[#allocation12 + $0x6a0] sm:$0xff]
    %v3003 = vld [vmem:[#allocation12 + $0x6a8] sm:$0xf]
    %v3004 = vld [vmem:[#allocation12 + $0x6ac] sm:$0xff]
    %v3005 = vld [vmem:[#allocation12 + $0x6b4] sm:$0xff]
    %v3006 = vld [vmem:[#allocation12 + $0x6bc] sm:$0xff]
    %v3007 = vld [vmem:[#allocation12 + $0x6c4] sm:$0xf]
    %v3008 = vld [vmem:[#allocation12 + $0x6c8] sm:$0xff]
    %v3009 = vld [vmem:[#allocation12 + $0x6d0] sm:$0xff]
    %v3010 = vld [vmem:[#allocation12 + $0x6d8] sm:$0xff]
    %v3011 = vld [vmem:[#allocation12 + $0x6e0] sm:$0xf]
    %v3012 = vld [vmem:[#allocation12 + $0x6e4] sm:$0xff]
    %v3013 = vld [vmem:[#allocation12 + $0x6ec] sm:$0xff]
    %v3014 = vld [vmem:[#allocation12 + $0x6f4] sm:$0xff]
    %v3015 = vld [vmem:[#allocation12 + $0x6fc] sm:$0xf]
    %v3016 = vld [vmem:[#allocation12 + $0x700] sm:$0xff]
    %v3017 = vld [vmem:[#allocation12 + $0x708] sm:$0xff]
    %v3018 = vld [vmem:[#allocation12 + $0x710] sm:$0xff]
    %v3019 = vld [vmem:[#allocation12 + $0x718] sm:$0xf]
    %v3020 = vld [vmem:[#allocation12 + $0x71c] sm:$0xff]
    %v3021 = vld [vmem:[#allocation12 + $0x724] sm:$0xff]
    %v3022 = vld [vmem:[#allocation12 + $0x72c] sm:$0xff]
    %v3023 = vld [vmem:[#allocation12 + $0x734] sm:$0xf]
    %v3024 = vld [vmem:[#allocation12 + $0x738] sm:$0xff]
    %v3025 = vld [vmem:[#allocation12 + $0x740] sm:$0xff]
    %v3026 = vld [vmem:[#allocation12 + $0x748] sm:$0xff]
    %v3027 = vld [vmem:[#allocation12 + $0x750] sm:$0xf]
    %v3028 = vld [vmem:[#allocation12 + $0x754] sm:$0xff]
    %v3029 = vld [vmem:[#allocation12 + $0x75c] sm:$0xff]
    %v3030 = vld [vmem:[#allocation12 + $0x764] sm:$0xff]
    %v3031 = vld [vmem:[#allocation12 + $0x76c] sm:$0xf]
    %v3032 = vld [vmem:[#allocation12 + $0x770] sm:$0xff]
    %v3033 = vld [vmem:[#allocation12 + $0x778] sm:$0xff]
    %v3034 = vld [vmem:[#allocation12 + $0x780] sm:$0xff]
    %v3035 = vld [vmem:[#allocation12 + $0x788] sm:$0xf]
    %v3036 = vld [vmem:[#allocation12 + $0x78c] sm:$0xff]
    %v3037 = vld [vmem:[#allocation12 + $0x794] sm:$0xff]
    %v3038 = vld [vmem:[#allocation12 + $0x79c] sm:$0xff]
    %v3039 = vld [vmem:[#allocation12 + $0x7a4] sm:$0xf]
    %v3040 = vld [vmem:[#allocation12 + $0x7a8] sm:$0xff]
    %v3041 = vld [vmem:[#allocation12 + $0x7b0] sm:$0xff]
    %v3042 = vld [vmem:[#allocation12 + $0x7b8] sm:$0xff]
    %v3043 = vld [vmem:[#allocation12 + $0x7c0] sm:$0xf]
    %v3044 = vld [vmem:[#allocation12 + $0x7c4] sm:$0xff]
    %v3045 = vld [vmem:[#allocation12 + $0x7cc] sm:$0xff]
    %v3046 = vld [vmem:[#allocation12 + $0x7d4] sm:$0xff]
    %v3047 = vld [vmem:[#allocation12 + $0x7dc] sm:$0xf]
    %v3048 = vld [vmem:[#allocation12 + $0x7e0] sm:$0xff]
    %v3049 = vld [vmem:[#allocation12 + $0x7e8] sm:$0xff]
    %v3050 = vld [vmem:[#allocation12 + $0x7f0] sm:$0xff]
    %v3051 = vld [vmem:[#allocation12 + $0x7f8] sm:$0xf]
    %v3052 = vld [vmem:[#allocation12 + $0x7fc] sm:$0xff]
    %v3053 = vld [vmem:[#allocation12 + $0x804] sm:$0xff]
    %v3054 = vld [vmem:[#allocation12 + $0x80c] sm:$0xff]
    %v3055 = vld [vmem:[#allocation12 + $0x814] sm:$0xf]
    %v3056 = vld [vmem:[#allocation12 + $0x818] sm:$0xff]
    %v3057 = vld [vmem:[#allocation12 + $0x820] sm:$0xff]
    %v3058 = vld [vmem:[#allocation12 + $0x828] sm:$0xff]
    %v3059 = vld [vmem:[#allocation12 + $0x830] sm:$0xf]
    %v3060 = vld [vmem:[#allocation12 + $0x834] sm:$0xff]
    %v3061 = vld [vmem:[#allocation12 + $0x83c] sm:$0xff]
    %v3062 = vld [vmem:[#allocation12 + $0x844] sm:$0xff]
    %v3063 = vld [vmem:[#allocation12 + $0x84c] sm:$0xf]
    %v3064 = vld [vmem:[#allocation12 + $0x850] sm:$0xff]
    %v3065 = vld [vmem:[#allocation12 + $0x858] sm:$0xff]
    %v3066 = vld [vmem:[#allocation12 + $0x860] sm:$0xff]
    %v3067 = vld [vmem:[#allocation12 + $0x868] sm:$0xf]
    %v3068 = vld [vmem:[#allocation12 + $0x86c] sm:$0xff]
    %v3069 = vld [vmem:[#allocation12 + $0x874] sm:$0xff]
    %v3070 = vld [vmem:[#allocation12 + $0x87c] sm:$0xff]
    %v3071 = vld [vmem:[#allocation12 + $0x884] sm:$0xf]
    %v3072 = vld [vmem:[#allocation12 + $0x888] sm:$0xff]
    %v3073 = vld [vmem:[#allocation12 + $0x890] sm:$0xff]
    %v3074 = vld [vmem:[#allocation12 + $0x898] sm:$0xff]
    %v3075 = vld [vmem:[#allocation12 + $0x8a0] sm:$0xf]
    %v3076 = vld [vmem:[#allocation12 + $0x8a4] sm:$0xff]
    %v3077 = vld [vmem:[#allocation12 + $0x8ac] sm:$0xff]
    %v3078 = vld [vmem:[#allocation12 + $0x8b4] sm:$0xff]
    %v3079 = vld [vmem:[#allocation12 + $0x8bc] sm:$0xf]
    %v3080 = vld [vmem:[#allocation12 + $0x8c0] sm:$0xff]
    %v3081 = vld [vmem:[#allocation12 + $0x8c8] sm:$0xff]
    %v3082 = vld [vmem:[#allocation12 + $0x8d0] sm:$0xff]
    %v3083 = vld [vmem:[#allocation12 + $0x8d8] sm:$0xf]
    %v3084 = vld [vmem:[#allocation12 + $0x8dc] sm:$0xff]
    %v3085 = vld [vmem:[#allocation12 + $0x8e4] sm:$0xff]
    %v3086 = vld [vmem:[#allocation12 + $0x8ec] sm:$0xff]
    %v3087 = vld [vmem:[#allocation12 + $0x8f4] sm:$0xf]
    %v3088 = vld [vmem:[#allocation12 + $0x8f8] sm:$0xff]
    %v3089 = vld [vmem:[#allocation12 + $0x900] sm:$0xff]
    %v3090 = vld [vmem:[#allocation12 + $0x908] sm:$0xff]
    %v3091 = vld [vmem:[#allocation12 + $0x910] sm:$0xf]
    %v3092 = vld [vmem:[#allocation12 + $0x914] sm:$0xff]
    %v3093 = vld [vmem:[#allocation12 + $0x91c] sm:$0xff]
    %v3094 = vld [vmem:[#allocation12 + $0x924] sm:$0xff]
    %v3095 = vld [vmem:[#allocation12 + $0x92c] sm:$0xf]
    %v3096 = vld [vmem:[#allocation12 + $0x930] sm:$0xff]
    %v3097 = vld [vmem:[#allocation12 + $0x938] sm:$0xff]
    %v3098 = vld [vmem:[#allocation12 + $0x940] sm:$0xff]
    %v3099 = vld [vmem:[#allocation12 + $0x948] sm:$0xf]
    %v3100 = vld [vmem:[#allocation12 + $0x94c] sm:$0xff]
    %v3101 = vld [vmem:[#allocation12 + $0x954] sm:$0xff]
    %v3102 = vld [vmem:[#allocation12 + $0x95c] sm:$0xff]
    %v3103 = vld [vmem:[#allocation12 + $0x964] sm:$0xf]
    %v3104 = vld [vmem:[#allocation12 + $0x968] sm:$0xff]
    %v3105 = vld [vmem:[#allocation12 + $0x970] sm:$0xff]
    %v3106 = vld [vmem:[#allocation12 + $0x978] sm:$0xff]
    %v3107 = vld [vmem:[#allocation12 + $0x980] sm:$0xf]
    %v3108 = vld [vmem:[#allocation12 + $0x984] sm:$0xff]
    %v3109 = vld [vmem:[#allocation12 + $0x98c] sm:$0xff]
    %v3110 = vld [vmem:[#allocation12 + $0x994] sm:$0xff]
    %v3111 = vld [vmem:[#allocation12 + $0x99c] sm:$0xf]
    %v3112 = vld [vmem:[#allocation12 + $0x9a0] sm:$0xff]
    %v3113 = vld [vmem:[#allocation12 + $0x9a8] sm:$0xff]
    %v3114 = vld [vmem:[#allocation12 + $0x9b0] sm:$0xff]
    %v3115 = vld [vmem:[#allocation12 + $0x9b8] sm:$0xf]
    %v3116 = vld [vmem:[#allocation12 + $0x9bc] sm:$0xff]
    %v3117 = vld [vmem:[#allocation12 + $0x9c4] sm:$0xff]
    %v3118 = vld [vmem:[#allocation12 + $0x9cc] sm:$0xff]
    %v3119 = vld [vmem:[#allocation12 + $0x9d4] sm:$0xf]
    %v3120 = vld [vmem:[#allocation12 + $0x9d8] sm:$0xff]
    %v3121 = vld [vmem:[#allocation12 + $0x9e0] sm:$0xff]
    %v3122 = vld [vmem:[#allocation12 + $0x9e8] sm:$0xff]
    %v3123 = vld [vmem:[#allocation12 + $0x9f0] sm:$0xf]
    %v3124 = vld [vmem:[#allocation12 + $0x9f4] sm:$0xff]
    %v3125 = vld [vmem:[#allocation12 + $0x9fc] sm:$0xff]
    %v3126 = vld [vmem:[#allocation12 + $0xa04] sm:$0xff]
    %v3127 = vld [vmem:[#allocation12 + $0xa0c] sm:$0xf]
    %v3128 = vld [vmem:[#allocation12 + $0xa10] sm:$0xff]
    %v3129 = vld [vmem:[#allocation12 + $0xa18] sm:$0xff]
    %v3130 = vld [vmem:[#allocation12 + $0xa20] sm:$0xff]
    %v3131 = vld [vmem:[#allocation12 + $0xa28] sm:$0xf]
    %v3132 = vld [vmem:[#allocation12 + $0xa2c] sm:$0xff]
    %v3133 = vld [vmem:[#allocation12 + $0xa34] sm:$0xff]
    %v3134 = vld [vmem:[#allocation12 + $0xa3c] sm:$0xff]
    %v3135 = vld [vmem:[#allocation12 + $0xa44] sm:$0xf]
    %v3136 = vld [vmem:[#allocation12 + $0xa48] sm:$0xff]
    %v3137 = vld [vmem:[#allocation12 + $0xa50] sm:$0xff]
    %v3138 = vld [vmem:[#allocation12 + $0xa58] sm:$0xff]
    %v3139 = vld [vmem:[#allocation12 + $0xa60] sm:$0xf]
    %v3140 = vld [vmem:[#allocation12 + $0xa64] sm:$0xff]
    %v3141 = vld [vmem:[#allocation12 + $0xa6c] sm:$0xff]
    %v3142 = vld [vmem:[#allocation12 + $0xa74] sm:$0xff]
    %v3143 = vld [vmem:[#allocation12 + $0xa7c] sm:$0xf]
    %v3144 = vld [vmem:[#allocation12 + $0xa80] sm:$0xff]
    %v3145 = vld [vmem:[#allocation12 + $0xa88] sm:$0xff]
    %v3146 = vld [vmem:[#allocation12 + $0xa90] sm:$0xff]
    %v3147 = vld [vmem:[#allocation12 + $0xa98] sm:$0xf]
    %v3148 = vld [vmem:[#allocation12 + $0xa9c] sm:$0xff]
    %v3149 = vld [vmem:[#allocation12 + $0xaa4] sm:$0xff]
    %v3150 = vld [vmem:[#allocation12 + $0xaac] sm:$0xff]
    %v3151 = vld [vmem:[#allocation12 + $0xab4] sm:$0xf]
    %v3152 = vld [vmem:[#allocation12 + $0xab8] sm:$0xff]
    %v3153 = vld [vmem:[#allocation12 + $0xac0] sm:$0xff]
    %v3154 = vld [vmem:[#allocation12 + $0xac8] sm:$0xff]
    %v3155 = vld [vmem:[#allocation12 + $0xad0] sm:$0xf]
    %v3156 = vld [vmem:[#allocation12 + $0xad4] sm:$0xff]
    %v3157 = vld [vmem:[#allocation12 + $0xadc] sm:$0xff]
    %v3158 = vld [vmem:[#allocation12 + $0xae4] sm:$0xff]
    %v3159 = vld [vmem:[#allocation12 + $0xaec] sm:$0xf]
    %v3160 = vld [vmem:[#allocation12 + $0xaf0] sm:$0xff]
    %v3161 = vld [vmem:[#allocation12 + $0xaf8] sm:$0xff]
    %v3162 = vld [vmem:[#allocation12 + $0xb00] sm:$0xff]
    %v3163 = vld [vmem:[#allocation12 + $0xb08] sm:$0xf]
    %v3164 = vld [vmem:[#allocation12 + $0xb0c] sm:$0xff]
    %v3165 = vld [vmem:[#allocation12 + $0xb14] sm:$0xff]
    %v3166 = vld [vmem:[#allocation12 + $0xb1c] sm:$0xff]
    %v3167 = vld [vmem:[#allocation12 + $0xb24] sm:$0xf]
    %v3168 = vld [vmem:[#allocation12 + $0xb28] sm:$0xff]
    %v3169 = vld [vmem:[#allocation12 + $0xb30] sm:$0xff]
    %v3170 = vld [vmem:[#allocation12 + $0xb38] sm:$0xff]
    %v3171 = vld [vmem:[#allocation12 + $0xb40] sm:$0xf]
    %v3172 = vld [vmem:[#allocation12 + $0xb44] sm:$0xff]
    %v3173 = vld [vmem:[#allocation12 + $0xb4c] sm:$0xff]
    %v3174 = vld [vmem:[#allocation12 + $0xb54] sm:$0xff]
    %v3175 = vld [vmem:[#allocation12 + $0xb5c] sm:$0xf]
    %v3176 = vld [vmem:[#allocation12 + $0xb60] sm:$0xff]
    %v3177 = vld [vmem:[#allocation12 + $0xb68] sm:$0xff]
    %v3178 = vld [vmem:[#allocation12 + $0xb70] sm:$0xff]
    %v3179 = vld [vmem:[#allocation12 + $0xb78] sm:$0xf]
    %v3180 = vld [vmem:[#allocation12 + $0xb7c] sm:$0xff]
    %v3181 = vld [vmem:[#allocation12 + $0xb84] sm:$0xff]
    %v3182 = vld [vmem:[#allocation12 + $0xb8c] sm:$0xff]
    %v3183 = vld [vmem:[#allocation12 + $0xb94] sm:$0xf]
    %v3184 = vld [vmem:[#allocation12 + $0xb98] sm:$0xff]
    %v3185 = vld [vmem:[#allocation12 + $0xba0] sm:$0xff]
    %v3186 = vld [vmem:[#allocation12 + $0xba8] sm:$0xff]
    %v3187 = vld [vmem:[#allocation12 + $0xbb0] sm:$0xf]
    %v3188 = vld [vmem:[#allocation12 + $0xbb4] sm:$0xff]
    %v3189 = vld [vmem:[#allocation12 + $0xbbc] sm:$0xff]
    %v3190 = vld [vmem:[#allocation12 + $0xbc4] sm:$0xff]
    %v3191 = vld [vmem:[#allocation12 + $0xbcc] sm:$0xf]
    %v3192 = vld [vmem:[#allocation12 + $0xbd0] sm:$0xff]
    %v3193 = vld [vmem:[#allocation12 + $0xbd8] sm:$0xff]
    %v3194 = vld [vmem:[#allocation12 + $0xbe0] sm:$0xff]
    %v3195 = vld [vmem:[#allocation12 + $0xbe8] sm:$0xf]
    %v3196 = vld [vmem:[#allocation12 + $0xbec] sm:$0xff]
    %v3197 = vld [vmem:[#allocation12 + $0xbf4] sm:$0xff]
    %v3198 = vld [vmem:[#allocation12 + $0xbfc] sm:$0xff]
    %v3199 = vld [vmem:[#allocation12 + $0xc04] sm:$0xf]
    %v3200 = vld [vmem:[#allocation12 + $0xc08] sm:$0xff]
    %v3201 = vld [vmem:[#allocation12 + $0xc10] sm:$0xff]
    %v3202 = vld [vmem:[#allocation12 + $0xc18] sm:$0xff]
    %v3203 = vld [vmem:[#allocation12 + $0xc20] sm:$0xf]
    %v3204 = vld [vmem:[#allocation12 + $0xc24] sm:$0xff]
    %v3205 = vld [vmem:[#allocation12 + $0xc2c] sm:$0xff]
    %v3206 = vld [vmem:[#allocation12 + $0xc34] sm:$0xff]
    %v3207 = vld [vmem:[#allocation12 + $0xc3c] sm:$0xf]
    %v3208 = vld [vmem:[#allocation12 + $0xc40] sm:$0xff]
    %v3209 = vld [vmem:[#allocation12 + $0xc48] sm:$0xff]
    %v3210 = vld [vmem:[#allocation12 + $0xc50] sm:$0xff]
    %v3211 = vld [vmem:[#allocation12 + $0xc58] sm:$0xf]
    %v3212 = vld [vmem:[#allocation12 + $0xc5c] sm:$0xff]
    %v3213 = vld [vmem:[#allocation12 + $0xc64] sm:$0xff]
    %v3214 = vld [vmem:[#allocation12 + $0xc6c] sm:$0xff]
    %v3215 = vld [vmem:[#allocation12 + $0xc74] sm:$0xf]
    %v3216 = vld [vmem:[#allocation12 + $0xc78] sm:$0xff]
    %v3217 = vld [vmem:[#allocation12 + $0xc80] sm:$0xff]
    %v3218 = vld [vmem:[#allocation12 + $0xc88] sm:$0xff]
    %v3219 = vld [vmem:[#allocation12 + $0xc90] sm:$0xf]
    %v3220 = vld [vmem:[#allocation12 + $0xc94] sm:$0xff]
    %v3221 = vld [vmem:[#allocation12 + $0xc9c] sm:$0xff]
    %v3222 = vld [vmem:[#allocation12 + $0xca4] sm:$0xff]
    %v3223 = vld [vmem:[#allocation12 + $0xcac] sm:$0xf]
    %v3224 = vld [vmem:[#allocation12 + $0xcb0] sm:$0xff]
    %v3225 = vld [vmem:[#allocation12 + $0xcb8] sm:$0xff]
    %v3226 = vld [vmem:[#allocation12 + $0xcc0] sm:$0xff]
    %v3227 = vld [vmem:[#allocation12 + $0xcc8] sm:$0xf]
    %v3228 = vld [vmem:[#allocation12 + $0xccc] sm:$0xff]
    %v3229 = vld [vmem:[#allocation12 + $0xcd4] sm:$0xff]
    %v3230 = vld [vmem:[#allocation12 + $0xcdc] sm:$0xff]
    %v3231 = vld [vmem:[#allocation12 + $0xce4] sm:$0xf]
    %v3232 = vld [vmem:[#allocation12 + $0xce8] sm:$0xff]
    %v3233 = vld [vmem:[#allocation12 + $0xcf0] sm:$0xff]
    %v3234 = vld [vmem:[#allocation12 + $0xcf8] sm:$0xff]
    %v3235 = vld [vmem:[#allocation12 + $0xd00] sm:$0xf]
    %v3236 = vld [vmem:[#allocation12 + $0xd04] sm:$0xff]
    %v3237 = vld [vmem:[#allocation12 + $0xd0c] sm:$0xff]
    %v3238 = vld [vmem:[#allocation12 + $0xd14] sm:$0xff]
    %v3239 = vld [vmem:[#allocation12 + $0xd1c] sm:$0xf]
    %v3240 = vld [vmem:[#allocation12 + $0xd20] sm:$0xff]
    %v3241 = vld [vmem:[#allocation12 + $0xd28] sm:$0xff]
    %v3242 = vld [vmem:[#allocation12 + $0xd30] sm:$0xff]
    %v3243 = vld [vmem:[#allocation12 + $0xd38] sm:$0xf]
    %v3244 = vld [vmem:[#allocation12 + $0xd3c] sm:$0xff]
    %v3245 = vld [vmem:[#allocation12 + $0xd44] sm:$0xff]
    %v3246 = vld [vmem:[#allocation12 + $0xd4c] sm:$0xff]
    %v3247 = vld [vmem:[#allocation12 + $0xd54] sm:$0xf]
    %v3248 = vld [vmem:[#allocation12 + $0xd58] sm:$0xff]
    %v3249 = vld [vmem:[#allocation12 + $0xd60] sm:$0xff]
    %v3250 = vld [vmem:[#allocation12 + $0xd68] sm:$0xff]
    %v3251 = vld [vmem:[#allocation12 + $0xd70] sm:$0xf]
    %v3252 = vld [vmem:[#allocation12 + $0xd74] sm:$0xff]
    %v3253 = vld [vmem:[#allocation12 + $0xd7c] sm:$0xff]
    %v3254 = vld [vmem:[#allocation12 + $0xd84] sm:$0xff]
    %v3255 = vld [vmem:[#allocation12 + $0xd8c] sm:$0xf]
    %v3256 = vld [vmem:[#allocation12 + $0xd90] sm:$0xff]
    %v3257 = vld [vmem:[#allocation12 + $0xd98] sm:$0xff]
    %v3258 = vld [vmem:[#allocation12 + $0xda0] sm:$0xff]
    %v3259 = vld [vmem:[#allocation12 + $0xda8] sm:$0xf]
    %v3260 = vld [vmem:[#allocation12 + $0xdac] sm:$0xff]
    %v3261 = vld [vmem:[#allocation12 + $0xdb4] sm:$0xff]
    %v3262 = vld [vmem:[#allocation12 + $0xdbc] sm:$0xff]
    %v3263 = vld [vmem:[#allocation12 + $0xdc4] sm:$0xf]
    %v3264 = vld [vmem:[#allocation12 + $0xdc8] sm:$0xff]
    %v3265 = vld [vmem:[#allocation12 + $0xdd0] sm:$0xff]
    %v3266 = vld [vmem:[#allocation12 + $0xdd8] sm:$0xff]
    %v3267 = vld [vmem:[#allocation12 + $0xde0] sm:$0xf]
    %v3268 = vld [vmem:[#allocation12 + $0xde4] sm:$0xff]
    %v3269 = vld [vmem:[#allocation12 + $0xdec] sm:$0xff]
    %v3270 = vld [vmem:[#allocation12 + $0xdf4] sm:$0xff]
    %v3271 = vld [vmem:[#allocation12 + $0xdfc] sm:$0xf]
    %v3272 = vld [vmem:[#allocation13] sm:$0xff]
    %v3274 = vlaneseq
    %v3275 = vshrl.u32 %v3274, 7
    %v3276 = vsub.s32 0, %v3275
    %v3277 = vrot.slane %v3272, %v3276
    %v3278 = vlaneseq
    %v3279 = vshrl.u32 %v3278, 7
    %v3280 = vsub.s32 1, %v3279
    %v3281 = vrot.slane %v3272, %v3280
    %v3282 = vlaneseq
    %v3283 = vshrl.u32 %v3282, 7
    %v3284 = vsub.s32 2, %v3283
    %v3285 = vrot.slane %v3272, %v3284
    %v3286 = vlaneseq
    %v3287 = vshrl.u32 %v3286, 7
    %v3288 = vsub.s32 3, %v3287
    %v3289 = vrot.slane %v3272, %v3288
    %v3290 = vlaneseq
    %v3291 = vshrl.u32 %v3290, 7
    %v3292 = vsub.s32 4, %v3291
    %v3293 = vrot.slane %v3272, %v3292
    %v3294 = vlaneseq
    %v3295 = vshrl.u32 %v3294, 7
    %v3296 = vsub.s32 5, %v3295
    %v3297 = vrot.slane %v3272, %v3296
    %v3298 = vlaneseq
    %v3299 = vshrl.u32 %v3298, 7
    %v3300 = vsub.s32 6, %v3299
    %v3301 = vrot.slane %v3272, %v3300
    %v3821 = vunpack.c.l.b16 %v2760
    %v3822 = vunpack.c.h.b16 %v2760
    %v3823 = vunpack.c.l.b16 %v2761
    %v3824 = vunpack.c.h.b16 %v2761
    %v3825 = vunpack.c.l.b16 %v2762
    %v3826 = vunpack.c.h.b16 %v2762
    %v3827 = vunpack.c.l.b16 %v2763
    %v3828 = vunpack.c.l.b16 %v2764
    %v3829 = vunpack.c.h.b16 %v2764
    %v3830 = vunpack.c.l.b16 %v2765
    %v3831 = vunpack.c.h.b16 %v2765
    %v3832 = vunpack.c.l.b16 %v2766
    %v3833 = vunpack.c.h.b16 %v2766
    %v3834 = vunpack.c.l.b16 %v2767
    %v3835 = vunpack.c.l.b16 %v2768
    %v3836 = vunpack.c.h.b16 %v2768
    %v3837 = vunpack.c.l.b16 %v2769
    %v3838 = vunpack.c.h.b16 %v2769
    %v3839 = vunpack.c.l.b16 %v2770
    %v3840 = vunpack.c.h.b16 %v2770
    %v3841 = vunpack.c.l.b16 %v2771
    %v3842 = vunpack.c.l.b16 %v2772
    %v3843 = vunpack.c.h.b16 %v2772
    %v3844 = vunpack.c.l.b16 %v2773
    %v3845 = vunpack.c.h.b16 %v2773
    %v3846 = vunpack.c.l.b16 %v2774
    %v3847 = vunpack.c.h.b16 %v2774
    %v3848 = vunpack.c.l.b16 %v2775
    %v3849 = vunpack.c.l.b16 %v2776
    %v3850 = vunpack.c.h.b16 %v2776
    %v3851 = vunpack.c.l.b16 %v2777
    %v3852 = vunpack.c.h.b16 %v2777
    %v3853 = vunpack.c.l.b16 %v2778
    %v3854 = vunpack.c.h.b16 %v2778
    %v3855 = vunpack.c.l.b16 %v2779
    %v3856 = vunpack.c.l.b16 %v2780
    %v3857 = vunpack.c.h.b16 %v2780
    %v3858 = vunpack.c.l.b16 %v2781
    %v3859 = vunpack.c.h.b16 %v2781
    %v3860 = vunpack.c.l.b16 %v2782
    %v3861 = vunpack.c.h.b16 %v2782
    %v3862 = vunpack.c.l.b16 %v2783
    %v3863 = vunpack.c.l.b16 %v2784
    %v3864 = vunpack.c.h.b16 %v2784
    %v3865 = vunpack.c.l.b16 %v2785
    %v3866 = vunpack.c.h.b16 %v2785
    %v3867 = vunpack.c.l.b16 %v2786
    %v3868 = vunpack.c.h.b16 %v2786
    %v3869 = vunpack.c.l.b16 %v2787
    %v3870 = vunpack.c.l.b16 %v2788
    %v3871 = vunpack.c.h.b16 %v2788
    %v3872 = vunpack.c.l.b16 %v2789
    %v3873 = vunpack.c.h.b16 %v2789
    %v3874 = vunpack.c.l.b16 %v2790
    %v3875 = vunpack.c.h.b16 %v2790
    %v3876 = vunpack.c.l.b16 %v2791
    %v3877 = vunpack.c.l.b16 %v2792
    %v3878 = vunpack.c.h.b16 %v2792
    %v3879 = vunpack.c.l.b16 %v2793
    %v3880 = vunpack.c.h.b16 %v2793
    %v3881 = vunpack.c.l.b16 %v2794
    %v3882 = vunpack.c.h.b16 %v2794
    %v3883 = vunpack.c.l.b16 %v2795
    %v3884 = vunpack.c.l.b16 %v2796
    %v3885 = vunpack.c.h.b16 %v2796
    %v3886 = vunpack.c.l.b16 %v2797
    %v3887 = vunpack.c.h.b16 %v2797
    %v3888 = vunpack.c.l.b16 %v2798
    %v3889 = vunpack.c.h.b16 %v2798
    %v3890 = vunpack.c.l.b16 %v2799
    %v3891 = vunpack.c.l.b16 %v2800
    %v3892 = vunpack.c.h.b16 %v2800
    %v3893 = vunpack.c.l.b16 %v2801
    %v3894 = vunpack.c.h.b16 %v2801
    %v3895 = vunpack.c.l.b16 %v2802
    %v3896 = vunpack.c.h.b16 %v2802
    %v3897 = vunpack.c.l.b16 %v2803
    %v3898 = vunpack.c.l.b16 %v2804
    %v3899 = vunpack.c.h.b16 %v2804
    %v3900 = vunpack.c.l.b16 %v2805
    %v3901 = vunpack.c.h.b16 %v2805
    %v3902 = vunpack.c.l.b16 %v2806
    %v3903 = vunpack.c.h.b16 %v2806
    %v3904 = vunpack.c.l.b16 %v2807
    %v3905 = vunpack.c.l.b16 %v2808
    %v3906 = vunpack.c.h.b16 %v2808
    %v3907 = vunpack.c.l.b16 %v2809
    %v3908 = vunpack.c.h.b16 %v2809
    %v3909 = vunpack.c.l.b16 %v2810
    %v3910 = vunpack.c.h.b16 %v2810
    %v3911 = vunpack.c.l.b16 %v2811
    %v3912 = vunpack.c.l.b16 %v2812
    %v3913 = vunpack.c.h.b16 %v2812
    %v3914 = vunpack.c.l.b16 %v2813
    %v3915 = vunpack.c.h.b16 %v2813
    %v3916 = vunpack.c.l.b16 %v2814
    %v3917 = vunpack.c.h.b16 %v2814
    %v3918 = vunpack.c.l.b16 %v2815
    %v3919 = vunpack.c.l.b16 %v2816
    %v3920 = vunpack.c.h.b16 %v2816
    %v3921 = vunpack.c.l.b16 %v2817
    %v3922 = vunpack.c.h.b16 %v2817
    %v3923 = vunpack.c.l.b16 %v2818
    %v3924 = vunpack.c.h.b16 %v2818
    %v3925 = vunpack.c.l.b16 %v2819
    %v3926 = vunpack.c.l.b16 %v2820
    %v3927 = vunpack.c.h.b16 %v2820
    %v3928 = vunpack.c.l.b16 %v2821
    %v3929 = vunpack.c.h.b16 %v2821
    %v3930 = vunpack.c.l.b16 %v2822
    %v3931 = vunpack.c.h.b16 %v2822
    %v3932 = vunpack.c.l.b16 %v2823
    %v3933 = vunpack.c.l.b16 %v2824
    %v3934 = vunpack.c.h.b16 %v2824
    %v3935 = vunpack.c.l.b16 %v2825
    %v3936 = vunpack.c.h.b16 %v2825
    %v3937 = vunpack.c.l.b16 %v2826
    %v3938 = vunpack.c.h.b16 %v2826
    %v3939 = vunpack.c.l.b16 %v2827
    %v3940 = vunpack.c.l.b16 %v2828
    %v3941 = vunpack.c.h.b16 %v2828
    %v3942 = vunpack.c.l.b16 %v2829
    %v3943 = vunpack.c.h.b16 %v2829
    %v3944 = vunpack.c.l.b16 %v2830
    %v3945 = vunpack.c.h.b16 %v2830
    %v3946 = vunpack.c.l.b16 %v2831
    %v3947 = vunpack.c.l.b16 %v2832
    %v3948 = vunpack.c.h.b16 %v2832
    %v3949 = vunpack.c.l.b16 %v2833
    %v3950 = vunpack.c.h.b16 %v2833
    %v3951 = vunpack.c.l.b16 %v2834
    %v3952 = vunpack.c.h.b16 %v2834
    %v3953 = vunpack.c.l.b16 %v2835
    %v3954 = vunpack.c.l.b16 %v2836
    %v3955 = vunpack.c.h.b16 %v2836
    %v3956 = vunpack.c.l.b16 %v2837
    %v3957 = vunpack.c.h.b16 %v2837
    %v3958 = vunpack.c.l.b16 %v2838
    %v3959 = vunpack.c.h.b16 %v2838
    %v3960 = vunpack.c.l.b16 %v2839
    %v3961 = vunpack.c.l.b16 %v2840
    %v3962 = vunpack.c.h.b16 %v2840
    %v3963 = vunpack.c.l.b16 %v2841
    %v3964 = vunpack.c.h.b16 %v2841
    %v3965 = vunpack.c.l.b16 %v2842
    %v3966 = vunpack.c.h.b16 %v2842
    %v3967 = vunpack.c.l.b16 %v2843
    %v3968 = vunpack.c.l.b16 %v2844
    %v3969 = vunpack.c.h.b16 %v2844
    %v3970 = vunpack.c.l.b16 %v2845
    %v3971 = vunpack.c.h.b16 %v2845
    %v3972 = vunpack.c.l.b16 %v2846
    %v3973 = vunpack.c.h.b16 %v2846
    %v3974 = vunpack.c.l.b16 %v2847
    %v3975 = vunpack.c.l.b16 %v2848
    %v3976 = vunpack.c.h.b16 %v2848
    %v3977 = vunpack.c.l.b16 %v2849
    %v3978 = vunpack.c.h.b16 %v2849
    %v3979 = vunpack.c.l.b16 %v2850
    %v3980 = vunpack.c.h.b16 %v2850
    %v3981 = vunpack.c.l.b16 %v2851
    %v3982 = vunpack.c.l.b16 %v2852
    %v3983 = vunpack.c.h.b16 %v2852
    %v3984 = vunpack.c.l.b16 %v2853
    %v3985 = vunpack.c.h.b16 %v2853
    %v3986 = vunpack.c.l.b16 %v2854
    %v3987 = vunpack.c.h.b16 %v2854
    %v3988 = vunpack.c.l.b16 %v2855
    %v3989 = vunpack.c.l.b16 %v2856
    %v3990 = vunpack.c.h.b16 %v2856
    %v3991 = vunpack.c.l.b16 %v2857
    %v3992 = vunpack.c.h.b16 %v2857
    %v3993 = vunpack.c.l.b16 %v2858
    %v3994 = vunpack.c.h.b16 %v2858
    %v3995 = vunpack.c.l.b16 %v2859
    %v3996 = vunpack.c.l.b16 %v2860
    %v3997 = vunpack.c.h.b16 %v2860
    %v3998 = vunpack.c.l.b16 %v2861
    %v3999 = vunpack.c.h.b16 %v2861
    %v4000 = vunpack.c.l.b16 %v2862
    %v4001 = vunpack.c.h.b16 %v2862
    %v4002 = vunpack.c.l.b16 %v2863
    %v4003 = vunpack.c.l.b16 %v2864
    %v4004 = vunpack.c.h.b16 %v2864
    %v4005 = vunpack.c.l.b16 %v2865
    %v4006 = vunpack.c.h.b16 %v2865
    %v4007 = vunpack.c.l.b16 %v2866
    %v4008 = vunpack.c.h.b16 %v2866
    %v4009 = vunpack.c.l.b16 %v2867
    %v4010 = vunpack.c.l.b16 %v2868
    %v4011 = vunpack.c.h.b16 %v2868
    %v4012 = vunpack.c.l.b16 %v2869
    %v4013 = vunpack.c.h.b16 %v2869
    %v4014 = vunpack.c.l.b16 %v2870
    %v4015 = vunpack.c.h.b16 %v2870
    %v4016 = vunpack.c.l.b16 %v2871
    %v4017 = vunpack.c.l.b16 %v2872
    %v4018 = vunpack.c.h.b16 %v2872
    %v4019 = vunpack.c.l.b16 %v2873
    %v4020 = vunpack.c.h.b16 %v2873
    %v4021 = vunpack.c.l.b16 %v2874
    %v4022 = vunpack.c.h.b16 %v2874
    %v4023 = vunpack.c.l.b16 %v2875
    %v4024 = vunpack.c.l.b16 %v2876
    %v4025 = vunpack.c.h.b16 %v2876
    %v4026 = vunpack.c.l.b16 %v2877
    %v4027 = vunpack.c.h.b16 %v2877
    %v4028 = vunpack.c.l.b16 %v2878
    %v4029 = vunpack.c.h.b16 %v2878
    %v4030 = vunpack.c.l.b16 %v2879
    %v4031 = vunpack.c.l.b16 %v2880
    %v4032 = vunpack.c.h.b16 %v2880
    %v4033 = vunpack.c.l.b16 %v2881
    %v4034 = vunpack.c.h.b16 %v2881
    %v4035 = vunpack.c.l.b16 %v2882
    %v4036 = vunpack.c.h.b16 %v2882
    %v4037 = vunpack.c.l.b16 %v2883
    %v4038 = vunpack.c.l.b16 %v2884
    %v4039 = vunpack.c.h.b16 %v2884
    %v4040 = vunpack.c.l.b16 %v2885
    %v4041 = vunpack.c.h.b16 %v2885
    %v4042 = vunpack.c.l.b16 %v2886
    %v4043 = vunpack.c.h.b16 %v2886
    %v4044 = vunpack.c.l.b16 %v2887
    %v4045 = vunpack.c.l.b16 %v2888
    %v4046 = vunpack.c.h.b16 %v2888
    %v4047 = vunpack.c.l.b16 %v2889
    %v4048 = vunpack.c.h.b16 %v2889
    %v4049 = vunpack.c.l.b16 %v2890
    %v4050 = vunpack.c.h.b16 %v2890
    %v4051 = vunpack.c.l.b16 %v2891
    %v4052 = vunpack.c.l.b16 %v2892
    %v4053 = vunpack.c.h.b16 %v2892
    %v4054 = vunpack.c.l.b16 %v2893
    %v4055 = vunpack.c.h.b16 %v2893
    %v4056 = vunpack.c.l.b16 %v2894
    %v4057 = vunpack.c.h.b16 %v2894
    %v4058 = vunpack.c.l.b16 %v2895
    %v4059 = vunpack.c.l.b16 %v2896
    %v4060 = vunpack.c.h.b16 %v2896
    %v4061 = vunpack.c.l.b16 %v2897
    %v4062 = vunpack.c.h.b16 %v2897
    %v4063 = vunpack.c.l.b16 %v2898
    %v4064 = vunpack.c.h.b16 %v2898
    %v4065 = vunpack.c.l.b16 %v2899
    %v4066 = vunpack.c.l.b16 %v2900
    %v4067 = vunpack.c.h.b16 %v2900
    %v4068 = vunpack.c.l.b16 %v2901
    %v4069 = vunpack.c.h.b16 %v2901
    %v4070 = vunpack.c.l.b16 %v2902
    %v4071 = vunpack.c.h.b16 %v2902
    %v4072 = vunpack.c.l.b16 %v2903
    %v4073 = vunpack.c.l.b16 %v2904
    %v4074 = vunpack.c.h.b16 %v2904
    %v4075 = vunpack.c.l.b16 %v2905
    %v4076 = vunpack.c.h.b16 %v2905
    %v4077 = vunpack.c.l.b16 %v2906
    %v4078 = vunpack.c.h.b16 %v2906
    %v4079 = vunpack.c.l.b16 %v2907
    %v4080 = vunpack.c.l.b16 %v2908
    %v4081 = vunpack.c.h.b16 %v2908
    %v4082 = vunpack.c.l.b16 %v2909
    %v4083 = vunpack.c.h.b16 %v2909
    %v4084 = vunpack.c.l.b16 %v2910
    %v4085 = vunpack.c.h.b16 %v2910
    %v4086 = vunpack.c.l.b16 %v2911
    %v4087 = vunpack.c.l.b16 %v2912
    %v4088 = vunpack.c.h.b16 %v2912
    %v4089 = vunpack.c.l.b16 %v2913
    %v4090 = vunpack.c.h.b16 %v2913
    %v4091 = vunpack.c.l.b16 %v2914
    %v4092 = vunpack.c.h.b16 %v2914
    %v4093 = vunpack.c.l.b16 %v2915
    %v4094 = vunpack.c.l.b16 %v2916
    %v4095 = vunpack.c.h.b16 %v2916
    %v4096 = vunpack.c.l.b16 %v2917
    %v4097 = vunpack.c.h.b16 %v2917
    %v4098 = vunpack.c.l.b16 %v2918
    %v4099 = vunpack.c.h.b16 %v2918
    %v4100 = vunpack.c.l.b16 %v2919
    %v4101 = vunpack.c.l.b16 %v2920
    %v4102 = vunpack.c.h.b16 %v2920
    %v4103 = vunpack.c.l.b16 %v2921
    %v4104 = vunpack.c.h.b16 %v2921
    %v4105 = vunpack.c.l.b16 %v2922
    %v4106 = vunpack.c.h.b16 %v2922
    %v4107 = vunpack.c.l.b16 %v2923
    %v4108 = vunpack.c.l.b16 %v2924
    %v4109 = vunpack.c.h.b16 %v2924
    %v4110 = vunpack.c.l.b16 %v2925
    %v4111 = vunpack.c.h.b16 %v2925
    %v4112 = vunpack.c.l.b16 %v2926
    %v4113 = vunpack.c.h.b16 %v2926
    %v4114 = vunpack.c.l.b16 %v2927
    %v4115 = vunpack.c.l.b16 %v2928
    %v4116 = vunpack.c.h.b16 %v2928
    %v4117 = vunpack.c.l.b16 %v2929
    %v4118 = vunpack.c.h.b16 %v2929
    %v4119 = vunpack.c.l.b16 %v2930
    %v4120 = vunpack.c.h.b16 %v2930
    %v4121 = vunpack.c.l.b16 %v2931
    %v4122 = vunpack.c.l.b16 %v2932
    %v4123 = vunpack.c.h.b16 %v2932
    %v4124 = vunpack.c.l.b16 %v2933
    %v4125 = vunpack.c.h.b16 %v2933
    %v4126 = vunpack.c.l.b16 %v2934
    %v4127 = vunpack.c.h.b16 %v2934
    %v4128 = vunpack.c.l.b16 %v2935
    %v4129 = vunpack.c.l.b16 %v2936
    %v4130 = vunpack.c.h.b16 %v2936
    %v4131 = vunpack.c.l.b16 %v2937
    %v4132 = vunpack.c.h.b16 %v2937
    %v4133 = vunpack.c.l.b16 %v2938
    %v4134 = vunpack.c.h.b16 %v2938
    %v4135 = vunpack.c.l.b16 %v2939
    %v4136 = vunpack.c.l.b16 %v2940
    %v4137 = vunpack.c.h.b16 %v2940
    %v4138 = vunpack.c.l.b16 %v2941
    %v4139 = vunpack.c.h.b16 %v2941
    %v4140 = vunpack.c.l.b16 %v2942
    %v4141 = vunpack.c.h.b16 %v2942
    %v4142 = vunpack.c.l.b16 %v2943
    %v4143 = vunpack.c.l.b16 %v2944
    %v4144 = vunpack.c.h.b16 %v2944
    %v4145 = vunpack.c.l.b16 %v2945
    %v4146 = vunpack.c.h.b16 %v2945
    %v4147 = vunpack.c.l.b16 %v2946
    %v4148 = vunpack.c.h.b16 %v2946
    %v4149 = vunpack.c.l.b16 %v2947
    %v4150 = vunpack.c.l.b16 %v2948
    %v4151 = vunpack.c.h.b16 %v2948
    %v4152 = vunpack.c.l.b16 %v2949
    %v4153 = vunpack.c.h.b16 %v2949
    %v4154 = vunpack.c.l.b16 %v2950
    %v4155 = vunpack.c.h.b16 %v2950
    %v4156 = vunpack.c.l.b16 %v2951
    %v4157 = vunpack.c.l.b16 %v2952
    %v4158 = vunpack.c.h.b16 %v2952
    %v4159 = vunpack.c.l.b16 %v2953
    %v4160 = vunpack.c.h.b16 %v2953
    %v4161 = vunpack.c.l.b16 %v2954
    %v4162 = vunpack.c.h.b16 %v2954
    %v4163 = vunpack.c.l.b16 %v2955
    %v4164 = vunpack.c.l.b16 %v2956
    %v4165 = vunpack.c.h.b16 %v2956
    %v4166 = vunpack.c.l.b16 %v2957
    %v4167 = vunpack.c.h.b16 %v2957
    %v4168 = vunpack.c.l.b16 %v2958
    %v4169 = vunpack.c.h.b16 %v2958
    %v4170 = vunpack.c.l.b16 %v2959
    %v4171 = vunpack.c.l.b16 %v2960
    %v4172 = vunpack.c.h.b16 %v2960
    %v4173 = vunpack.c.l.b16 %v2961
    %v4174 = vunpack.c.h.b16 %v2961
    %v4175 = vunpack.c.l.b16 %v2962
    %v4176 = vunpack.c.h.b16 %v2962
    %v4177 = vunpack.c.l.b16 %v2963
    %v4178 = vunpack.c.l.b16 %v2964
    %v4179 = vunpack.c.h.b16 %v2964
    %v4180 = vunpack.c.l.b16 %v2965
    %v4181 = vunpack.c.h.b16 %v2965
    %v4182 = vunpack.c.l.b16 %v2966
    %v4183 = vunpack.c.h.b16 %v2966
    %v4184 = vunpack.c.l.b16 %v2967
    %v4185 = vunpack.c.l.b16 %v2968
    %v4186 = vunpack.c.h.b16 %v2968
    %v4187 = vunpack.c.l.b16 %v2969
    %v4188 = vunpack.c.h.b16 %v2969
    %v4189 = vunpack.c.l.b16 %v2970
    %v4190 = vunpack.c.h.b16 %v2970
    %v4191 = vunpack.c.l.b16 %v2971
    %v4192 = vunpack.c.l.b16 %v2972
    %v4193 = vunpack.c.h.b16 %v2972
    %v4194 = vunpack.c.l.b16 %v2973
    %v4195 = vunpack.c.h.b16 %v2973
    %v4196 = vunpack.c.l.b16 %v2974
    %v4197 = vunpack.c.h.b16 %v2974
    %v4198 = vunpack.c.l.b16 %v2975
    %v4199 = vunpack.c.l.b16 %v2976
    %v4200 = vunpack.c.h.b16 %v2976
    %v4201 = vunpack.c.l.b16 %v2977
    %v4202 = vunpack.c.h.b16 %v2977
    %v4203 = vunpack.c.l.b16 %v2978
    %v4204 = vunpack.c.h.b16 %v2978
    %v4205 = vunpack.c.l.b16 %v2979
    %v4206 = vunpack.c.l.b16 %v2980
    %v4207 = vunpack.c.h.b16 %v2980
    %v4208 = vunpack.c.l.b16 %v2981
    %v4209 = vunpack.c.h.b16 %v2981
    %v4210 = vunpack.c.l.b16 %v2982
    %v4211 = vunpack.c.h.b16 %v2982
    %v4212 = vunpack.c.l.b16 %v2983
    %v4213 = vunpack.c.l.b16 %v2984
    %v4214 = vunpack.c.h.b16 %v2984
    %v4215 = vunpack.c.l.b16 %v2985
    %v4216 = vunpack.c.h.b16 %v2985
    %v4217 = vunpack.c.l.b16 %v2986
    %v4218 = vunpack.c.h.b16 %v2986
    %v4219 = vunpack.c.l.b16 %v2987
    %v4220 = vunpack.c.l.b16 %v2988
    %v4221 = vunpack.c.h.b16 %v2988
    %v4222 = vunpack.c.l.b16 %v2989
    %v4223 = vunpack.c.h.b16 %v2989
    %v4224 = vunpack.c.l.b16 %v2990
    %v4225 = vunpack.c.h.b16 %v2990
    %v4226 = vunpack.c.l.b16 %v2991
    %v4227 = vunpack.c.l.b16 %v2992
    %v4228 = vunpack.c.h.b16 %v2992
    %v4229 = vunpack.c.l.b16 %v2993
    %v4230 = vunpack.c.h.b16 %v2993
    %v4231 = vunpack.c.l.b16 %v2994
    %v4232 = vunpack.c.h.b16 %v2994
    %v4233 = vunpack.c.l.b16 %v2995
    %v4234 = vunpack.c.l.b16 %v2996
    %v4235 = vunpack.c.h.b16 %v2996
    %v4236 = vunpack.c.l.b16 %v2997
    %v4237 = vunpack.c.h.b16 %v2997
    %v4238 = vunpack.c.l.b16 %v2998
    %v4239 = vunpack.c.h.b16 %v2998
    %v4240 = vunpack.c.l.b16 %v2999
    %v4241 = vunpack.c.l.b16 %v3000
    %v4242 = vunpack.c.h.b16 %v3000
    %v4243 = vunpack.c.l.b16 %v3001
    %v4244 = vunpack.c.h.b16 %v3001
    %v4245 = vunpack.c.l.b16 %v3002
    %v4246 = vunpack.c.h.b16 %v3002
    %v4247 = vunpack.c.l.b16 %v3003
    %v4248 = vunpack.c.l.b16 %v3004
    %v4249 = vunpack.c.h.b16 %v3004
    %v4250 = vunpack.c.l.b16 %v3005
    %v4251 = vunpack.c.h.b16 %v3005
    %v4252 = vunpack.c.l.b16 %v3006
    %v4253 = vunpack.c.h.b16 %v3006
    %v4254 = vunpack.c.l.b16 %v3007
    %v4255 = vunpack.c.l.b16 %v3008
    %v4256 = vunpack.c.h.b16 %v3008
    %v4257 = vunpack.c.l.b16 %v3009
    %v4258 = vunpack.c.h.b16 %v3009
    %v4259 = vunpack.c.l.b16 %v3010
    %v4260 = vunpack.c.h.b16 %v3010
    %v4261 = vunpack.c.l.b16 %v3011
    %v4262 = vunpack.c.l.b16 %v3012
    %v4263 = vunpack.c.h.b16 %v3012
    %v4264 = vunpack.c.l.b16 %v3013
    %v4265 = vunpack.c.h.b16 %v3013
    %v4266 = vunpack.c.l.b16 %v3014
    %v4267 = vunpack.c.h.b16 %v3014
    %v4268 = vunpack.c.l.b16 %v3015
    %v4269 = vunpack.c.l.b16 %v3016
    %v4270 = vunpack.c.h.b16 %v3016
    %v4271 = vunpack.c.l.b16 %v3017
    %v4272 = vunpack.c.h.b16 %v3017
    %v4273 = vunpack.c.l.b16 %v3018
    %v4274 = vunpack.c.h.b16 %v3018
    %v4275 = vunpack.c.l.b16 %v3019
    %v4276 = vunpack.c.l.b16 %v3020
    %v4277 = vunpack.c.h.b16 %v3020
    %v4278 = vunpack.c.l.b16 %v3021
    %v4279 = vunpack.c.h.b16 %v3021
    %v4280 = vunpack.c.l.b16 %v3022
    %v4281 = vunpack.c.h.b16 %v3022
    %v4282 = vunpack.c.l.b16 %v3023
    %v4283 = vunpack.c.l.b16 %v3024
    %v4284 = vunpack.c.h.b16 %v3024
    %v4285 = vunpack.c.l.b16 %v3025
    %v4286 = vunpack.c.h.b16 %v3025
    %v4287 = vunpack.c.l.b16 %v3026
    %v4288 = vunpack.c.h.b16 %v3026
    %v4289 = vunpack.c.l.b16 %v3027
    %v4290 = vunpack.c.l.b16 %v3028
    %v4291 = vunpack.c.h.b16 %v3028
    %v4292 = vunpack.c.l.b16 %v3029
    %v4293 = vunpack.c.h.b16 %v3029
    %v4294 = vunpack.c.l.b16 %v3030
    %v4295 = vunpack.c.h.b16 %v3030
    %v4296 = vunpack.c.l.b16 %v3031
    %v4297 = vunpack.c.l.b16 %v3032
    %v4298 = vunpack.c.h.b16 %v3032
    %v4299 = vunpack.c.l.b16 %v3033
    %v4300 = vunpack.c.h.b16 %v3033
    %v4301 = vunpack.c.l.b16 %v3034
    %v4302 = vunpack.c.h.b16 %v3034
    %v4303 = vunpack.c.l.b16 %v3035
    %v4304 = vunpack.c.l.b16 %v3036
    %v4305 = vunpack.c.h.b16 %v3036
    %v4306 = vunpack.c.l.b16 %v3037
    %v4307 = vunpack.c.h.b16 %v3037
    %v4308 = vunpack.c.l.b16 %v3038
    %v4309 = vunpack.c.h.b16 %v3038
    %v4310 = vunpack.c.l.b16 %v3039
    %v4311 = vunpack.c.l.b16 %v3040
    %v4312 = vunpack.c.h.b16 %v3040
    %v4313 = vunpack.c.l.b16 %v3041
    %v4314 = vunpack.c.h.b16 %v3041
    %v4315 = vunpack.c.l.b16 %v3042
    %v4316 = vunpack.c.h.b16 %v3042
    %v4317 = vunpack.c.l.b16 %v3043
    %v4318 = vunpack.c.l.b16 %v3044
    %v4319 = vunpack.c.h.b16 %v3044
    %v4320 = vunpack.c.l.b16 %v3045
    %v4321 = vunpack.c.h.b16 %v3045
    %v4322 = vunpack.c.l.b16 %v3046
    %v4323 = vunpack.c.h.b16 %v3046
    %v4324 = vunpack.c.l.b16 %v3047
    %v4325 = vunpack.c.l.b16 %v3048
    %v4326 = vunpack.c.h.b16 %v3048
    %v4327 = vunpack.c.l.b16 %v3049
    %v4328 = vunpack.c.h.b16 %v3049
    %v4329 = vunpack.c.l.b16 %v3050
    %v4330 = vunpack.c.h.b16 %v3050
    %v4331 = vunpack.c.l.b16 %v3051
    %v4332 = vunpack.c.l.b16 %v3052
    %v4333 = vunpack.c.h.b16 %v3052
    %v4334 = vunpack.c.l.b16 %v3053
    %v4335 = vunpack.c.h.b16 %v3053
    %v4336 = vunpack.c.l.b16 %v3054
    %v4337 = vunpack.c.h.b16 %v3054
    %v4338 = vunpack.c.l.b16 %v3055
    %v4339 = vunpack.c.l.b16 %v3056
    %v4340 = vunpack.c.h.b16 %v3056
    %v4341 = vunpack.c.l.b16 %v3057
    %v4342 = vunpack.c.h.b16 %v3057
    %v4343 = vunpack.c.l.b16 %v3058
    %v4344 = vunpack.c.h.b16 %v3058
    %v4345 = vunpack.c.l.b16 %v3059
    %v4346 = vunpack.c.l.b16 %v3060
    %v4347 = vunpack.c.h.b16 %v3060
    %v4348 = vunpack.c.l.b16 %v3061
    %v4349 = vunpack.c.h.b16 %v3061
    %v4350 = vunpack.c.l.b16 %v3062
    %v4351 = vunpack.c.h.b16 %v3062
    %v4352 = vunpack.c.l.b16 %v3063
    %v4353 = vunpack.c.l.b16 %v3064
    %v4354 = vunpack.c.h.b16 %v3064
    %v4355 = vunpack.c.l.b16 %v3065
    %v4356 = vunpack.c.h.b16 %v3065
    %v4357 = vunpack.c.l.b16 %v3066
    %v4358 = vunpack.c.h.b16 %v3066
    %v4359 = vunpack.c.l.b16 %v3067
    %v4360 = vunpack.c.l.b16 %v3068
    %v4361 = vunpack.c.h.b16 %v3068
    %v4362 = vunpack.c.l.b16 %v3069
    %v4363 = vunpack.c.h.b16 %v3069
    %v4364 = vunpack.c.l.b16 %v3070
    %v4365 = vunpack.c.h.b16 %v3070
    %v4366 = vunpack.c.l.b16 %v3071
    %v4367 = vunpack.c.l.b16 %v3072
    %v4368 = vunpack.c.h.b16 %v3072
    %v4369 = vunpack.c.l.b16 %v3073
    %v4370 = vunpack.c.h.b16 %v3073
    %v4371 = vunpack.c.l.b16 %v3074
    %v4372 = vunpack.c.h.b16 %v3074
    %v4373 = vunpack.c.l.b16 %v3075
    %v4374 = vunpack.c.l.b16 %v3076
    %v4375 = vunpack.c.h.b16 %v3076
    %v4376 = vunpack.c.l.b16 %v3077
    %v4377 = vunpack.c.h.b16 %v3077
    %v4378 = vunpack.c.l.b16 %v3078
    %v4379 = vunpack.c.h.b16 %v3078
    %v4380 = vunpack.c.l.b16 %v3079
    %v4381 = vunpack.c.l.b16 %v3080
    %v4382 = vunpack.c.h.b16 %v3080
    %v4383 = vunpack.c.l.b16 %v3081
    %v4384 = vunpack.c.h.b16 %v3081
    %v4385 = vunpack.c.l.b16 %v3082
    %v4386 = vunpack.c.h.b16 %v3082
    %v4387 = vunpack.c.l.b16 %v3083
    %v4388 = vunpack.c.l.b16 %v3084
    %v4389 = vunpack.c.h.b16 %v3084
    %v4390 = vunpack.c.l.b16 %v3085
    %v4391 = vunpack.c.h.b16 %v3085
    %v4392 = vunpack.c.l.b16 %v3086
    %v4393 = vunpack.c.h.b16 %v3086
    %v4394 = vunpack.c.l.b16 %v3087
    %v4395 = vunpack.c.l.b16 %v3088
    %v4396 = vunpack.c.h.b16 %v3088
    %v4397 = vunpack.c.l.b16 %v3089
    %v4398 = vunpack.c.h.b16 %v3089
    %v4399 = vunpack.c.l.b16 %v3090
    %v4400 = vunpack.c.h.b16 %v3090
    %v4401 = vunpack.c.l.b16 %v3091
    %v4402 = vunpack.c.l.b16 %v3092
    %v4403 = vunpack.c.h.b16 %v3092
    %v4404 = vunpack.c.l.b16 %v3093
    %v4405 = vunpack.c.h.b16 %v3093
    %v4406 = vunpack.c.l.b16 %v3094
    %v4407 = vunpack.c.h.b16 %v3094
    %v4408 = vunpack.c.l.b16 %v3095
    %v4409 = vunpack.c.l.b16 %v3096
    %v4410 = vunpack.c.h.b16 %v3096
    %v4411 = vunpack.c.l.b16 %v3097
    %v4412 = vunpack.c.h.b16 %v3097
    %v4413 = vunpack.c.l.b16 %v3098
    %v4414 = vunpack.c.h.b16 %v3098
    %v4415 = vunpack.c.l.b16 %v3099
    %v4416 = vunpack.c.l.b16 %v3100
    %v4417 = vunpack.c.h.b16 %v3100
    %v4418 = vunpack.c.l.b16 %v3101
    %v4419 = vunpack.c.h.b16 %v3101
    %v4420 = vunpack.c.l.b16 %v3102
    %v4421 = vunpack.c.h.b16 %v3102
    %v4422 = vunpack.c.l.b16 %v3103
    %v4423 = vunpack.c.l.b16 %v3104
    %v4424 = vunpack.c.h.b16 %v3104
    %v4425 = vunpack.c.l.b16 %v3105
    %v4426 = vunpack.c.h.b16 %v3105
    %v4427 = vunpack.c.l.b16 %v3106
    %v4428 = vunpack.c.h.b16 %v3106
    %v4429 = vunpack.c.l.b16 %v3107
    %v4430 = vunpack.c.l.b16 %v3108
    %v4431 = vunpack.c.h.b16 %v3108
    %v4432 = vunpack.c.l.b16 %v3109
    %v4433 = vunpack.c.h.b16 %v3109
    %v4434 = vunpack.c.l.b16 %v3110
    %v4435 = vunpack.c.h.b16 %v3110
    %v4436 = vunpack.c.l.b16 %v3111
    %v4437 = vunpack.c.l.b16 %v3112
    %v4438 = vunpack.c.h.b16 %v3112
    %v4439 = vunpack.c.l.b16 %v3113
    %v4440 = vunpack.c.h.b16 %v3113
    %v4441 = vunpack.c.l.b16 %v3114
    %v4442 = vunpack.c.h.b16 %v3114
    %v4443 = vunpack.c.l.b16 %v3115
    %v4444 = vunpack.c.l.b16 %v3116
    %v4445 = vunpack.c.h.b16 %v3116
    %v4446 = vunpack.c.l.b16 %v3117
    %v4447 = vunpack.c.h.b16 %v3117
    %v4448 = vunpack.c.l.b16 %v3118
    %v4449 = vunpack.c.h.b16 %v3118
    %v4450 = vunpack.c.l.b16 %v3119
    %v4451 = vunpack.c.l.b16 %v3120
    %v4452 = vunpack.c.h.b16 %v3120
    %v4453 = vunpack.c.l.b16 %v3121
    %v4454 = vunpack.c.h.b16 %v3121
    %v4455 = vunpack.c.l.b16 %v3122
    %v4456 = vunpack.c.h.b16 %v3122
    %v4457 = vunpack.c.l.b16 %v3123
    %v4458 = vunpack.c.l.b16 %v3124
    %v4459 = vunpack.c.h.b16 %v3124
    %v4460 = vunpack.c.l.b16 %v3125
    %v4461 = vunpack.c.h.b16 %v3125
    %v4462 = vunpack.c.l.b16 %v3126
    %v4463 = vunpack.c.h.b16 %v3126
    %v4464 = vunpack.c.l.b16 %v3127
    %v4465 = vunpack.c.l.b16 %v3128
    %v4466 = vunpack.c.h.b16 %v3128
    %v4467 = vunpack.c.l.b16 %v3129
    %v4468 = vunpack.c.h.b16 %v3129
    %v4469 = vunpack.c.l.b16 %v3130
    %v4470 = vunpack.c.h.b16 %v3130
    %v4471 = vunpack.c.l.b16 %v3131
    %v4472 = vunpack.c.l.b16 %v3132
    %v4473 = vunpack.c.h.b16 %v3132
    %v4474 = vunpack.c.l.b16 %v3133
    %v4475 = vunpack.c.h.b16 %v3133
    %v4476 = vunpack.c.l.b16 %v3134
    %v4477 = vunpack.c.h.b16 %v3134
    %v4478 = vunpack.c.l.b16 %v3135
    %v4479 = vunpack.c.l.b16 %v3136
    %v4480 = vunpack.c.h.b16 %v3136
    %v4481 = vunpack.c.l.b16 %v3137
    %v4482 = vunpack.c.h.b16 %v3137
    %v4483 = vunpack.c.l.b16 %v3138
    %v4484 = vunpack.c.h.b16 %v3138
    %v4485 = vunpack.c.l.b16 %v3139
    %v4486 = vunpack.c.l.b16 %v3140
    %v4487 = vunpack.c.h.b16 %v3140
    %v4488 = vunpack.c.l.b16 %v3141
    %v4489 = vunpack.c.h.b16 %v3141
    %v4490 = vunpack.c.l.b16 %v3142
    %v4491 = vunpack.c.h.b16 %v3142
    %v4492 = vunpack.c.l.b16 %v3143
    %v4493 = vunpack.c.l.b16 %v3144
    %v4494 = vunpack.c.h.b16 %v3144
    %v4495 = vunpack.c.l.b16 %v3145
    %v4496 = vunpack.c.h.b16 %v3145
    %v4497 = vunpack.c.l.b16 %v3146
    %v4498 = vunpack.c.h.b16 %v3146
    %v4499 = vunpack.c.l.b16 %v3147
    %v4500 = vunpack.c.l.b16 %v3148
    %v4501 = vunpack.c.h.b16 %v3148
    %v4502 = vunpack.c.l.b16 %v3149
    %v4503 = vunpack.c.h.b16 %v3149
    %v4504 = vunpack.c.l.b16 %v3150
    %v4505 = vunpack.c.h.b16 %v3150
    %v4506 = vunpack.c.l.b16 %v3151
    %v4507 = vunpack.c.l.b16 %v3152
    %v4508 = vunpack.c.h.b16 %v3152
    %v4509 = vunpack.c.l.b16 %v3153
    %v4510 = vunpack.c.h.b16 %v3153
    %v4511 = vunpack.c.l.b16 %v3154
    %v4512 = vunpack.c.h.b16 %v3154
    %v4513 = vunpack.c.l.b16 %v3155
    %v4514 = vunpack.c.l.b16 %v3156
    %v4515 = vunpack.c.h.b16 %v3156
    %v4516 = vunpack.c.l.b16 %v3157
    %v4517 = vunpack.c.h.b16 %v3157
    %v4518 = vunpack.c.l.b16 %v3158
    %v4519 = vunpack.c.h.b16 %v3158
    %v4520 = vunpack.c.l.b16 %v3159
    %v4521 = vunpack.c.l.b16 %v3160
    %v4522 = vunpack.c.h.b16 %v3160
    %v4523 = vunpack.c.l.b16 %v3161
    %v4524 = vunpack.c.h.b16 %v3161
    %v4525 = vunpack.c.l.b16 %v3162
    %v4526 = vunpack.c.h.b16 %v3162
    %v4527 = vunpack.c.l.b16 %v3163
    %v4528 = vunpack.c.l.b16 %v3164
    %v4529 = vunpack.c.h.b16 %v3164
    %v4530 = vunpack.c.l.b16 %v3165
    %v4531 = vunpack.c.h.b16 %v3165
    %v4532 = vunpack.c.l.b16 %v3166
    %v4533 = vunpack.c.h.b16 %v3166
    %v4534 = vunpack.c.l.b16 %v3167
    %v4535 = vunpack.c.l.b16 %v3168
    %v4536 = vunpack.c.h.b16 %v3168
    %v4537 = vunpack.c.l.b16 %v3169
    %v4538 = vunpack.c.h.b16 %v3169
    %v4539 = vunpack.c.l.b16 %v3170
    %v4540 = vunpack.c.h.b16 %v3170
    %v4541 = vunpack.c.l.b16 %v3171
    %v4542 = vunpack.c.l.b16 %v3172
    %v4543 = vunpack.c.h.b16 %v3172
    %v4544 = vunpack.c.l.b16 %v3173
    %v4545 = vunpack.c.h.b16 %v3173
    %v4546 = vunpack.c.l.b16 %v3174
    %v4547 = vunpack.c.h.b16 %v3174
    %v4548 = vunpack.c.l.b16 %v3175
    %v4549 = vunpack.c.l.b16 %v3176
    %v4550 = vunpack.c.h.b16 %v3176
    %v4551 = vunpack.c.l.b16 %v3177
    %v4552 = vunpack.c.h.b16 %v3177
    %v4553 = vunpack.c.l.b16 %v3178
    %v4554 = vunpack.c.h.b16 %v3178
    %v4555 = vunpack.c.l.b16 %v3179
    %v4556 = vunpack.c.l.b16 %v3180
    %v4557 = vunpack.c.h.b16 %v3180
    %v4558 = vunpack.c.l.b16 %v3181
    %v4559 = vunpack.c.h.b16 %v3181
    %v4560 = vunpack.c.l.b16 %v3182
    %v4561 = vunpack.c.h.b16 %v3182
    %v4562 = vunpack.c.l.b16 %v3183
    %v4563 = vunpack.c.l.b16 %v3184
    %v4564 = vunpack.c.h.b16 %v3184
    %v4565 = vunpack.c.l.b16 %v3185
    %v4566 = vunpack.c.h.b16 %v3185
    %v4567 = vunpack.c.l.b16 %v3186
    %v4568 = vunpack.c.h.b16 %v3186
    %v4569 = vunpack.c.l.b16 %v3187
    %v4570 = vunpack.c.l.b16 %v3188
    %v4571 = vunpack.c.h.b16 %v3188
    %v4572 = vunpack.c.l.b16 %v3189
    %v4573 = vunpack.c.h.b16 %v3189
    %v4574 = vunpack.c.l.b16 %v3190
    %v4575 = vunpack.c.h.b16 %v3190
    %v4576 = vunpack.c.l.b16 %v3191
    %v4577 = vunpack.c.l.b16 %v3192
    %v4578 = vunpack.c.h.b16 %v3192
    %v4579 = vunpack.c.l.b16 %v3193
    %v4580 = vunpack.c.h.b16 %v3193
    %v4581 = vunpack.c.l.b16 %v3194
    %v4582 = vunpack.c.h.b16 %v3194
    %v4583 = vunpack.c.l.b16 %v3195
    %v4584 = vunpack.c.l.b16 %v3196
    %v4585 = vunpack.c.h.b16 %v3196
    %v4586 = vunpack.c.l.b16 %v3197
    %v4587 = vunpack.c.h.b16 %v3197
    %v4588 = vunpack.c.l.b16 %v3198
    %v4589 = vunpack.c.h.b16 %v3198
    %v4590 = vunpack.c.l.b16 %v3199
    %v4591 = vunpack.c.l.b16 %v3200
    %v4592 = vunpack.c.h.b16 %v3200
    %v4593 = vunpack.c.l.b16 %v3201
    %v4594 = vunpack.c.h.b16 %v3201
    %v4595 = vunpack.c.l.b16 %v3202
    %v4596 = vunpack.c.h.b16 %v3202
    %v4597 = vunpack.c.l.b16 %v3203
    %v4598 = vunpack.c.l.b16 %v3204
    %v4599 = vunpack.c.h.b16 %v3204
    %v4600 = vunpack.c.l.b16 %v3205
    %v4601 = vunpack.c.h.b16 %v3205
    %v4602 = vunpack.c.l.b16 %v3206
    %v4603 = vunpack.c.h.b16 %v3206
    %v4604 = vunpack.c.l.b16 %v3207
    %v4605 = vunpack.c.l.b16 %v3208
    %v4606 = vunpack.c.h.b16 %v3208
    %v4607 = vunpack.c.l.b16 %v3209
    %v4608 = vunpack.c.h.b16 %v3209
    %v4609 = vunpack.c.l.b16 %v3210
    %v4610 = vunpack.c.h.b16 %v3210
    %v4611 = vunpack.c.l.b16 %v3211
    %v4612 = vunpack.c.l.b16 %v3212
    %v4613 = vunpack.c.h.b16 %v3212
    %v4614 = vunpack.c.l.b16 %v3213
    %v4615 = vunpack.c.h.b16 %v3213
    %v4616 = vunpack.c.l.b16 %v3214
    %v4617 = vunpack.c.h.b16 %v3214
    %v4618 = vunpack.c.l.b16 %v3215
    %v4619 = vunpack.c.l.b16 %v3216
    %v4620 = vunpack.c.h.b16 %v3216
    %v4621 = vunpack.c.l.b16 %v3217
    %v4622 = vunpack.c.h.b16 %v3217
    %v4623 = vunpack.c.l.b16 %v3218
    %v4624 = vunpack.c.h.b16 %v3218
    %v4625 = vunpack.c.l.b16 %v3219
    %v4626 = vunpack.c.l.b16 %v3220
    %v4627 = vunpack.c.h.b16 %v3220
    %v4628 = vunpack.c.l.b16 %v3221
    %v4629 = vunpack.c.h.b16 %v3221
    %v4630 = vunpack.c.l.b16 %v3222
    %v4631 = vunpack.c.h.b16 %v3222
    %v4632 = vunpack.c.l.b16 %v3223
    %v4633 = vunpack.c.l.b16 %v3224
    %v4634 = vunpack.c.h.b16 %v3224
    %v4635 = vunpack.c.l.b16 %v3225
    %v4636 = vunpack.c.h.b16 %v3225
    %v4637 = vunpack.c.l.b16 %v3226
    %v4638 = vunpack.c.h.b16 %v3226
    %v4639 = vunpack.c.l.b16 %v3227
    %v4640 = vunpack.c.l.b16 %v3228
    %v4641 = vunpack.c.h.b16 %v3228
    %v4642 = vunpack.c.l.b16 %v3229
    %v4643 = vunpack.c.h.b16 %v3229
    %v4644 = vunpack.c.l.b16 %v3230
    %v4645 = vunpack.c.h.b16 %v3230
    %v4646 = vunpack.c.l.b16 %v3231
    %v4647 = vunpack.c.l.b16 %v3232
    %v4648 = vunpack.c.h.b16 %v3232
    %v4649 = vunpack.c.l.b16 %v3233
    %v4650 = vunpack.c.h.b16 %v3233
    %v4651 = vunpack.c.l.b16 %v3234
    %v4652 = vunpack.c.h.b16 %v3234
    %v4653 = vunpack.c.l.b16 %v3235
    %v4654 = vunpack.c.l.b16 %v3236
    %v4655 = vunpack.c.h.b16 %v3236
    %v4656 = vunpack.c.l.b16 %v3237
    %v4657 = vunpack.c.h.b16 %v3237
    %v4658 = vunpack.c.l.b16 %v3238
    %v4659 = vunpack.c.h.b16 %v3238
    %v4660 = vunpack.c.l.b16 %v3239
    %v4661 = vunpack.c.l.b16 %v3240
    %v4662 = vunpack.c.h.b16 %v3240
    %v4663 = vunpack.c.l.b16 %v3241
    %v4664 = vunpack.c.h.b16 %v3241
    %v4665 = vunpack.c.l.b16 %v3242
    %v4666 = vunpack.c.h.b16 %v3242
    %v4667 = vunpack.c.l.b16 %v3243
    %v4668 = vunpack.c.l.b16 %v3244
    %v4669 = vunpack.c.h.b16 %v3244
    %v4670 = vunpack.c.l.b16 %v3245
    %v4671 = vunpack.c.h.b16 %v3245
    %v4672 = vunpack.c.l.b16 %v3246
    %v4673 = vunpack.c.h.b16 %v3246
    %v4674 = vunpack.c.l.b16 %v3247
    %v4675 = vunpack.c.l.b16 %v3248
    %v4676 = vunpack.c.h.b16 %v3248
    %v4677 = vunpack.c.l.b16 %v3249
    %v4678 = vunpack.c.h.b16 %v3249
    %v4679 = vunpack.c.l.b16 %v3250
    %v4680 = vunpack.c.h.b16 %v3250
    %v4681 = vunpack.c.l.b16 %v3251
    %v4682 = vunpack.c.l.b16 %v3252
    %v4683 = vunpack.c.h.b16 %v3252
    %v4684 = vunpack.c.l.b16 %v3253
    %v4685 = vunpack.c.h.b16 %v3253
    %v4686 = vunpack.c.l.b16 %v3254
    %v4687 = vunpack.c.h.b16 %v3254
    %v4688 = vunpack.c.l.b16 %v3255
    %v4689 = vunpack.c.l.b16 %v3256
    %v4690 = vunpack.c.h.b16 %v3256
    %v4691 = vunpack.c.l.b16 %v3257
    %v4692 = vunpack.c.h.b16 %v3257
    %v4693 = vunpack.c.l.b16 %v3258
    %v4694 = vunpack.c.h.b16 %v3258
    %v4695 = vunpack.c.l.b16 %v3259
    %v4696 = vunpack.c.l.b16 %v3260
    %v4697 = vunpack.c.h.b16 %v3260
    %v4698 = vunpack.c.l.b16 %v3261
    %v4699 = vunpack.c.h.b16 %v3261
    %v4700 = vunpack.c.l.b16 %v3262
    %v4701 = vunpack.c.h.b16 %v3262
    %v4702 = vunpack.c.l.b16 %v3263
    %v4703 = vunpack.c.l.b16 %v3264
    %v4704 = vunpack.c.h.b16 %v3264
    %v4705 = vunpack.c.l.b16 %v3265
    %v4706 = vunpack.c.h.b16 %v3265
    %v4707 = vunpack.c.l.b16 %v3266
    %v4708 = vunpack.c.h.b16 %v3266
    %v4709 = vunpack.c.l.b16 %v3267
    %v4710 = vunpack.c.l.b16 %v3268
    %v4711 = vunpack.c.h.b16 %v3268
    %v4712 = vunpack.c.l.b16 %v3269
    %v4713 = vunpack.c.h.b16 %v3269
    %v4714 = vunpack.c.l.b16 %v3270
    %v4715 = vunpack.c.h.b16 %v3270
    %v4716 = vunpack.c.l.b16 %v3271
    %v4717 = vpack.c.b16 %v3828, %v3821
    %v4718 = vpack.c.b16 %v3829, %v3822
    %v4719 = vpack.c.b16 %v3830, %v3823
    %v4720 = vpack.c.b16 %v3831, %v3824
    %v4721 = vpack.c.b16 %v3832, %v3825
    %v4722 = vpack.c.b16 %v3833, %v3826
    %v4723 = vpack.c.b16 %v3834, %v3827
    %v4724 = vpack.c.b16 %v3842, %v3835
    %v4725 = vpack.c.b16 %v3843, %v3836
    %v4726 = vpack.c.b16 %v3844, %v3837
    %v4727 = vpack.c.b16 %v3845, %v3838
    %v4728 = vpack.c.b16 %v3846, %v3839
    %v4729 = vpack.c.b16 %v3847, %v3840
    %v4730 = vpack.c.b16 %v3848, %v3841
    %v4731 = vpack.c.b16 %v3856, %v3849
    %v4732 = vpack.c.b16 %v3857, %v3850
    %v4733 = vpack.c.b16 %v3858, %v3851
    %v4734 = vpack.c.b16 %v3859, %v3852
    %v4735 = vpack.c.b16 %v3860, %v3853
    %v4736 = vpack.c.b16 %v3861, %v3854
    %v4737 = vpack.c.b16 %v3862, %v3855
    %v4738 = vpack.c.b16 %v3870, %v3863
    %v4739 = vpack.c.b16 %v3871, %v3864
    %v4740 = vpack.c.b16 %v3872, %v3865
    %v4741 = vpack.c.b16 %v3873, %v3866
    %v4742 = vpack.c.b16 %v3874, %v3867
    %v4743 = vpack.c.b16 %v3875, %v3868
    %v4744 = vpack.c.b16 %v3876, %v3869
    %v4745 = vpack.c.b16 %v3884, %v3877
    %v4746 = vpack.c.b16 %v3885, %v3878
    %v4747 = vpack.c.b16 %v3886, %v3879
    %v4748 = vpack.c.b16 %v3887, %v3880
    %v4749 = vpack.c.b16 %v3888, %v3881
    %v4750 = vpack.c.b16 %v3889, %v3882
    %v4751 = vpack.c.b16 %v3890, %v3883
    %v4752 = vpack.c.b16 %v3898, %v3891
    %v4753 = vpack.c.b16 %v3899, %v3892
    %v4754 = vpack.c.b16 %v3900, %v3893
    %v4755 = vpack.c.b16 %v3901, %v3894
    %v4756 = vpack.c.b16 %v3902, %v3895
    %v4757 = vpack.c.b16 %v3903, %v3896
    %v4758 = vpack.c.b16 %v3904, %v3897
    %v4759 = vpack.c.b16 %v3912, %v3905
    %v4760 = vpack.c.b16 %v3913, %v3906
    %v4761 = vpack.c.b16 %v3914, %v3907
    %v4762 = vpack.c.b16 %v3915, %v3908
    %v4763 = vpack.c.b16 %v3916, %v3909
    %v4764 = vpack.c.b16 %v3917, %v3910
    %v4765 = vpack.c.b16 %v3918, %v3911
    %v4766 = vpack.c.b16 %v3926, %v3919
    %v4767 = vpack.c.b16 %v3927, %v3920
    %v4768 = vpack.c.b16 %v3928, %v3921
    %v4769 = vpack.c.b16 %v3929, %v3922
    %v4770 = vpack.c.b16 %v3930, %v3923
    %v4771 = vpack.c.b16 %v3931, %v3924
    %v4772 = vpack.c.b16 %v3932, %v3925
    %v4773 = vpack.c.b16 %v3940, %v3933
    %v4774 = vpack.c.b16 %v3941, %v3934
    %v4775 = vpack.c.b16 %v3942, %v3935
    %v4776 = vpack.c.b16 %v3943, %v3936
    %v4777 = vpack.c.b16 %v3944, %v3937
    %v4778 = vpack.c.b16 %v3945, %v3938
    %v4779 = vpack.c.b16 %v3946, %v3939
    %v4780 = vpack.c.b16 %v3954, %v3947
    %v4781 = vpack.c.b16 %v3955, %v3948
    %v4782 = vpack.c.b16 %v3956, %v3949
    %v4783 = vpack.c.b16 %v3957, %v3950
    %v4784 = vpack.c.b16 %v3958, %v3951
    %v4785 = vpack.c.b16 %v3959, %v3952
    %v4786 = vpack.c.b16 %v3960, %v3953
    %v4787 = vpack.c.b16 %v3968, %v3961
    %v4788 = vpack.c.b16 %v3969, %v3962
    %v4789 = vpack.c.b16 %v3970, %v3963
    %v4790 = vpack.c.b16 %v3971, %v3964
    %v4791 = vpack.c.b16 %v3972, %v3965
    %v4792 = vpack.c.b16 %v3973, %v3966
    %v4793 = vpack.c.b16 %v3974, %v3967
    %v4794 = vpack.c.b16 %v3982, %v3975
    %v4795 = vpack.c.b16 %v3983, %v3976
    %v4796 = vpack.c.b16 %v3984, %v3977
    %v4797 = vpack.c.b16 %v3985, %v3978
    %v4798 = vpack.c.b16 %v3986, %v3979
    %v4799 = vpack.c.b16 %v3987, %v3980
    %v4800 = vpack.c.b16 %v3988, %v3981
    %v4801 = vpack.c.b16 %v3996, %v3989
    %v4802 = vpack.c.b16 %v3997, %v3990
    %v4803 = vpack.c.b16 %v3998, %v3991
    %v4804 = vpack.c.b16 %v3999, %v3992
    %v4805 = vpack.c.b16 %v4000, %v3993
    %v4806 = vpack.c.b16 %v4001, %v3994
    %v4807 = vpack.c.b16 %v4002, %v3995
    %v4808 = vpack.c.b16 %v4010, %v4003
    %v4809 = vpack.c.b16 %v4011, %v4004
    %v4810 = vpack.c.b16 %v4012, %v4005
    %v4811 = vpack.c.b16 %v4013, %v4006
    %v4812 = vpack.c.b16 %v4014, %v4007
    %v4813 = vpack.c.b16 %v4015, %v4008
    %v4814 = vpack.c.b16 %v4016, %v4009
    %v4815 = vpack.c.b16 %v4024, %v4017
    %v4816 = vpack.c.b16 %v4025, %v4018
    %v4817 = vpack.c.b16 %v4026, %v4019
    %v4818 = vpack.c.b16 %v4027, %v4020
    %v4819 = vpack.c.b16 %v4028, %v4021
    %v4820 = vpack.c.b16 %v4029, %v4022
    %v4821 = vpack.c.b16 %v4030, %v4023
    %v4822 = vpack.c.b16 %v4038, %v4031
    %v4823 = vpack.c.b16 %v4039, %v4032
    %v4824 = vpack.c.b16 %v4040, %v4033
    %v4825 = vpack.c.b16 %v4041, %v4034
    %v4826 = vpack.c.b16 %v4042, %v4035
    %v4827 = vpack.c.b16 %v4043, %v4036
    %v4828 = vpack.c.b16 %v4044, %v4037
    %v4829 = vpack.c.b16 %v4052, %v4045
    %v4830 = vpack.c.b16 %v4053, %v4046
    %v4831 = vpack.c.b16 %v4054, %v4047
    %v4832 = vpack.c.b16 %v4055, %v4048
    %v4833 = vpack.c.b16 %v4056, %v4049
    %v4834 = vpack.c.b16 %v4057, %v4050
    %v4835 = vpack.c.b16 %v4058, %v4051
    %v4836 = vpack.c.b16 %v4066, %v4059
    %v4837 = vpack.c.b16 %v4067, %v4060
    %v4838 = vpack.c.b16 %v4068, %v4061
    %v4839 = vpack.c.b16 %v4069, %v4062
    %v4840 = vpack.c.b16 %v4070, %v4063
    %v4841 = vpack.c.b16 %v4071, %v4064
    %v4842 = vpack.c.b16 %v4072, %v4065
    %v4843 = vpack.c.b16 %v4080, %v4073
    %v4844 = vpack.c.b16 %v4081, %v4074
    %v4845 = vpack.c.b16 %v4082, %v4075
    %v4846 = vpack.c.b16 %v4083, %v4076
    %v4847 = vpack.c.b16 %v4084, %v4077
    %v4848 = vpack.c.b16 %v4085, %v4078
    %v4849 = vpack.c.b16 %v4086, %v4079
    %v4850 = vpack.c.b16 %v4094, %v4087
    %v4851 = vpack.c.b16 %v4095, %v4088
    %v4852 = vpack.c.b16 %v4096, %v4089
    %v4853 = vpack.c.b16 %v4097, %v4090
    %v4854 = vpack.c.b16 %v4098, %v4091
    %v4855 = vpack.c.b16 %v4099, %v4092
    %v4856 = vpack.c.b16 %v4100, %v4093
    %v4857 = vpack.c.b16 %v4108, %v4101
    %v4858 = vpack.c.b16 %v4109, %v4102
    %v4859 = vpack.c.b16 %v4110, %v4103
    %v4860 = vpack.c.b16 %v4111, %v4104
    %v4861 = vpack.c.b16 %v4112, %v4105
    %v4862 = vpack.c.b16 %v4113, %v4106
    %v4863 = vpack.c.b16 %v4114, %v4107
    %v4864 = vpack.c.b16 %v4122, %v4115
    %v4865 = vpack.c.b16 %v4123, %v4116
    %v4866 = vpack.c.b16 %v4124, %v4117
    %v4867 = vpack.c.b16 %v4125, %v4118
    %v4868 = vpack.c.b16 %v4126, %v4119
    %v4869 = vpack.c.b16 %v4127, %v4120
    %v4870 = vpack.c.b16 %v4128, %v4121
    %v4871 = vpack.c.b16 %v4136, %v4129
    %v4872 = vpack.c.b16 %v4137, %v4130
    %v4873 = vpack.c.b16 %v4138, %v4131
    %v4874 = vpack.c.b16 %v4139, %v4132
    %v4875 = vpack.c.b16 %v4140, %v4133
    %v4876 = vpack.c.b16 %v4141, %v4134
    %v4877 = vpack.c.b16 %v4142, %v4135
    %v4878 = vpack.c.b16 %v4150, %v4143
    %v4879 = vpack.c.b16 %v4151, %v4144
    %v4880 = vpack.c.b16 %v4152, %v4145
    %v4881 = vpack.c.b16 %v4153, %v4146
    %v4882 = vpack.c.b16 %v4154, %v4147
    %v4883 = vpack.c.b16 %v4155, %v4148
    %v4884 = vpack.c.b16 %v4156, %v4149
    %v4885 = vpack.c.b16 %v4164, %v4157
    %v4886 = vpack.c.b16 %v4165, %v4158
    %v4887 = vpack.c.b16 %v4166, %v4159
    %v4888 = vpack.c.b16 %v4167, %v4160
    %v4889 = vpack.c.b16 %v4168, %v4161
    %v4890 = vpack.c.b16 %v4169, %v4162
    %v4891 = vpack.c.b16 %v4170, %v4163
    %v4892 = vpack.c.b16 %v4178, %v4171
    %v4893 = vpack.c.b16 %v4179, %v4172
    %v4894 = vpack.c.b16 %v4180, %v4173
    %v4895 = vpack.c.b16 %v4181, %v4174
    %v4896 = vpack.c.b16 %v4182, %v4175
    %v4897 = vpack.c.b16 %v4183, %v4176
    %v4898 = vpack.c.b16 %v4184, %v4177
    %v4899 = vpack.c.b16 %v4192, %v4185
    %v4900 = vpack.c.b16 %v4193, %v4186
    %v4901 = vpack.c.b16 %v4194, %v4187
    %v4902 = vpack.c.b16 %v4195, %v4188
    %v4903 = vpack.c.b16 %v4196, %v4189
    %v4904 = vpack.c.b16 %v4197, %v4190
    %v4905 = vpack.c.b16 %v4198, %v4191
    %v4906 = vpack.c.b16 %v4206, %v4199
    %v4907 = vpack.c.b16 %v4207, %v4200
    %v4908 = vpack.c.b16 %v4208, %v4201
    %v4909 = vpack.c.b16 %v4209, %v4202
    %v4910 = vpack.c.b16 %v4210, %v4203
    %v4911 = vpack.c.b16 %v4211, %v4204
    %v4912 = vpack.c.b16 %v4212, %v4205
    %v4913 = vpack.c.b16 %v4220, %v4213
    %v4914 = vpack.c.b16 %v4221, %v4214
    %v4915 = vpack.c.b16 %v4222, %v4215
    %v4916 = vpack.c.b16 %v4223, %v4216
    %v4917 = vpack.c.b16 %v4224, %v4217
    %v4918 = vpack.c.b16 %v4225, %v4218
    %v4919 = vpack.c.b16 %v4226, %v4219
    %v4920 = vpack.c.b16 %v4234, %v4227
    %v4921 = vpack.c.b16 %v4235, %v4228
    %v4922 = vpack.c.b16 %v4236, %v4229
    %v4923 = vpack.c.b16 %v4237, %v4230
    %v4924 = vpack.c.b16 %v4238, %v4231
    %v4925 = vpack.c.b16 %v4239, %v4232
    %v4926 = vpack.c.b16 %v4240, %v4233
    %v4927 = vpack.c.b16 %v4248, %v4241
    %v4928 = vpack.c.b16 %v4249, %v4242
    %v4929 = vpack.c.b16 %v4250, %v4243
    %v4930 = vpack.c.b16 %v4251, %v4244
    %v4931 = vpack.c.b16 %v4252, %v4245
    %v4932 = vpack.c.b16 %v4253, %v4246
    %v4933 = vpack.c.b16 %v4254, %v4247
    %v4934 = vpack.c.b16 %v4262, %v4255
    %v4935 = vpack.c.b16 %v4263, %v4256
    %v4936 = vpack.c.b16 %v4264, %v4257
    %v4937 = vpack.c.b16 %v4265, %v4258
    %v4938 = vpack.c.b16 %v4266, %v4259
    %v4939 = vpack.c.b16 %v4267, %v4260
    %v4940 = vpack.c.b16 %v4268, %v4261
    %v4941 = vpack.c.b16 %v4276, %v4269
    %v4942 = vpack.c.b16 %v4277, %v4270
    %v4943 = vpack.c.b16 %v4278, %v4271
    %v4944 = vpack.c.b16 %v4279, %v4272
    %v4945 = vpack.c.b16 %v4280, %v4273
    %v4946 = vpack.c.b16 %v4281, %v4274
    %v4947 = vpack.c.b16 %v4282, %v4275
    %v4948 = vpack.c.b16 %v4290, %v4283
    %v4949 = vpack.c.b16 %v4291, %v4284
    %v4950 = vpack.c.b16 %v4292, %v4285
    %v4951 = vpack.c.b16 %v4293, %v4286
    %v4952 = vpack.c.b16 %v4294, %v4287
    %v4953 = vpack.c.b16 %v4295, %v4288
    %v4954 = vpack.c.b16 %v4296, %v4289
    %v4955 = vpack.c.b16 %v4304, %v4297
    %v4956 = vpack.c.b16 %v4305, %v4298
    %v4957 = vpack.c.b16 %v4306, %v4299
    %v4958 = vpack.c.b16 %v4307, %v4300
    %v4959 = vpack.c.b16 %v4308, %v4301
    %v4960 = vpack.c.b16 %v4309, %v4302
    %v4961 = vpack.c.b16 %v4310, %v4303
    %v4962 = vpack.c.b16 %v4318, %v4311
    %v4963 = vpack.c.b16 %v4319, %v4312
    %v4964 = vpack.c.b16 %v4320, %v4313
    %v4965 = vpack.c.b16 %v4321, %v4314
    %v4966 = vpack.c.b16 %v4322, %v4315
    %v4967 = vpack.c.b16 %v4323, %v4316
    %v4968 = vpack.c.b16 %v4324, %v4317
    %v4969 = vpack.c.b16 %v4332, %v4325
    %v4970 = vpack.c.b16 %v4333, %v4326
    %v4971 = vpack.c.b16 %v4334, %v4327
    %v4972 = vpack.c.b16 %v4335, %v4328
    %v4973 = vpack.c.b16 %v4336, %v4329
    %v4974 = vpack.c.b16 %v4337, %v4330
    %v4975 = vpack.c.b16 %v4338, %v4331
    %v4976 = vpack.c.b16 %v4346, %v4339
    %v4977 = vpack.c.b16 %v4347, %v4340
    %v4978 = vpack.c.b16 %v4348, %v4341
    %v4979 = vpack.c.b16 %v4349, %v4342
    %v4980 = vpack.c.b16 %v4350, %v4343
    %v4981 = vpack.c.b16 %v4351, %v4344
    %v4982 = vpack.c.b16 %v4352, %v4345
    %v4983 = vpack.c.b16 %v4360, %v4353
    %v4984 = vpack.c.b16 %v4361, %v4354
    %v4985 = vpack.c.b16 %v4362, %v4355
    %v4986 = vpack.c.b16 %v4363, %v4356
    %v4987 = vpack.c.b16 %v4364, %v4357
    %v4988 = vpack.c.b16 %v4365, %v4358
    %v4989 = vpack.c.b16 %v4366, %v4359
    %v4990 = vpack.c.b16 %v4374, %v4367
    %v4991 = vpack.c.b16 %v4375, %v4368
    %v4992 = vpack.c.b16 %v4376, %v4369
    %v4993 = vpack.c.b16 %v4377, %v4370
    %v4994 = vpack.c.b16 %v4378, %v4371
    %v4995 = vpack.c.b16 %v4379, %v4372
    %v4996 = vpack.c.b16 %v4380, %v4373
    %v4997 = vpack.c.b16 %v4388, %v4381
    %v4998 = vpack.c.b16 %v4389, %v4382
    %v4999 = vpack.c.b16 %v4390, %v4383
    %v5000 = vpack.c.b16 %v4391, %v4384
    %v5001 = vpack.c.b16 %v4392, %v4385
    %v5002 = vpack.c.b16 %v4393, %v4386
    %v5003 = vpack.c.b16 %v4394, %v4387
    %v5004 = vpack.c.b16 %v4402, %v4395
    %v5005 = vpack.c.b16 %v4403, %v4396
    %v5006 = vpack.c.b16 %v4404, %v4397
    %v5007 = vpack.c.b16 %v4405, %v4398
    %v5008 = vpack.c.b16 %v4406, %v4399
    %v5009 = vpack.c.b16 %v4407, %v4400
    %v5010 = vpack.c.b16 %v4408, %v4401
    %v5011 = vpack.c.b16 %v4416, %v4409
    %v5012 = vpack.c.b16 %v4417, %v4410
    %v5013 = vpack.c.b16 %v4418, %v4411
    %v5014 = vpack.c.b16 %v4419, %v4412
    %v5015 = vpack.c.b16 %v4420, %v4413
    %v5016 = vpack.c.b16 %v4421, %v4414
    %v5017 = vpack.c.b16 %v4422, %v4415
    %v5018 = vpack.c.b16 %v4430, %v4423
    %v5019 = vpack.c.b16 %v4431, %v4424
    %v5020 = vpack.c.b16 %v4432, %v4425
    %v5021 = vpack.c.b16 %v4433, %v4426
    %v5022 = vpack.c.b16 %v4434, %v4427
    %v5023 = vpack.c.b16 %v4435, %v4428
    %v5024 = vpack.c.b16 %v4436, %v4429
    %v5025 = vpack.c.b16 %v4444, %v4437
    %v5026 = vpack.c.b16 %v4445, %v4438
    %v5027 = vpack.c.b16 %v4446, %v4439
    %v5028 = vpack.c.b16 %v4447, %v4440
    %v5029 = vpack.c.b16 %v4448, %v4441
    %v5030 = vpack.c.b16 %v4449, %v4442
    %v5031 = vpack.c.b16 %v4450, %v4443
    %v5032 = vpack.c.b16 %v4458, %v4451
    %v5033 = vpack.c.b16 %v4459, %v4452
    %v5034 = vpack.c.b16 %v4460, %v4453
    %v5035 = vpack.c.b16 %v4461, %v4454
    %v5036 = vpack.c.b16 %v4462, %v4455
    %v5037 = vpack.c.b16 %v4463, %v4456
    %v5038 = vpack.c.b16 %v4464, %v4457
    %v5039 = vpack.c.b16 %v4472, %v4465
    %v5040 = vpack.c.b16 %v4473, %v4466
    %v5041 = vpack.c.b16 %v4474, %v4467
    %v5042 = vpack.c.b16 %v4475, %v4468
    %v5043 = vpack.c.b16 %v4476, %v4469
    %v5044 = vpack.c.b16 %v4477, %v4470
    %v5045 = vpack.c.b16 %v4478, %v4471
    %v5046 = vpack.c.b16 %v4486, %v4479
    %v5047 = vpack.c.b16 %v4487, %v4480
    %v5048 = vpack.c.b16 %v4488, %v4481
    %v5049 = vpack.c.b16 %v4489, %v4482
    %v5050 = vpack.c.b16 %v4490, %v4483
    %v5051 = vpack.c.b16 %v4491, %v4484
    %v5052 = vpack.c.b16 %v4492, %v4485
    %v5053 = vpack.c.b16 %v4500, %v4493
    %v5054 = vpack.c.b16 %v4501, %v4494
    %v5055 = vpack.c.b16 %v4502, %v4495
    %v5056 = vpack.c.b16 %v4503, %v4496
    %v5057 = vpack.c.b16 %v4504, %v4497
    %v5058 = vpack.c.b16 %v4505, %v4498
    %v5059 = vpack.c.b16 %v4506, %v4499
    %v5060 = vpack.c.b16 %v4514, %v4507
    %v5061 = vpack.c.b16 %v4515, %v4508
    %v5062 = vpack.c.b16 %v4516, %v4509
    %v5063 = vpack.c.b16 %v4517, %v4510
    %v5064 = vpack.c.b16 %v4518, %v4511
    %v5065 = vpack.c.b16 %v4519, %v4512
    %v5066 = vpack.c.b16 %v4520, %v4513
    %v5067 = vpack.c.b16 %v4528, %v4521
    %v5068 = vpack.c.b16 %v4529, %v4522
    %v5069 = vpack.c.b16 %v4530, %v4523
    %v5070 = vpack.c.b16 %v4531, %v4524
    %v5071 = vpack.c.b16 %v4532, %v4525
    %v5072 = vpack.c.b16 %v4533, %v4526
    %v5073 = vpack.c.b16 %v4534, %v4527
    %v5074 = vpack.c.b16 %v4542, %v4535
    %v5075 = vpack.c.b16 %v4543, %v4536
    %v5076 = vpack.c.b16 %v4544, %v4537
    %v5077 = vpack.c.b16 %v4545, %v4538
    %v5078 = vpack.c.b16 %v4546, %v4539
    %v5079 = vpack.c.b16 %v4547, %v4540
    %v5080 = vpack.c.b16 %v4548, %v4541
    %v5081 = vpack.c.b16 %v4556, %v4549
    %v5082 = vpack.c.b16 %v4557, %v4550
    %v5083 = vpack.c.b16 %v4558, %v4551
    %v5084 = vpack.c.b16 %v4559, %v4552
    %v5085 = vpack.c.b16 %v4560, %v4553
    %v5086 = vpack.c.b16 %v4561, %v4554
    %v5087 = vpack.c.b16 %v4562, %v4555
    %v5088 = vpack.c.b16 %v4570, %v4563
    %v5089 = vpack.c.b16 %v4571, %v4564
    %v5090 = vpack.c.b16 %v4572, %v4565
    %v5091 = vpack.c.b16 %v4573, %v4566
    %v5092 = vpack.c.b16 %v4574, %v4567
    %v5093 = vpack.c.b16 %v4575, %v4568
    %v5094 = vpack.c.b16 %v4576, %v4569
    %v5095 = vpack.c.b16 %v4584, %v4577
    %v5096 = vpack.c.b16 %v4585, %v4578
    %v5097 = vpack.c.b16 %v4586, %v4579
    %v5098 = vpack.c.b16 %v4587, %v4580
    %v5099 = vpack.c.b16 %v4588, %v4581
    %v5100 = vpack.c.b16 %v4589, %v4582
    %v5101 = vpack.c.b16 %v4590, %v4583
    %v5102 = vpack.c.b16 %v4598, %v4591
    %v5103 = vpack.c.b16 %v4599, %v4592
    %v5104 = vpack.c.b16 %v4600, %v4593
    %v5105 = vpack.c.b16 %v4601, %v4594
    %v5106 = vpack.c.b16 %v4602, %v4595
    %v5107 = vpack.c.b16 %v4603, %v4596
    %v5108 = vpack.c.b16 %v4604, %v4597
    %v5109 = vpack.c.b16 %v4612, %v4605
    %v5110 = vpack.c.b16 %v4613, %v4606
    %v5111 = vpack.c.b16 %v4614, %v4607
    %v5112 = vpack.c.b16 %v4615, %v4608
    %v5113 = vpack.c.b16 %v4616, %v4609
    %v5114 = vpack.c.b16 %v4617, %v4610
    %v5115 = vpack.c.b16 %v4618, %v4611
    %v5116 = vpack.c.b16 %v4626, %v4619
    %v5117 = vpack.c.b16 %v4627, %v4620
    %v5118 = vpack.c.b16 %v4628, %v4621
    %v5119 = vpack.c.b16 %v4629, %v4622
    %v5120 = vpack.c.b16 %v4630, %v4623
    %v5121 = vpack.c.b16 %v4631, %v4624
    %v5122 = vpack.c.b16 %v4632, %v4625
    %v5123 = vpack.c.b16 %v4640, %v4633
    %v5124 = vpack.c.b16 %v4641, %v4634
    %v5125 = vpack.c.b16 %v4642, %v4635
    %v5126 = vpack.c.b16 %v4643, %v4636
    %v5127 = vpack.c.b16 %v4644, %v4637
    %v5128 = vpack.c.b16 %v4645, %v4638
    %v5129 = vpack.c.b16 %v4646, %v4639
    %v5130 = vpack.c.b16 %v4654, %v4647
    %v5131 = vpack.c.b16 %v4655, %v4648
    %v5132 = vpack.c.b16 %v4656, %v4649
    %v5133 = vpack.c.b16 %v4657, %v4650
    %v5134 = vpack.c.b16 %v4658, %v4651
    %v5135 = vpack.c.b16 %v4659, %v4652
    %v5136 = vpack.c.b16 %v4660, %v4653
    %v5137 = vpack.c.b16 %v4668, %v4661
    %v5138 = vpack.c.b16 %v4669, %v4662
    %v5139 = vpack.c.b16 %v4670, %v4663
    %v5140 = vpack.c.b16 %v4671, %v4664
    %v5141 = vpack.c.b16 %v4672, %v4665
    %v5142 = vpack.c.b16 %v4673, %v4666
    %v5143 = vpack.c.b16 %v4674, %v4667
    %v5144 = vpack.c.b16 %v4682, %v4675
    %v5145 = vpack.c.b16 %v4683, %v4676
    %v5146 = vpack.c.b16 %v4684, %v4677
    %v5147 = vpack.c.b16 %v4685, %v4678
    %v5148 = vpack.c.b16 %v4686, %v4679
    %v5149 = vpack.c.b16 %v4687, %v4680
    %v5150 = vpack.c.b16 %v4688, %v4681
    %v5151 = vpack.c.b16 %v4696, %v4689
    %v5152 = vpack.c.b16 %v4697, %v4690
    %v5153 = vpack.c.b16 %v4698, %v4691
    %v5154 = vpack.c.b16 %v4699, %v4692
    %v5155 = vpack.c.b16 %v4700, %v4693
    %v5156 = vpack.c.b16 %v4701, %v4694
    %v5157 = vpack.c.b16 %v4702, %v4695
    %v5158 = vpack.c.b16 %v4710, %v4703
    %v5159 = vpack.c.b16 %v4711, %v4704
    %v5160 = vpack.c.b16 %v4712, %v4705
    %v5161 = vpack.c.b16 %v4713, %v4706
    %v5162 = vpack.c.b16 %v4714, %v4707
    %v5163 = vpack.c.b16 %v4715, %v4708
    %v5164 = vpack.c.b16 %v4716, %v4709
    %5613 = vmatprep.subr.bf16.mxu0 %v4767
    %5614 = vmatpush1.bf16.msra.mxu0 %v4766
    %5615 = vmatprep.subr.bf16.mxu0 %v4760
    %5616 = vmatpush1.bf16.msra.mxu0 %v4759
    %5617 = vmatprep.subr.bf16.mxu0 %v4753
    %5618 = vmatpush1.bf16.msra.mxu0 %v4752
    %5619 = vmatprep.subr.bf16.mxu0 %v4746
    %5620 = vmatpush1.bf16.msra.mxu0 %v4745
    %5621 = vmatprep.subr.bf16.mxu0 %v4739
    %5622 = vmatpush1.bf16.msra.mxu0 %v4738
    %5623 = vmatprep.subr.bf16.mxu0 %v4732
    %5624 = vmatpush1.bf16.msra.mxu0 %v4731
    %5625 = vmatprep.subr.bf16.mxu0 %v4725
    %5626 = vmatpush1.bf16.msra.mxu0 %v4724
    %5627 = vmatprep.subr.bf16.mxu0 %v4718
    %5628 = vmatpush1.bf16.msra.mxu0 %v4717
    %5629 = vmatprep.subr.bf16.mxu0 %v4823
    %5630 = vmatpush2.bf16.msra.mxu0 %v4822
    %5631 = vmatprep.subr.bf16.mxu0 %v4816
    %5632 = vmatpush2.bf16.msra.mxu0 %v4815
    %5633 = vmatprep.subr.bf16.mxu0 %v4809
    %5634 = vmatpush2.bf16.msra.mxu0 %v4808
    %5635 = vmatprep.subr.bf16.mxu0 %v4802
    %5636 = vmatpush2.bf16.msra.mxu0 %v4801
    %5637 = vmatprep.subr.bf16.mxu0 %v4795
    %5638 = vmatpush2.bf16.msra.mxu0 %v4794
    %5639 = vmatprep.subr.bf16.mxu0 %v4788
    %5640 = vmatpush2.bf16.msra.mxu0 %v4787
    %5641 = vmatprep.subr.bf16.mxu0 %v4781
    %5642 = vmatpush2.bf16.msra.mxu0 %v4780
    %5643 = vmatprep.subr.bf16.mxu0 %v4774
    %5644 = vmatpush2.bf16.msra.mxu0 %v4773
    %5645 = vmatprep.mubr.bf16.mxu0 %v2753
    %5646 = vmatmul.mubr.bf16.gmra.mxu0 %v2752
    %v5647 = vpop.f32.mrf.mxu0
    %v5648 = vadd.f32 %v3277, %v5647
    %v5649 = vpop.f32.mrf.mxu0
    %v5650 = vadd.f32 %v3281, %v5649
    %v5651 = vpop.f32.mrf.mxu0
    %v5652 = vadd.f32 %v3277, %v5651
    %v5653 = vpop.f32.mrf.mxu0
    %v5654 = vadd.f32 %v3281, %v5653
    %5655 = vdwg.mxu0
    %5656 = vmatprep.subr.bf16.mxu0 %v4879
    %5657 = vmatpush1.bf16.msra.mxu0 %v4878
    %5658 = vmatprep.subr.bf16.mxu0 %v4872
    %5659 = vmatpush1.bf16.msra.mxu0 %v4871
    %5660 = vmatprep.subr.bf16.mxu0 %v4865
    %5661 = vmatpush1.bf16.msra.mxu0 %v4864
    %5662 = vmatprep.subr.bf16.mxu0 %v4858
    %5663 = vmatpush1.bf16.msra.mxu0 %v4857
    %5664 = vmatprep.subr.bf16.mxu0 %v4851
    %5665 = vmatpush1.bf16.msra.mxu0 %v4850
    %5666 = vmatprep.subr.bf16.mxu0 %v4844
    %5667 = vmatpush1.bf16.msra.mxu0 %v4843
    %5668 = vmatprep.subr.bf16.mxu0 %v4837
    %5669 = vmatpush1.bf16.msra.mxu0 %v4836
    %5670 = vmatprep.subr.bf16.mxu0 %v4830
    %5671 = vmatpush1.bf16.msra.mxu0 %v4829
    %5672 = vmatprep.subr.bf16.mxu0 %v4935
    %5673 = vmatpush2.bf16.msra.mxu0 %v4934
    %5674 = vmatprep.subr.bf16.mxu0 %v4928
    %5675 = vmatpush2.bf16.msra.mxu0 %v4927
    %5676 = vmatprep.subr.bf16.mxu0 %v4921
    %5677 = vmatpush2.bf16.msra.mxu0 %v4920
    %5678 = vmatprep.subr.bf16.mxu0 %v4914
    %5679 = vmatpush2.bf16.msra.mxu0 %v4913
    %5680 = vmatprep.subr.bf16.mxu0 %v4907
    %5681 = vmatpush2.bf16.msra.mxu0 %v4906
    %5682 = vmatprep.subr.bf16.mxu0 %v4900
    %5683 = vmatpush2.bf16.msra.mxu0 %v4899
    %5684 = vmatprep.subr.bf16.mxu0 %v4893
    %5685 = vmatpush2.bf16.msra.mxu0 %v4892
    %5686 = vmatprep.subr.bf16.mxu0 %v4886
    %5687 = vmatpush2.bf16.msra.mxu0 %v4885
    %5688 = vmatprep.mubr.bf16.mxu0 %v2755
    %5689 = vmatmul.mubr.bf16.gmra.mxu0 %v2754
    %v5690 = vpop.f32.mrf.mxu0
    %v5691 = vadd.f32 %v5648, %v5690
    %v5692 = vpop.f32.mrf.mxu0
    %v5693 = vadd.f32 %v5650, %v5692
    %v5694 = vpop.f32.mrf.mxu0
    %v5695 = vadd.f32 %v5652, %v5694
    %v5696 = vpop.f32.mrf.mxu0
    %v5697 = vadd.f32 %v5654, %v5696
    %5698 = vdwg.mxu0
    %5699 = vmatprep.subr.bf16.mxu0 %v4991
    %5700 = vmatpush1.bf16.msra.mxu0 %v4990
    %5701 = vmatprep.subr.bf16.mxu0 %v4984
    %5702 = vmatpush1.bf16.msra.mxu0 %v4983
    %5703 = vmatprep.subr.bf16.mxu0 %v4977
    %5704 = vmatpush1.bf16.msra.mxu0 %v4976
    %5705 = vmatprep.subr.bf16.mxu0 %v4970
    %5706 = vmatpush1.bf16.msra.mxu0 %v4969
    %5707 = vmatprep.subr.bf16.mxu0 %v4963
    %5708 = vmatpush1.bf16.msra.mxu0 %v4962
    %5709 = vmatprep.subr.bf16.mxu0 %v4956
    %5710 = vmatpush1.bf16.msra.mxu0 %v4955
    %5711 = vmatprep.subr.bf16.mxu0 %v4949
    %5712 = vmatpush1.bf16.msra.mxu0 %v4948
    %5713 = vmatprep.subr.bf16.mxu0 %v4942
    %5714 = vmatpush1.bf16.msra.mxu0 %v4941
    %5715 = vmatprep.subr.bf16.mxu0 %v5047
    %5716 = vmatpush2.bf16.msra.mxu0 %v5046
    %5717 = vmatprep.subr.bf16.mxu0 %v5040
    %5718 = vmatpush2.bf16.msra.mxu0 %v5039
    %5719 = vmatprep.subr.bf16.mxu0 %v5033
    %5720 = vmatpush2.bf16.msra.mxu0 %v5032
    %5721 = vmatprep.subr.bf16.mxu0 %v5026
    %5722 = vmatpush2.bf16.msra.mxu0 %v5025
    %5723 = vmatprep.subr.bf16.mxu0 %v5019
    %5724 = vmatpush2.bf16.msra.mxu0 %v5018
    %5725 = vmatprep.subr.bf16.mxu0 %v5012
    %5726 = vmatpush2.bf16.msra.mxu0 %v5011
    %5727 = vmatprep.subr.bf16.mxu0 %v5005
    %5728 = vmatpush2.bf16.msra.mxu0 %v5004
    %5729 = vmatprep.subr.bf16.mxu0 %v4998
    %5730 = vmatpush2.bf16.msra.mxu0 %v4997
    %5731 = vmatprep.mubr.bf16.mxu0 %v2757
    %5732 = vmatmul.mubr.bf16.gmra.mxu0 %v2756
    %v5733 = vpop.f32.mrf.mxu0
    %v5734 = vadd.f32 %v5691, %v5733
    %v5735 = vpop.f32.mrf.mxu0
    %v5736 = vadd.f32 %v5693, %v5735
    %v5737 = vpop.f32.mrf.mxu0
    %v5738 = vadd.f32 %v5695, %v5737
    %v5739 = vpop.f32.mrf.mxu0
    %v5740 = vadd.f32 %v5697, %v5739
    %5741 = vdwg.mxu0
    %5742 = vmatprep.subr.bf16.mxu0 %v5103
    %5743 = vmatpush1.bf16.msra.mxu0 %v5102
    %5744 = vmatprep.subr.bf16.mxu0 %v5096
    %5745 = vmatpush1.bf16.msra.mxu0 %v5095
    %5746 = vmatprep.subr.bf16.mxu0 %v5089
    %5747 = vmatpush1.bf16.msra.mxu0 %v5088
    %5748 = vmatprep.subr.bf16.mxu0 %v5082
    %5749 = vmatpush1.bf16.msra.mxu0 %v5081
    %5750 = vmatprep.subr.bf16.mxu0 %v5075
    %5751 = vmatpush1.bf16.msra.mxu0 %v5074
    %5752 = vmatprep.subr.bf16.mxu0 %v5068
    %5753 = vmatpush1.bf16.msra.mxu0 %v5067
    %5754 = vmatprep.subr.bf16.mxu0 %v5061
    %5755 = vmatpush1.bf16.msra.mxu0 %v5060
    %5756 = vmatprep.subr.bf16.mxu0 %v5054
    %5757 = vmatpush1.bf16.msra.mxu0 %v5053
    %5758 = vmatprep.subr.bf16.mxu0 %v5159
    %5759 = vmatpush2.bf16.msra.mxu0 %v5158
    %5760 = vmatprep.subr.bf16.mxu0 %v5152
    %5761 = vmatpush2.bf16.msra.mxu0 %v5151
    %5762 = vmatprep.subr.bf16.mxu0 %v5145
    %5763 = vmatpush2.bf16.msra.mxu0 %v5144
    %5764 = vmatprep.subr.bf16.mxu0 %v5138
    %5765 = vmatpush2.bf16.msra.mxu0 %v5137
    %5766 = vmatprep.subr.bf16.mxu0 %v5131
    %5767 = vmatpush2.bf16.msra.mxu0 %v5130
    %5768 = vmatprep.subr.bf16.mxu0 %v5124
    %5769 = vmatpush2.bf16.msra.mxu0 %v5123
    %5770 = vmatprep.subr.bf16.mxu0 %v5117
    %5771 = vmatpush2.bf16.msra.mxu0 %v5116
    %5772 = vmatprep.subr.bf16.mxu0 %v5110
    %5773 = vmatpush2.bf16.msra.mxu0 %v5109
    %5774 = vmatprep.mubr.bf16.mxu0 %v2759
    %5775 = vmatmul.mubr.bf16.gmra.mxu0 %v2758
    %v5776 = vpop.f32.mrf.mxu0
    %v5777 = vadd.f32 %v5734, %v5776
    %v5778 = vpop.f32.mrf.mxu0
    %v5779 = vadd.f32 %v5736, %v5778
    %v5780 = vpop.f32.mrf.mxu0
    %v5781 = vadd.f32 %v5738, %v5780
    %v5782 = vpop.f32.mrf.mxu0
    %v5783 = vadd.f32 %v5740, %v5782
    %5784 = vdwg.mxu0
    %5785 = vmatprep.subr.bf16.mxu0 %v4769
    %5786 = vmatpush1.bf16.msra.mxu0 %v4768
    %5787 = vmatprep.subr.bf16.mxu0 %v4762
    %5788 = vmatpush1.bf16.msra.mxu0 %v4761
    %5789 = vmatprep.subr.bf16.mxu0 %v4755
    %5790 = vmatpush1.bf16.msra.mxu0 %v4754
    %5791 = vmatprep.subr.bf16.mxu0 %v4748
    %5792 = vmatpush1.bf16.msra.mxu0 %v4747
    %5793 = vmatprep.subr.bf16.mxu0 %v4741
    %5794 = vmatpush1.bf16.msra.mxu0 %v4740
    %5795 = vmatprep.subr.bf16.mxu0 %v4734
    %5796 = vmatpush1.bf16.msra.mxu0 %v4733
    %5797 = vmatprep.subr.bf16.mxu0 %v4727
    %5798 = vmatpush1.bf16.msra.mxu0 %v4726
    %5799 = vmatprep.subr.bf16.mxu0 %v4720
    %5800 = vmatpush1.bf16.msra.mxu0 %v4719
    %5801 = vmatprep.subr.bf16.mxu0 %v4825
    %5802 = vmatpush2.bf16.msra.mxu0 %v4824
    %5803 = vmatprep.subr.bf16.mxu0 %v4818
    %5804 = vmatpush2.bf16.msra.mxu0 %v4817
    %5805 = vmatprep.subr.bf16.mxu0 %v4811
    %5806 = vmatpush2.bf16.msra.mxu0 %v4810
    %5807 = vmatprep.subr.bf16.mxu0 %v4804
    %5808 = vmatpush2.bf16.msra.mxu0 %v4803
    %5809 = vmatprep.subr.bf16.mxu0 %v4797
    %5810 = vmatpush2.bf16.msra.mxu0 %v4796
    %5811 = vmatprep.subr.bf16.mxu0 %v4790
    %5812 = vmatpush2.bf16.msra.mxu0 %v4789
    %5813 = vmatprep.subr.bf16.mxu0 %v4783
    %5814 = vmatpush2.bf16.msra.mxu0 %v4782
    %5815 = vmatprep.subr.bf16.mxu0 %v4776
    %5816 = vmatpush2.bf16.msra.mxu0 %v4775
    %5817 = vmatprep.mubr.bf16.mxu0 %v2753
    %5818 = vmatmul.mubr.bf16.gmra.mxu0 %v2752
    %v5819 = vpop.f32.mrf.mxu0
    %v5820 = vadd.f32 %v3285, %v5819
    %v5821 = vpop.f32.mrf.mxu0
    %v5822 = vadd.f32 %v3289, %v5821
    %v5823 = vpop.f32.mrf.mxu0
    %v5824 = vadd.f32 %v3285, %v5823
    %v5825 = vpop.f32.mrf.mxu0
    %v5826 = vadd.f32 %v3289, %v5825
    %5827 = vdwg.mxu0
    %5828 = vmatprep.subr.bf16.mxu0 %v4881
    %5829 = vmatpush1.bf16.msra.mxu0 %v4880
    %5830 = vmatprep.subr.bf16.mxu0 %v4874
    %5831 = vmatpush1.bf16.msra.mxu0 %v4873
    %5832 = vmatprep.subr.bf16.mxu0 %v4867
    %5833 = vmatpush1.bf16.msra.mxu0 %v4866
    %5834 = vmatprep.subr.bf16.mxu0 %v4860
    %5835 = vmatpush1.bf16.msra.mxu0 %v4859
    %5836 = vmatprep.subr.bf16.mxu0 %v4853
    %5837 = vmatpush1.bf16.msra.mxu0 %v4852
    %5838 = vmatprep.subr.bf16.mxu0 %v4846
    %5839 = vmatpush1.bf16.msra.mxu0 %v4845
    %5840 = vmatprep.subr.bf16.mxu0 %v4839
    %5841 = vmatpush1.bf16.msra.mxu0 %v4838
    %5842 = vmatprep.subr.bf16.mxu0 %v4832
    %5843 = vmatpush1.bf16.msra.mxu0 %v4831
    %5844 = vmatprep.subr.bf16.mxu0 %v4937
    %5845 = vmatpush2.bf16.msra.mxu0 %v4936
    %5846 = vmatprep.subr.bf16.mxu0 %v4930
    %5847 = vmatpush2.bf16.msra.mxu0 %v4929
    %5848 = vmatprep.subr.bf16.mxu0 %v4923
    %5849 = vmatpush2.bf16.msra.mxu0 %v4922
    %5850 = vmatprep.subr.bf16.mxu0 %v4916
    %5851 = vmatpush2.bf16.msra.mxu0 %v4915
    %5852 = vmatprep.subr.bf16.mxu0 %v4909
    %5853 = vmatpush2.bf16.msra.mxu0 %v4908
    %5854 = vmatprep.subr.bf16.mxu0 %v4902
    %5855 = vmatpush2.bf16.msra.mxu0 %v4901
    %5856 = vmatprep.subr.bf16.mxu0 %v4895
    %5857 = vmatpush2.bf16.msra.mxu0 %v4894
    %5858 = vmatprep.subr.bf16.mxu0 %v4888
    %5859 = vmatpush2.bf16.msra.mxu0 %v4887
    %5860 = vmatprep.mubr.bf16.mxu0 %v2755
    %5861 = vmatmul.mubr.bf16.gmra.mxu0 %v2754
    %v5862 = vpop.f32.mrf.mxu0
    %v5863 = vadd.f32 %v5820, %v5862
    %v5864 = vpop.f32.mrf.mxu0
    %v5865 = vadd.f32 %v5822, %v5864
    %v5866 = vpop.f32.mrf.mxu0
    %v5867 = vadd.f32 %v5824, %v5866
    %v5868 = vpop.f32.mrf.mxu0
    %v5869 = vadd.f32 %v5826, %v5868
    %5870 = vdwg.mxu0
    %5871 = vmatprep.subr.bf16.mxu0 %v4993
    %5872 = vmatpush1.bf16.msra.mxu0 %v4992
    %5873 = vmatprep.subr.bf16.mxu0 %v4986
    %5874 = vmatpush1.bf16.msra.mxu0 %v4985
    %5875 = vmatprep.subr.bf16.mxu0 %v4979
    %5876 = vmatpush1.bf16.msra.mxu0 %v4978
    %5877 = vmatprep.subr.bf16.mxu0 %v4972
    %5878 = vmatpush1.bf16.msra.mxu0 %v4971
    %5879 = vmatprep.subr.bf16.mxu0 %v4965
    %5880 = vmatpush1.bf16.msra.mxu0 %v4964
    %5881 = vmatprep.subr.bf16.mxu0 %v4958
    %5882 = vmatpush1.bf16.msra.mxu0 %v4957
    %5883 = vmatprep.subr.bf16.mxu0 %v4951
    %5884 = vmatpush1.bf16.msra.mxu0 %v4950
    %5885 = vmatprep.subr.bf16.mxu0 %v4944
    %5886 = vmatpush1.bf16.msra.mxu0 %v4943
    %5887 = vmatprep.subr.bf16.mxu0 %v5049
    %5888 = vmatpush2.bf16.msra.mxu0 %v5048
    %5889 = vmatprep.subr.bf16.mxu0 %v5042
    %5890 = vmatpush2.bf16.msra.mxu0 %v5041
    %5891 = vmatprep.subr.bf16.mxu0 %v5035
    %5892 = vmatpush2.bf16.msra.mxu0 %v5034
    %5893 = vmatprep.subr.bf16.mxu0 %v5028
    %5894 = vmatpush2.bf16.msra.mxu0 %v5027
    %5895 = vmatprep.subr.bf16.mxu0 %v5021
    %5896 = vmatpush2.bf16.msra.mxu0 %v5020
    %5897 = vmatprep.subr.bf16.mxu0 %v5014
    %5898 = vmatpush2.bf16.msra.mxu0 %v5013
    %5899 = vmatprep.subr.bf16.mxu0 %v5007
    %5900 = vmatpush2.bf16.msra.mxu0 %v5006
    %5901 = vmatprep.subr.bf16.mxu0 %v5000
    %5902 = vmatpush2.bf16.msra.mxu0 %v4999
    %5903 = vmatprep.mubr.bf16.mxu0 %v2757
    %5904 = vmatmul.mubr.bf16.gmra.mxu0 %v2756
    %v5905 = vpop.f32.mrf.mxu0
    %v5906 = vadd.f32 %v5863, %v5905
    %v5907 = vpop.f32.mrf.mxu0
    %v5908 = vadd.f32 %v5865, %v5907
    %v5909 = vpop.f32.mrf.mxu0
    %v5910 = vadd.f32 %v5867, %v5909
    %v5911 = vpop.f32.mrf.mxu0
    %v5912 = vadd.f32 %v5869, %v5911
    %5913 = vdwg.mxu0
    %5914 = vmatprep.subr.bf16.mxu0 %v5105
    %5915 = vmatpush1.bf16.msra.mxu0 %v5104
    %5916 = vmatprep.subr.bf16.mxu0 %v5098
    %5917 = vmatpush1.bf16.msra.mxu0 %v5097
    %5918 = vmatprep.subr.bf16.mxu0 %v5091
    %5919 = vmatpush1.bf16.msra.mxu0 %v5090
    %5920 = vmatprep.subr.bf16.mxu0 %v5084
    %5921 = vmatpush1.bf16.msra.mxu0 %v5083
    %5922 = vmatprep.subr.bf16.mxu0 %v5077
    %5923 = vmatpush1.bf16.msra.mxu0 %v5076
    %5924 = vmatprep.subr.bf16.mxu0 %v5070
    %5925 = vmatpush1.bf16.msra.mxu0 %v5069
    %5926 = vmatprep.subr.bf16.mxu0 %v5063
    %5927 = vmatpush1.bf16.msra.mxu0 %v5062
    %5928 = vmatprep.subr.bf16.mxu0 %v5056
    %5929 = vmatpush1.bf16.msra.mxu0 %v5055
    %5930 = vmatprep.subr.bf16.mxu0 %v5161
    %5931 = vmatpush2.bf16.msra.mxu0 %v5160
    %5932 = vmatprep.subr.bf16.mxu0 %v5154
    %5933 = vmatpush2.bf16.msra.mxu0 %v5153
    %5934 = vmatprep.subr.bf16.mxu0 %v5147
    %5935 = vmatpush2.bf16.msra.mxu0 %v5146
    %5936 = vmatprep.subr.bf16.mxu0 %v5140
    %5937 = vmatpush2.bf16.msra.mxu0 %v5139
    %5938 = vmatprep.subr.bf16.mxu0 %v5133
    %5939 = vmatpush2.bf16.msra.mxu0 %v5132
    %5940 = vmatprep.subr.bf16.mxu0 %v5126
    %5941 = vmatpush2.bf16.msra.mxu0 %v5125
    %5942 = vmatprep.subr.bf16.mxu0 %v5119
    %5943 = vmatpush2.bf16.msra.mxu0 %v5118
    %5944 = vmatprep.subr.bf16.mxu0 %v5112
    %5945 = vmatpush2.bf16.msra.mxu0 %v5111
    %5946 = vmatprep.mubr.bf16.mxu0 %v2759
    %5947 = vmatmul.mubr.bf16.gmra.mxu0 %v2758
    %v5948 = vpop.f32.mrf.mxu0
    %v5949 = vadd.f32 %v5906, %v5948
    %v5950 = vpop.f32.mrf.mxu0
    %v5951 = vadd.f32 %v5908, %v5950
    %v5952 = vpop.f32.mrf.mxu0
    %v5953 = vadd.f32 %v5910, %v5952
    %v5954 = vpop.f32.mrf.mxu0
    %v5955 = vadd.f32 %v5912, %v5954
    %5956 = vdwg.mxu0
    %5957 = vmatprep.subr.bf16.mxu0 %v4771
    %5958 = vmatpush1.bf16.msra.mxu0 %v4770
    %5959 = vmatprep.subr.bf16.mxu0 %v4764
    %5960 = vmatpush1.bf16.msra.mxu0 %v4763
    %5961 = vmatprep.subr.bf16.mxu0 %v4757
    %5962 = vmatpush1.bf16.msra.mxu0 %v4756
    %5963 = vmatprep.subr.bf16.mxu0 %v4750
    %5964 = vmatpush1.bf16.msra.mxu0 %v4749
    %5965 = vmatprep.subr.bf16.mxu0 %v4743
    %5966 = vmatpush1.bf16.msra.mxu0 %v4742
    %5967 = vmatprep.subr.bf16.mxu0 %v4736
    %5968 = vmatpush1.bf16.msra.mxu0 %v4735
    %5969 = vmatprep.subr.bf16.mxu0 %v4729
    %5970 = vmatpush1.bf16.msra.mxu0 %v4728
    %5971 = vmatprep.subr.bf16.mxu0 %v4722
    %5972 = vmatpush1.bf16.msra.mxu0 %v4721
    %5973 = vmatprep.subr.bf16.mxu0 %v4827
    %5974 = vmatpush2.bf16.msra.mxu0 %v4826
    %5975 = vmatprep.subr.bf16.mxu0 %v4820
    %5976 = vmatpush2.bf16.msra.mxu0 %v4819
    %5977 = vmatprep.subr.bf16.mxu0 %v4813
    %5978 = vmatpush2.bf16.msra.mxu0 %v4812
    %5979 = vmatprep.subr.bf16.mxu0 %v4806
    %5980 = vmatpush2.bf16.msra.mxu0 %v4805
    %5981 = vmatprep.subr.bf16.mxu0 %v4799
    %5982 = vmatpush2.bf16.msra.mxu0 %v4798
    %5983 = vmatprep.subr.bf16.mxu0 %v4792
    %5984 = vmatpush2.bf16.msra.mxu0 %v4791
    %5985 = vmatprep.subr.bf16.mxu0 %v4785
    %5986 = vmatpush2.bf16.msra.mxu0 %v4784
    %5987 = vmatprep.subr.bf16.mxu0 %v4778
    %5988 = vmatpush2.bf16.msra.mxu0 %v4777
    %5989 = vmatprep.mubr.bf16.mxu0 %v2753
    %5990 = vmatmul.mubr.bf16.gmra.mxu0 %v2752
    %v5991 = vpop.f32.mrf.mxu0
    %v5992 = vadd.f32 %v3293, %v5991
    %v5993 = vpop.f32.mrf.mxu0
    %v5994 = vadd.f32 %v3297, %v5993
    %v5995 = vpop.f32.mrf.mxu0
    %v5996 = vadd.f32 %v3293, %v5995
    %v5997 = vpop.f32.mrf.mxu0
    %v5998 = vadd.f32 %v3297, %v5997
    %5999 = vdwg.mxu0
    %6000 = vmatprep.subr.bf16.mxu0 %v4883
    %6001 = vmatpush1.bf16.msra.mxu0 %v4882
    %6002 = vmatprep.subr.bf16.mxu0 %v4876
    %6003 = vmatpush1.bf16.msra.mxu0 %v4875
    %6004 = vmatprep.subr.bf16.mxu0 %v4869
    %6005 = vmatpush1.bf16.msra.mxu0 %v4868
    %6006 = vmatprep.subr.bf16.mxu0 %v4862
    %6007 = vmatpush1.bf16.msra.mxu0 %v4861
    %6008 = vmatprep.subr.bf16.mxu0 %v4855
    %6009 = vmatpush1.bf16.msra.mxu0 %v4854
    %6010 = vmatprep.subr.bf16.mxu0 %v4848
    %6011 = vmatpush1.bf16.msra.mxu0 %v4847
    %6012 = vmatprep.subr.bf16.mxu0 %v4841
    %6013 = vmatpush1.bf16.msra.mxu0 %v4840
    %6014 = vmatprep.subr.bf16.mxu0 %v4834
    %6015 = vmatpush1.bf16.msra.mxu0 %v4833
    %6016 = vmatprep.subr.bf16.mxu0 %v4939
    %6017 = vmatpush2.bf16.msra.mxu0 %v4938
    %6018 = vmatprep.subr.bf16.mxu0 %v4932
    %6019 = vmatpush2.bf16.msra.mxu0 %v4931
    %6020 = vmatprep.subr.bf16.mxu0 %v4925
    %6021 = vmatpush2.bf16.msra.mxu0 %v4924
    %6022 = vmatprep.subr.bf16.mxu0 %v4918
    %6023 = vmatpush2.bf16.msra.mxu0 %v4917
    %6024 = vmatprep.subr.bf16.mxu0 %v4911
    %6025 = vmatpush2.bf16.msra.mxu0 %v4910
    %6026 = vmatprep.subr.bf16.mxu0 %v4904
    %6027 = vmatpush2.bf16.msra.mxu0 %v4903
    %6028 = vmatprep.subr.bf16.mxu0 %v4897
    %6029 = vmatpush2.bf16.msra.mxu0 %v4896
    %6030 = vmatprep.subr.bf16.mxu0 %v4890
    %6031 = vmatpush2.bf16.msra.mxu0 %v4889
    %6032 = vmatprep.mubr.bf16.mxu0 %v2755
    %6033 = vmatmul.mubr.bf16.gmra.mxu0 %v2754
    %v6034 = vpop.f32.mrf.mxu0
    %v6035 = vadd.f32 %v5992, %v6034
    %v6036 = vpop.f32.mrf.mxu0
    %v6037 = vadd.f32 %v5994, %v6036
    %v6038 = vpop.f32.mrf.mxu0
    %v6039 = vadd.f32 %v5996, %v6038
    %v6040 = vpop.f32.mrf.mxu0
    %v6041 = vadd.f32 %v5998, %v6040
    %6042 = vdwg.mxu0
    %6043 = vmatprep.subr.bf16.mxu0 %v4995
    %6044 = vmatpush1.bf16.msra.mxu0 %v4994
    %6045 = vmatprep.subr.bf16.mxu0 %v4988
    %6046 = vmatpush1.bf16.msra.mxu0 %v4987
    %6047 = vmatprep.subr.bf16.mxu0 %v4981
    %6048 = vmatpush1.bf16.msra.mxu0 %v4980
    %6049 = vmatprep.subr.bf16.mxu0 %v4974
    %6050 = vmatpush1.bf16.msra.mxu0 %v4973
    %6051 = vmatprep.subr.bf16.mxu0 %v4967
    %6052 = vmatpush1.bf16.msra.mxu0 %v4966
    %6053 = vmatprep.subr.bf16.mxu0 %v4960
    %6054 = vmatpush1.bf16.msra.mxu0 %v4959
    %6055 = vmatprep.subr.bf16.mxu0 %v4953
    %6056 = vmatpush1.bf16.msra.mxu0 %v4952
    %6057 = vmatprep.subr.bf16.mxu0 %v4946
    %6058 = vmatpush1.bf16.msra.mxu0 %v4945
    %6059 = vmatprep.subr.bf16.mxu0 %v5051
    %6060 = vmatpush2.bf16.msra.mxu0 %v5050
    %6061 = vmatprep.subr.bf16.mxu0 %v5044
    %6062 = vmatpush2.bf16.msra.mxu0 %v5043
    %6063 = vmatprep.subr.bf16.mxu0 %v5037
    %6064 = vmatpush2.bf16.msra.mxu0 %v5036
    %6065 = vmatprep.subr.bf16.mxu0 %v5030
    %6066 = vmatpush2.bf16.msra.mxu0 %v5029
    %6067 = vmatprep.subr.bf16.mxu0 %v5023
    %6068 = vmatpush2.bf16.msra.mxu0 %v5022
    %6069 = vmatprep.subr.bf16.mxu0 %v5016
    %6070 = vmatpush2.bf16.msra.mxu0 %v5015
    %6071 = vmatprep.subr.bf16.mxu0 %v5009
    %6072 = vmatpush2.bf16.msra.mxu0 %v5008
    %6073 = vmatprep.subr.bf16.mxu0 %v5002
    %6074 = vmatpush2.bf16.msra.mxu0 %v5001
    %6075 = vmatprep.mubr.bf16.mxu0 %v2757
    %6076 = vmatmul.mubr.bf16.gmra.mxu0 %v2756
    %v6077 = vpop.f32.mrf.mxu0
    %v6078 = vadd.f32 %v6035, %v6077
    %v6079 = vpop.f32.mrf.mxu0
    %v6080 = vadd.f32 %v6037, %v6079
    %v6081 = vpop.f32.mrf.mxu0
    %v6082 = vadd.f32 %v6039, %v6081
    %v6083 = vpop.f32.mrf.mxu0
    %v6084 = vadd.f32 %v6041, %v6083
    %6085 = vdwg.mxu0
    %6086 = vmatprep.subr.bf16.mxu0 %v5107
    %6087 = vmatpush1.bf16.msra.mxu0 %v5106
    %6088 = vmatprep.subr.bf16.mxu0 %v5100
    %6089 = vmatpush1.bf16.msra.mxu0 %v5099
    %6090 = vmatprep.subr.bf16.mxu0 %v5093
    %6091 = vmatpush1.bf16.msra.mxu0 %v5092
    %6092 = vmatprep.subr.bf16.mxu0 %v5086
    %6093 = vmatpush1.bf16.msra.mxu0 %v5085
    %6094 = vmatprep.subr.bf16.mxu0 %v5079
    %6095 = vmatpush1.bf16.msra.mxu0 %v5078
    %6096 = vmatprep.subr.bf16.mxu0 %v5072
    %6097 = vmatpush1.bf16.msra.mxu0 %v5071
    %6098 = vmatprep.subr.bf16.mxu0 %v5065
    %6099 = vmatpush1.bf16.msra.mxu0 %v5064
    %6100 = vmatprep.subr.bf16.mxu0 %v5058
    %6101 = vmatpush1.bf16.msra.mxu0 %v5057
    %6102 = vmatprep.subr.bf16.mxu0 %v5163
    %6103 = vmatpush2.bf16.msra.mxu0 %v5162
    %6104 = vmatprep.subr.bf16.mxu0 %v5156
    %6105 = vmatpush2.bf16.msra.mxu0 %v5155
    %6106 = vmatprep.subr.bf16.mxu0 %v5149
    %6107 = vmatpush2.bf16.msra.mxu0 %v5148
    %6108 = vmatprep.subr.bf16.mxu0 %v5142
    %6109 = vmatpush2.bf16.msra.mxu0 %v5141
    %6110 = vmatprep.subr.bf16.mxu0 %v5135
    %6111 = vmatpush2.bf16.msra.mxu0 %v5134
    %6112 = vmatprep.subr.bf16.mxu0 %v5128
    %6113 = vmatpush2.bf16.msra.mxu0 %v5127
    %6114 = vmatprep.subr.bf16.mxu0 %v5121
    %6115 = vmatpush2.bf16.msra.mxu0 %v5120
    %6116 = vmatprep.subr.bf16.mxu0 %v5114
    %6117 = vmatpush2.bf16.msra.mxu0 %v5113
    %6118 = vmatprep.mubr.bf16.mxu0 %v2759
    %6119 = vmatmul.mubr.bf16.gmra.mxu0 %v2758
    %v6120 = vpop.f32.mrf.mxu0
    %v6121 = vadd.f32 %v6078, %v6120
    %v6122 = vpop.f32.mrf.mxu0
    %v6123 = vadd.f32 %v6080, %v6122
    %v6124 = vpop.f32.mrf.mxu0
    %v6125 = vadd.f32 %v6082, %v6124
    %v6126 = vpop.f32.mrf.mxu0
    %v6127 = vadd.f32 %v6084, %v6126
    %6128 = vdwg.mxu0
    %6129 = vmatprep.subr.bf16.mxu0 0
    %6130 = vmatpush1.bf16.msra.mxu0 %v4772
    %6131 = vmatprep.subr.bf16.mxu0 0
    %6132 = vmatpush1.bf16.msra.mxu0 %v4765
    %6133 = vmatprep.subr.bf16.mxu0 0
    %6134 = vmatpush1.bf16.msra.mxu0 %v4758
    %6135 = vmatprep.subr.bf16.mxu0 0
    %6136 = vmatpush1.bf16.msra.mxu0 %v4751
    %6137 = vmatprep.subr.bf16.mxu0 0
    %6138 = vmatpush1.bf16.msra.mxu0 %v4744
    %6139 = vmatprep.subr.bf16.mxu0 0
    %6140 = vmatpush1.bf16.msra.mxu0 %v4737
    %6141 = vmatprep.subr.bf16.mxu0 0
    %6142 = vmatpush1.bf16.msra.mxu0 %v4730
    %6143 = vmatprep.subr.bf16.mxu0 0
    %6144 = vmatpush1.bf16.msra.mxu0 %v4723
    %6145 = vmatprep.subr.bf16.mxu0 0
    %6146 = vmatpush2.bf16.msra.mxu0 %v4828
    %6147 = vmatprep.subr.bf16.mxu0 0
    %6148 = vmatpush2.bf16.msra.mxu0 %v4821
    %6149 = vmatprep.subr.bf16.mxu0 0
    %6150 = vmatpush2.bf16.msra.mxu0 %v4814
    %6151 = vmatprep.subr.bf16.mxu0 0
    %6152 = vmatpush2.bf16.msra.mxu0 %v4807
    %6153 = vmatprep.subr.bf16.mxu0 0
    %6154 = vmatpush2.bf16.msra.mxu0 %v4800
    %6155 = vmatprep.subr.bf16.mxu0 0
    %6156 = vmatpush2.bf16.msra.mxu0 %v4793
    %6157 = vmatprep.subr.bf16.mxu0 0
    %6158 = vmatpush2.bf16.msra.mxu0 %v4786
    %6159 = vmatprep.subr.bf16.mxu0 0
    %6160 = vmatpush2.bf16.msra.mxu0 %v4779
    %6161 = vmatprep.mubr.bf16.mxu0 %v2753
    %6162 = vmatmul.mubr.bf16.gmra.mxu0 %v2752
    %v6163 = vpop.f32.mrf.mxu0
    %v6164 = vadd.f32 %v3301, %v6163
    %v6165 = vpop.f32.mrf.mxu0
    %v6166 = vpop.f32.mrf.mxu0
    %v6167 = vadd.f32 %v3301, %v6166
    %v6168 = vpop.f32.mrf.mxu0
    %6169 = vdwg.mxu0
    %6170 = vmatprep.subr.bf16.mxu0 0
    %6171 = vmatpush1.bf16.msra.mxu0 %v4884
    %6172 = vmatprep.subr.bf16.mxu0 0
    %6173 = vmatpush1.bf16.msra.mxu0 %v4877
    %6174 = vmatprep.subr.bf16.mxu0 0
    %6175 = vmatpush1.bf16.msra.mxu0 %v4870
    %6176 = vmatprep.subr.bf16.mxu0 0
    %6177 = vmatpush1.bf16.msra.mxu0 %v4863
    %6178 = vmatprep.subr.bf16.mxu0 0
    %6179 = vmatpush1.bf16.msra.mxu0 %v4856
    %6180 = vmatprep.subr.bf16.mxu0 0
    %6181 = vmatpush1.bf16.msra.mxu0 %v4849
    %6182 = vmatprep.subr.bf16.mxu0 0
    %6183 = vmatpush1.bf16.msra.mxu0 %v4842
    %6184 = vmatprep.subr.bf16.mxu0 0
    %6185 = vmatpush1.bf16.msra.mxu0 %v4835
    %6186 = vmatprep.subr.bf16.mxu0 0
    %6187 = vmatpush2.bf16.msra.mxu0 %v4940
    %6188 = vmatprep.subr.bf16.mxu0 0
    %6189 = vmatpush2.bf16.msra.mxu0 %v4933
    %6190 = vmatprep.subr.bf16.mxu0 0
    %6191 = vmatpush2.bf16.msra.mxu0 %v4926
    %6192 = vmatprep.subr.bf16.mxu0 0
    %6193 = vmatpush2.bf16.msra.mxu0 %v4919
    %6194 = vmatprep.subr.bf16.mxu0 0
    %6195 = vmatpush2.bf16.msra.mxu0 %v4912
    %6196 = vmatprep.subr.bf16.mxu0 0
    %6197 = vmatpush2.bf16.msra.mxu0 %v4905
    %6198 = vmatprep.subr.bf16.mxu0 0
    %6199 = vmatpush2.bf16.msra.mxu0 %v4898
    %6200 = vmatprep.subr.bf16.mxu0 0
    %6201 = vmatpush2.bf16.msra.mxu0 %v4891
    %6202 = vmatprep.mubr.bf16.mxu0 %v2755
    %6203 = vmatmul.mubr.bf16.gmra.mxu0 %v2754
    %v6204 = vpop.f32.mrf.mxu0
    %v6205 = vadd.f32 %v6164, %v6204
    %v6206 = vpop.f32.mrf.mxu0
    %v6207 = vpop.f32.mrf.mxu0
    %v6208 = vadd.f32 %v6167, %v6207
    %v6209 = vpop.f32.mrf.mxu0
    %6210 = vdwg.mxu0
    %6211 = vmatprep.subr.bf16.mxu0 0
    %6212 = vmatpush1.bf16.msra.mxu0 %v4996
    %6213 = vmatprep.subr.bf16.mxu0 0
    %6214 = vmatpush1.bf16.msra.mxu0 %v4989
    %6215 = vmatprep.subr.bf16.mxu0 0
    %6216 = vmatpush1.bf16.msra.mxu0 %v4982
    %6217 = vmatprep.subr.bf16.mxu0 0
    %6218 = vmatpush1.bf16.msra.mxu0 %v4975
    %6219 = vmatprep.subr.bf16.mxu0 0
    %6220 = vmatpush1.bf16.msra.mxu0 %v4968
    %6221 = vmatprep.subr.bf16.mxu0 0
    %6222 = vmatpush1.bf16.msra.mxu0 %v4961
    %6223 = vmatprep.subr.bf16.mxu0 0
    %6224 = vmatpush1.bf16.msra.mxu0 %v4954
    %6225 = vmatprep.subr.bf16.mxu0 0
    %6226 = vmatpush1.bf16.msra.mxu0 %v4947
    %6227 = vmatprep.subr.bf16.mxu0 0
    %6228 = vmatpush2.bf16.msra.mxu0 %v5052
    %6229 = vmatprep.subr.bf16.mxu0 0
    %6230 = vmatpush2.bf16.msra.mxu0 %v5045
    %6231 = vmatprep.subr.bf16.mxu0 0
    %6232 = vmatpush2.bf16.msra.mxu0 %v5038
    %6233 = vmatprep.subr.bf16.mxu0 0
    %6234 = vmatpush2.bf16.msra.mxu0 %v5031
    %6235 = vmatprep.subr.bf16.mxu0 0
    %6236 = vmatpush2.bf16.msra.mxu0 %v5024
    %6237 = vmatprep.subr.bf16.mxu0 0
    %6238 = vmatpush2.bf16.msra.mxu0 %v5017
    %6239 = vmatprep.subr.bf16.mxu0 0
    %6240 = vmatpush2.bf16.msra.mxu0 %v5010
    %6241 = vmatprep.subr.bf16.mxu0 0
    %6242 = vmatpush2.bf16.msra.mxu0 %v5003
    %6243 = vmatprep.mubr.bf16.mxu0 %v2757
    %6244 = vmatmul.mubr.bf16.gmra.mxu0 %v2756
    %v6245 = vpop.f32.mrf.mxu0
    %v6246 = vadd.f32 %v6205, %v6245
    %v6247 = vpop.f32.mrf.mxu0
    %v6248 = vpop.f32.mrf.mxu0
    %v6249 = vadd.f32 %v6208, %v6248
    %v6250 = vpop.f32.mrf.mxu0
    %6251 = vdwg.mxu0
    %6252 = vmatprep.subr.bf16.mxu0 0
    %6253 = vmatpush1.bf16.msra.mxu0 %v5108
    %6254 = vmatprep.subr.bf16.mxu0 0
    %6255 = vmatpush1.bf16.msra.mxu0 %v5101
    %6256 = vmatprep.subr.bf16.mxu0 0
    %6257 = vmatpush1.bf16.msra.mxu0 %v5094
    %6258 = vmatprep.subr.bf16.mxu0 0
    %6259 = vmatpush1.bf16.msra.mxu0 %v5087
    %6260 = vmatprep.subr.bf16.mxu0 0
    %6261 = vmatpush1.bf16.msra.mxu0 %v5080
    %6262 = vmatprep.subr.bf16.mxu0 0
    %6263 = vmatpush1.bf16.msra.mxu0 %v5073
    %6264 = vmatprep.subr.bf16.mxu0 0
    %6265 = vmatpush1.bf16.msra.mxu0 %v5066
    %6266 = vmatprep.subr.bf16.mxu0 0
    %6267 = vmatpush1.bf16.msra.mxu0 %v5059
    %6268 = vmatprep.subr.bf16.mxu0 0
    %6269 = vmatpush2.bf16.msra.mxu0 %v5164
    %6270 = vmatprep.subr.bf16.mxu0 0
    %6271 = vmatpush2.bf16.msra.mxu0 %v5157
    %6272 = vmatprep.subr.bf16.mxu0 0
    %6273 = vmatpush2.bf16.msra.mxu0 %v5150
    %6274 = vmatprep.subr.bf16.mxu0 0
    %6275 = vmatpush2.bf16.msra.mxu0 %v5143
    %6276 = vmatprep.subr.bf16.mxu0 0
    %6277 = vmatpush2.bf16.msra.mxu0 %v5136
    %6278 = vmatprep.subr.bf16.mxu0 0
    %6279 = vmatpush2.bf16.msra.mxu0 %v5129
    %6280 = vmatprep.subr.bf16.mxu0 0
    %6281 = vmatpush2.bf16.msra.mxu0 %v5122
    %6282 = vmatprep.subr.bf16.mxu0 0
    %6283 = vmatpush2.bf16.msra.mxu0 %v5115
    %6284 = vmatprep.mubr.bf16.mxu0 %v2759
    %6285 = vmatmul.mubr.bf16.gmra.mxu0 %v2758
    %v6286 = vpop.f32.mrf.mxu0
    %v6287 = vadd.f32 %v6246, %v6286
    %v6288 = vpop.f32.mrf.mxu0
    %v6289 = vpop.f32.mrf.mxu0
    %v6290 = vadd.f32 %v6249, %v6289
    %v6291 = vpop.f32.mrf.mxu0
    %6292 = vdwg.mxu0
    %v6293 = vtanh.pop %v5777
    %v6294 = vtanh.pop %v5779
    %v6295 = vtanh.pop %v5949
    %v6296 = vtanh.pop %v5951
    %v6297 = vtanh.pop %v6121
    %v6298 = vtanh.pop %v6123
    %v6299 = vtanh.pop %v6287
    %v6300 = vtanh.pop %v5781
    %v6301 = vtanh.pop %v5783
    %v6302 = vtanh.pop %v5953
    %v6303 = vtanh.pop %v5955
    %v6304 = vtanh.pop %v6125
    %v6305 = vtanh.pop %v6127
    %v6306 = vtanh.pop %v6290
    %6307 = vst [vmem:[%s9] sm:$0xff] %v6293
    %6308 = vst [vmem:[%s9 + $0x8] sm:$0xff] %v6294
    %6309 = vst [vmem:[%s9 + $0x10] sm:$0xff] %v6295
    %6310 = vst [vmem:[%s9 + $0x18] sm:$0xff] %v6296
    %6311 = vst [vmem:[%s9 + $0x20] sm:$0xff] %v6297
    %6312 = vst [vmem:[%s9 + $0x28] sm:$0xff] %v6298
    %6313 = vst [vmem:[%s9 + $0x30] sm:$0xff] %v6299
    %6314 = vst [vmem:[%s9 + $0x38] sm:$0xff] %v6300
    %6315 = vst [vmem:[%s9 + $0x40] sm:$0xff] %v6301
    %6316 = vst [vmem:[%s9 + $0x48] sm:$0xff] %v6302
    %6317 = vst [vmem:[%s9 + $0x50] sm:$0xff] %v6303
    %6318 = vst [vmem:[%s9 + $0x58] sm:$0xff] %v6304
    %6319 = vst [vmem:[%s9 + $0x60] sm:$0xff] %v6305
    %6320 = vst [vmem:[%s9 + $0x68] sm:$0xff] %v6306
    // Predicated region
    $region70: #{generator_forward.1} parent=1 // pred_check
      _
    $region71: #{generator_forward.1} parent=1 // pred_check_branch
      %6322 = sbr.rel (0) target = $region73
    $region72: #{generator_forward.1} parent=1 // pred_region
      _
    $region73: #{generator_forward.1} parent=1 // pred_fallthru
      _
    // Predicated region
    $region74: #{generator_forward.1} parent=1 // pred_check
      _
    $region75: #{generator_forward.1} parent=1 // pred_check_branch
      %6324 = sbr.rel (0) target = $region77
    $region76: #{generator_forward.1} parent=1 // pred_region
      _
    $region77: #{generator_forward.1} parent=1 // pred_fallthru
      _
    %6325 = vsyncpa [#allocation3], 1
    %6326 = vsyncpa [#allocation5], 1
    %6327 = vsyncpa [#allocation8], 1
    %6328 = vsyncpa [#allocation11], 1
    %6329 = vsyncpa [#allocation14], 1

</llo_original>
